<compile_context>
chip_gen: v7x
topology: tpu7x:2x2x1
jax: 0.10.0
libtpu: 0.0.40
codegen_flags: <defaults>
</compile_context>

<pallas_src>
import jax
import jax.numpy as jnp
import numpy as np
from jax.experimental import pallas as pl
from jax.experimental.pallas import tpu as pltpu

EPS = 1e-5   # nn.BatchNorm3d default eps
LANE = 128   # TPU lane width


def _round_up(v, m):
    return (v + m - 1) // m * m


def _vmem_limit_bytes():
    try:
        cap = pltpu.get_tpu_info().vmem_capacity_bytes
    except Exception:
        cap = 64 * 1024 * 1024
    return int(min(cap * 3 // 4, 100 * 1024 * 1024))


def _cparams():
    return pltpu.CompilerParams(
        dimension_semantics=("parallel", "parallel"),
        vmem_limit_bytes=_vmem_limit_bytes())


# ---------------- Pallas kernels (the hot path) ----------------

def _conv3d_plane_kernel(x0_ref, x1_ref, x2_ref, w_ref, y_ref, stats_ref):
    """One (n, d) output plane of a 3x3x3 / stride-1 / pad-1 conv.

    x*_ref : (H+2, Wpad, Cp) bf16 -- depth taps d, d+1, d+2 of padded input
    w_ref  : (9, 3*Cp, Cp)   bf16 -- tap (kh*3+kw); K dim stacks kd-major Cin
    y_ref  : (H, W, Cp)      bf16 -- raw conv output (pre-BN)
    stats  : (2, Cp)         f32  -- per-channel [sum, sum_sq] of this plane
    """
    Hh, Ww, Cp = y_ref.shape
    Wpad = x0_ref.shape[1]
    planes = (x0_ref, x1_ref, x2_ref)

    # Three accumulators (one per kw) at full padded width: the W shift is
    # applied once on the accumulated output, not per tap.
    accs = [jnp.zeros((Hh * Wpad, Cp), jnp.float32) for _ in range(3)]
    for kh in range(3):
        # Fold the three depth taps into K = 3*Cp (kd-major, matches weights).
        a = jnp.concatenate([p[kh:kh + Hh, :, :] for p in planes], axis=-1)
        a = a.reshape(Hh * Wpad, 3 * Cp)          # Wpad % 8 == 0 -> no relayout
        for kw in range(3):
            accs[kw] = accs[kw] + jnp.dot(
                a, w_ref[kh * 3 + kw], preferred_element_type=jnp.float32)

    a0 = accs[0].reshape(Hh, Wpad, Cp)
    a1 = accs[1].reshape(Hh, Wpad, Cp)
    a2 = accs[2].reshape(Hh, Wpad, Cp)
    out = a0[:, 0:Ww, :] + a1[:, 1:1 + Ww, :] + a2[:, 2:2 + Ww, :]

    y_ref[...] = out.astype(y_ref.dtype)
    s1 = jnp.sum(out, axis=(0, 1)).reshape(1, Cp)
    s2 = jnp.sum(out * out, axis=(0, 1)).reshape(1, Cp)
    stats_ref[...] = jnp.concatenate([s1, s2], axis=0)


def _bn_add_relu_kernel(y_ref, r_ref, sc_ref, sh_ref, o_ref):
    """out = relu(y * scale + shift + residual) for one (n, d) plane."""
    out = (y_ref[...].astype(jnp.float32) * sc_ref[...] + sh_ref[...]
           + r_ref[...].astype(jnp.float32))
    o_ref[...] = jnp.maximum(out, 0.0)


# ---------------- pallas_call wrappers ----------------

def _conv3d_bn_stats(xp, w_mat, H, W):
    """xp: (N, D+2, H+2, Wpad, Cp) bf16; w_mat: (9, 3*Cp, Cp) bf16.

    Returns raw conv output (N, D, H, W, Cp) bf16 and per-(n, d) partial BN
    statistics (N, D, 2, Cp) f32.
    """
    N, Dp2, Hp2, Wpad, Cp = xp.shape
    D = Dp2 - 2

    def shifted_spec(kd):
        return pl.BlockSpec((None, None, Hp2, Wpad, Cp),
                            lambda n, d, kd=kd: (n, d + kd, 0, 0, 0))

    return pl.pallas_call(
        _conv3d_plane_kernel,
        grid=(N, D),
        in_specs=[
            shifted_spec(0), shifted_spec(1), shifted_spec(2),
            pl.BlockSpec((9, 3 * Cp, Cp), lambda n, d: (0, 0, 0)),
        ],
        out_specs=(
            pl.BlockSpec((None, None, H, W, Cp), lambda n, d: (n, d, 0, 0, 0)),
            pl.BlockSpec((None, None, 2, Cp), lambda n, d: (n, d, 0, 0)),
        ),
        out_shape=(
            jax.ShapeDtypeStruct((N, D, H, W, Cp), jnp.bfloat16),
            jax.ShapeDtypeStruct((N, D, 2, Cp), jnp.float32),
        ),
        compiler_params=_cparams(),
    )(xp, xp, xp, w_mat)


def _bn1_relu_pad(y, scale, shift, Wpad):
    """relu(y * scale + shift), written directly into the zero-padded
    (N, D+2, H+2, Wpad, Cp) bf16 layout conv2's halo BlockSpecs expect."""
    N, D, H, W, Cp = y.shape
    Hp2 = H + 2

    def y_map(n, d):
        return (n, jnp.minimum(jnp.maximum(d - 1, 0), D - 1), 0, 0, 0)

    def kernel(y_ref, sc_ref, sh_ref, o_ref):
        d = pl.program_id(1)
        o_ref[...] = jnp.zeros_like(o_ref)   # halos + extra W pad stay zero

        @pl.when(jnp.logical_and(d >= 1, d <= D))
        def _():
            v = jnp.maximum(
                y_ref[...].astype(jnp.float32) * sc_ref[...] + sh_ref[...], 0.0)
            o_ref[1:1 + H, 1:1 + W, :] = v.astype(o_ref.dtype)

    return pl.pallas_call(
        kernel,
        grid=(N, D + 2),
        in_specs=[
            pl.BlockSpec((None, None, H, W, Cp), y_map),
            pl.BlockSpec((1, 1, Cp), lambda n, d: (0, 0, 0)),
            pl.BlockSpec((1, 1, Cp), lambda n, d: (0, 0, 0)),
        ],
        out_specs=pl.BlockSpec((None, None, Hp2, Wpad, Cp),
                               lambda n, d: (n, d, 0, 0, 0)),
        out_shape=jax.ShapeDtypeStruct((N, D + 2, Hp2, Wpad, Cp), jnp.bfloat16),
        compiler_params=_cparams(),
    )(y, scale.reshape(1, 1, Cp), shift.reshape(1, 1, Cp))


def _bn_add_relu(y, resid, scale, shift):
    """relu(y * scale + shift + resid), gridded over (N, D), lane-dense."""
    N, D, H, W, Cp = y.shape
    blk = pl.BlockSpec((None, None, H, W, Cp), lambda n, d: (n, d, 0, 0, 0))
    vec = pl.BlockSpec((1, 1, Cp), lambda n, d: (0, 0, 0))
    return pl.pallas_call(
        _bn_add_relu_kernel,
        grid=(N, D),
        in_specs=[blk, blk, vec, vec],
        out_specs=pl.BlockSpec((None, None, H, W, Cp),
                               lambda n, d: (n, d, 0, 0, 0)),
        out_shape=jax.ShapeDtypeStruct((N, D, H, W, Cp), jnp.float32),
        compiler_params=_cparams(),
    )(y, resid, scale.reshape(1, 1, Cp), shift.reshape(1, 1, Cp))


# ---------------- JAX glue (layout + tiny reductions only) ----------------

def _pack_weight(w, Cp):
    """(Cout, Cin, 3, 3, 3) -> (9, 3*Cp, Cp) bf16.

    Tap index is kh*3+kw; the K dimension stacks kd-major (kd*Cp + cin), which
    matches the in-kernel channel concat of the three depth planes."""
    Cout, Cin = int(w.shape[0]), int(w.shape[1])
    wt = jnp.transpose(w, (3, 4, 2, 1, 0)).astype(jnp.float32)  # (kh,kw,kd,Ci,Co)
    wt = jnp.pad(wt, ((0, 0), (0, 0), (0, 0), (0, Cp - Cin), (0, Cp - Cout)))
    return wt.reshape(9, 3 * Cp, Cp).astype(jnp.bfloat16)


def _bn_scale_shift(stats, gamma, beta, count, Cp):
    """Reduce per-(n,d) partial sums to a fused per-channel scale/shift."""
    C = int(gamma.shape[0])
    ssum = jnp.sum(stats[:, :, 0, :], axis=(0, 1))          # (Cp,)
    ssq = jnp.sum(stats[:, :, 1, :], axis=(0, 1))           # (Cp,)
    mean = ssum / count
    var = jnp.maximum(ssq / count - mean * mean, 0.0)        # biased variance
    g = jnp.pad(gamma.astype(jnp.float32), (0, Cp - C))
    b = jnp.pad(beta.astype(jnp.float32), (0, Cp - C))
    scale = g * jax.lax.rsqrt(var + EPS)
    shift = b - mean * scale
    return scale, shift


@jax.jit
def basic_block_forward(x_ncdhw, w1, w2, g1, b1, g2, b2):
    """w1, w2 are PyTorch-layout conv weights: (Cout, Cin, 3, 3, 3)."""
    N, C, D, H, W = x_ncdhw.shape
    Cout = int(w1.shape[0])
    Cp = _round_up(max(C, Cout), LANE)
    Wpad = _round_up(W + 2, 8)     # 8-aligned padded width => free reshapes
    count = N * D * H * W

    # NCDHW -> NDHWC once at the boundary; channels padded to a full lane tile.
    x_cl = jnp.transpose(x_ncdhw, (0, 2, 3, 4, 1))
    x_res = jnp.pad(x_cl, ((0, 0),) * 4 + ((0, Cp - C),)).astype(jnp.bfloat16)
    xp = jnp.pad(x_res, ((0, 0), (1, 1), (1, 1), (1, Wpad - 1 - W), (0, 0)))

    w1m = _pack_weight(w1, Cp)
    w2m = _pack_weight(w2, Cp)

    # conv1 + partial BN1 statistics (Pallas, gridded & pipelined).
    y1, st1 = _conv3d_bn_stats(xp, w1m, H, W)
    sc1, sh1 = _bn_scale_shift(st1, g1, b1, count, Cp)

    # BN1 + ReLU fused with the zero-padded re-layout feeding conv2 (Pallas).
    a1p = _bn1_relu_pad(y1, sc1, sh1, Wpad)

    # conv2 + partial BN2 statistics (Pallas).
    y2, st2 = _conv3d_bn_stats(a1p, w2m, H, W)
    sc2, sh2 = _bn_scale_shift(st2, g2, b2, count, Cp)

    # BN2 + identity residual + ReLU (Pallas).
    out = _bn_add_relu(y2, x_res, sc2, sh2)

    out = out[..., :Cout]
    return jnp.transpose(out, (0, 4, 1, 2, 3)).astype(x_ncdhw.dtype)


# ---------------- pure-JAX reference for verification ----------------

def _reference_forward(x, w1, w2, g1, b1, g2, b2):
    def conv(x, w):
        return jax.lax.conv_general_dilated(
            x, w, window_strides=(1, 1, 1),
            padding=((1, 1), (1, 1), (1, 1)),
            dimension_numbers=("NCDHW", "OIDHW", "NCDHW"),
            precision=jax.lax.Precision.HIGHEST)

    def bn(y, g, b):
        mean = y.mean(axis=(0, 2, 3, 4), keepdims=True)
        var = ((y - mean) ** 2).mean(axis=(0, 2, 3, 4), keepdims=True)
        return ((y - mean) * jax.lax.rsqrt(var + EPS)
                * g.reshape(1, -1, 1, 1, 1) + b.reshape(1, -1, 1, 1, 1))

    out = jnp.maximum(bn(conv(x, w1), g1, b1), 0.0)
    out = bn(conv(out, w2), g2, b2) + x
    return jnp.maximum(out, 0.0)


if __name__ == "__main__":
    # Small shapes consistent with BasicBlock(inplanes=8, planes=8, stride=1).
    N, C, D, H, W = 2, 8, 8, 8, 8
    key = jax.random.PRNGKey(0)
    kx, kw1, kw2, kg1, kb1, kg2, kb2 = jax.random.split(key, 7)

    x = jax.random.normal(kx, (N, C, D, H, W), jnp.float32)

    # Deterministic synthetic conv weights (kaiming-uniform-like bound), no bias.
    bound = 1.0 / np.sqrt(C * 27)
    w1 = jax.random.uniform(kw1, (C, C, 3, 3, 3), jnp.float32, -bound, bound)
    w2 = jax.random.uniform(kw2, (C, C, 3, 3, 3), jnp.float32, -bound, bound)

    # BatchNorm affine parameters (mildly perturbed to exercise the affine path).
    g1 = jax.random.uniform(kg1, (C,), jnp.float32, 0.8, 1.2)
    b1 = 0.1 * jax.random.normal(kb1, (C,), jnp.float32)
    g2 = jax.random.uniform(kg2, (C,), jnp.float32, 0.8, 1.2)
    b2 = 0.1 * jax.random.normal(kb2, (C,), jnp.float32)

    out = jax.block_until_ready(basic_block_forward(x, w1, w2, g1, b1, g2, b2))

    ref = _reference_forward(x, w1, w2, g1, b1, g2, b2)
    # Tolerance covers bf16 MXU inputs and bf16 intermediate storage vs the
    # f32 reference conv.
    np.testing.assert_allclose(np.asarray(out), np.asarray(ref),
                               atol=5e-2, rtol=5e-2)
    assert out.shape == (N, C, D, H, W)
    print("KERNEL_OK")
</pallas_src>

<mosaic_0001>
module attributes {stable_mosaic.version = 11 : i64} {
  func.func @_conv3d_plane_kernel(%arg0: i32, %arg1: i32, %arg2: memref<1x1x10x16x128xbf16, #tpu.memory_space<vmem>>, %arg3: memref<1x1x10x16x128xbf16, #tpu.memory_space<vmem>>, %arg4: memref<1x1x10x16x128xbf16, #tpu.memory_space<vmem>>, %arg5: memref<9x384x128xbf16, #tpu.memory_space<vmem>>, %arg6: memref<1x1x8x8x128xbf16, #tpu.memory_space<vmem>>, %arg7: memref<1x1x2x128xf32, #tpu.memory_space<vmem>>) attributes {dimension_semantics = [#tpu.dimension_semantics<parallel>, #tpu.dimension_semantics<parallel>], iteration_bounds = array<i64: 2, 8>, scalar_prefetch = 0 : i64, scratch_operands = 0 : i64, tpu.core_type = #tpu.core_type<tc>, window_params = [{transform_indices = @transform_0, window_bounds = array<i64: 1, 1, 10, 16, 128>}, {transform_indices = @transform_1, window_bounds = array<i64: 1, 1, 10, 16, 128>}, {transform_indices = @transform_2, window_bounds = array<i64: 1, 1, 10, 16, 128>}, {pipeline_mode = #tpu.pipeline_mode<synchronous>, transform_indices = @transform_3, window_bounds = array<i64: 9, 384, 128>}, {transform_indices = @transform_4, window_bounds = array<i64: 1, 1, 8, 8, 128>}, {transform_indices = @transform_5, window_bounds = array<i64: 1, 1, 2, 128>}]} {
    %cst = arith.constant 0.000000e+00 : f32
    %0 = vector.broadcast %cst : f32 to vector<128x128xf32>
    %cst_0 = arith.constant 0.000000e+00 : f32
    %1 = vector.broadcast %cst_0 : f32 to vector<128x128xf32>
    %cst_1 = arith.constant 0.000000e+00 : f32
    %2 = vector.broadcast %cst_1 : f32 to vector<128x128xf32>
    %c0 = arith.constant 0 : index
    %c0_2 = arith.constant 0 : index
    %c0_3 = arith.constant 0 : index
    %c0_4 = arith.constant 0 : index
    %c0_5 = arith.constant 0 : index
    %3 = vector.load %arg2[%c0, %c0_2, %c0_3, %c0_4, %c0_5] : memref<1x1x10x16x128xbf16, #tpu.memory_space<vmem>>, vector<1x1x8x16x128xbf16>
    %4 = vector.shape_cast %3 : vector<1x1x8x16x128xbf16> to vector<8x16x128xbf16>
    %c0_6 = arith.constant 0 : index
    %c0_7 = arith.constant 0 : index
    %c0_8 = arith.constant 0 : index
    %c0_9 = arith.constant 0 : index
    %c0_10 = arith.constant 0 : index
    %5 = vector.load %arg3[%c0_6, %c0_7, %c0_8, %c0_9, %c0_10] : memref<1x1x10x16x128xbf16, #tpu.memory_space<vmem>>, vector<1x1x8x16x128xbf16>
    %6 = vector.shape_cast %5 : vector<1x1x8x16x128xbf16> to vector<8x16x128xbf16>
    %c0_11 = arith.constant 0 : index
    %c0_12 = arith.constant 0 : index
    %c0_13 = arith.constant 0 : index
    %c0_14 = arith.constant 0 : index
    %c0_15 = arith.constant 0 : index
    %7 = vector.load %arg4[%c0_11, %c0_12, %c0_13, %c0_14, %c0_15] : memref<1x1x10x16x128xbf16, #tpu.memory_space<vmem>>, vector<1x1x8x16x128xbf16>
    %8 = vector.shape_cast %7 : vector<1x1x8x16x128xbf16> to vector<8x16x128xbf16>
    %9 = tpu.concatenate %4, %6, %8 in 2 : vector<8x16x128xbf16>, vector<8x16x128xbf16>, vector<8x16x128xbf16> -> vector<8x16x384xbf16>
    %10 = vector.shape_cast %9 : vector<8x16x384xbf16> to vector<128x384xbf16>
    %c0_16 = arith.constant 0 : index
    %c0_17 = arith.constant 0 : index
    %c0_18 = arith.constant 0 : index
    %11 = vector.load %arg5[%c0_16, %c0_17, %c0_18] : memref<9x384x128xbf16, #tpu.memory_space<vmem>>, vector<1x384x128xbf16>
    %12 = vector.shape_cast %11 : vector<1x384x128xbf16> to vector<384x128xbf16>
    %cst_19 = arith.constant dense<0.000000e+00> : vector<128x128xf32>
    %13 = tpu.matmul %10, %12, %cst_19 {dimension_numbers = #tpu.dot_dimension_numbers<[1], [0], [0], [1], [0, 0, 1, 1], [], []>} : vector<128x384xbf16>, vector<384x128xbf16>, vector<128x128xf32> -> vector<128x128xf32>
    %14 = arith.addf %0, %13 : vector<128x128xf32>
    %c1 = arith.constant 1 : index
    %c0_20 = arith.constant 0 : index
    %c0_21 = arith.constant 0 : index
    %15 = vector.load %arg5[%c1, %c0_20, %c0_21] : memref<9x384x128xbf16, #tpu.memory_space<vmem>>, vector<1x384x128xbf16>
    %16 = vector.shape_cast %15 : vector<1x384x128xbf16> to vector<384x128xbf16>
    %cst_22 = arith.constant dense<0.000000e+00> : vector<128x128xf32>
    %17 = tpu.matmul %10, %16, %cst_22 {dimension_numbers = #tpu.dot_dimension_numbers<[1], [0], [0], [1], [0, 0, 1, 1], [], []>} : vector<128x384xbf16>, vector<384x128xbf16>, vector<128x128xf32> -> vector<128x128xf32>
    %18 = arith.addf %1, %17 : vector<128x128xf32>
    %c2 = arith.constant 2 : index
    %c0_23 = arith.constant 0 : index
    %c0_24 = arith.constant 0 : index
    %19 = vector.load %arg5[%c2, %c0_23, %c0_24] : memref<9x384x128xbf16, #tpu.memory_space<vmem>>, vector<1x384x128xbf16>
    %20 = vector.shape_cast %19 : vector<1x384x128xbf16> to vector<384x128xbf16>
    %cst_25 = arith.constant dense<0.000000e+00> : vector<128x128xf32>
    %21 = tpu.matmul %10, %20, %cst_25 {dimension_numbers = #tpu.dot_dimension_numbers<[1], [0], [0], [1], [0, 0, 1, 1], [], []>} : vector<128x384xbf16>, vector<384x128xbf16>, vector<128x128xf32> -> vector<128x128xf32>
    %22 = arith.addf %2, %21 : vector<128x128xf32>
    %c0_26 = arith.constant 0 : index
    %c0_27 = arith.constant 0 : index
    %c1_28 = arith.constant 1 : index
    %c0_29 = arith.constant 0 : index
    %c0_30 = arith.constant 0 : index
    %23 = vector.load %arg2[%c0_26, %c0_27, %c1_28, %c0_29, %c0_30] : memref<1x1x10x16x128xbf16, #tpu.memory_space<vmem>>, vector<1x1x8x16x128xbf16>
    %24 = vector.shape_cast %23 : vector<1x1x8x16x128xbf16> to vector<8x16x128xbf16>
    %c0_31 = arith.constant 0 : index
    %c0_32 = arith.constant 0 : index
    %c1_33 = arith.constant 1 : index
    %c0_34 = arith.constant 0 : index
    %c0_35 = arith.constant 0 : index
    %25 = vector.load %arg3[%c0_31, %c0_32, %c1_33, %c0_34, %c0_35] : memref<1x1x10x16x128xbf16, #tpu.memory_space<vmem>>, vector<1x1x8x16x128xbf16>
    %26 = vector.shape_cast %25 : vector<1x1x8x16x128xbf16> to vector<8x16x128xbf16>
    %c0_36 = arith.constant 0 : index
    %c0_37 = arith.constant 0 : index
    %c1_38 = arith.constant 1 : index
    %c0_39 = arith.constant 0 : index
    %c0_40 = arith.constant 0 : index
    %27 = vector.load %arg4[%c0_36, %c0_37, %c1_38, %c0_39, %c0_40] : memref<1x1x10x16x128xbf16, #tpu.memory_space<vmem>>, vector<1x1x8x16x128xbf16>
    %28 = vector.shape_cast %27 : vector<1x1x8x16x128xbf16> to vector<8x16x128xbf16>
    %29 = tpu.concatenate %24, %26, %28 in 2 : vector<8x16x128xbf16>, vector<8x16x128xbf16>, vector<8x16x128xbf16> -> vector<8x16x384xbf16>
    %30 = vector.shape_cast %29 : vector<8x16x384xbf16> to vector<128x384xbf16>
    %c3 = arith.constant 3 : index
    %c0_41 = arith.constant 0 : index
    %c0_42 = arith.constant 0 : index
    %31 = vector.load %arg5[%c3, %c0_41, %c0_42] : memref<9x384x128xbf16, #tpu.memory_space<vmem>>, vector<1x384x128xbf16>
    %32 = vector.shape_cast %31 : vector<1x384x128xbf16> to vector<384x128xbf16>
    %cst_43 = arith.constant dense<0.000000e+00> : vector<128x128xf32>
    %33 = tpu.matmul %30, %32, %cst_43 {dimension_numbers = #tpu.dot_dimension_numbers<[1], [0], [0], [1], [0, 0, 1, 1], [], []>} : vector<128x384xbf16>, vector<384x128xbf16>, vector<128x128xf32> -> vector<128x128xf32>
    %34 = arith.addf %14, %33 : vector<128x128xf32>
    %c4 = arith.constant 4 : index
    %c0_44 = arith.constant 0 : index
    %c0_45 = arith.constant 0 : index
    %35 = vector.load %arg5[%c4, %c0_44, %c0_45] : memref<9x384x128xbf16, #tpu.memory_space<vmem>>, vector<1x384x128xbf16>
    %36 = vector.shape_cast %35 : vector<1x384x128xbf16> to vector<384x128xbf16>
    %cst_46 = arith.constant dense<0.000000e+00> : vector<128x128xf32>
    %37 = tpu.matmul %30, %36, %cst_46 {dimension_numbers = #tpu.dot_dimension_numbers<[1], [0], [0], [1], [0, 0, 1, 1], [], []>} : vector<128x384xbf16>, vector<384x128xbf16>, vector<128x128xf32> -> vector<128x128xf32>
    %38 = arith.addf %18, %37 : vector<128x128xf32>
    %c5 = arith.constant 5 : index
    %c0_47 = arith.constant 0 : index
    %c0_48 = arith.constant 0 : index
    %39 = vector.load %arg5[%c5, %c0_47, %c0_48] : memref<9x384x128xbf16, #tpu.memory_space<vmem>>, vector<1x384x128xbf16>
    %40 = vector.shape_cast %39 : vector<1x384x128xbf16> to vector<384x128xbf16>
    %cst_49 = arith.constant dense<0.000000e+00> : vector<128x128xf32>
    %41 = tpu.matmul %30, %40, %cst_49 {dimension_numbers = #tpu.dot_dimension_numbers<[1], [0], [0], [1], [0, 0, 1, 1], [], []>} : vector<128x384xbf16>, vector<384x128xbf16>, vector<128x128xf32> -> vector<128x128xf32>
    %42 = arith.addf %22, %41 : vector<128x128xf32>
    %c0_50 = arith.constant 0 : index
    %c0_51 = arith.constant 0 : index
    %c2_52 = arith.constant 2 : index
    %c0_53 = arith.constant 0 : index
    %c0_54 = arith.constant 0 : index
    %43 = vector.load %arg2[%c0_50, %c0_51, %c2_52, %c0_53, %c0_54] : memref<1x1x10x16x128xbf16, #tpu.memory_space<vmem>>, vector<1x1x8x16x128xbf16>
    %44 = vector.shape_cast %43 : vector<1x1x8x16x128xbf16> to vector<8x16x128xbf16>
    %c0_55 = arith.constant 0 : index
    %c0_56 = arith.constant 0 : index
    %c2_57 = arith.constant 2 : index
    %c0_58 = arith.constant 0 : index
    %c0_59 = arith.constant 0 : index
    %45 = vector.load %arg3[%c0_55, %c0_56, %c2_57, %c0_58, %c0_59] : memref<1x1x10x16x128xbf16, #tpu.memory_space<vmem>>, vector<1x1x8x16x128xbf16>
    %46 = vector.shape_cast %45 : vector<1x1x8x16x128xbf16> to vector<8x16x128xbf16>
    %c0_60 = arith.constant 0 : index
    %c0_61 = arith.constant 0 : index
    %c2_62 = arith.constant 2 : index
    %c0_63 = arith.constant 0 : index
    %c0_64 = arith.constant 0 : index
    %47 = vector.load %arg4[%c0_60, %c0_61, %c2_62, %c0_63, %c0_64] : memref<1x1x10x16x128xbf16, #tpu.memory_space<vmem>>, vector<1x1x8x16x128xbf16>
    %48 = vector.shape_cast %47 : vector<1x1x8x16x128xbf16> to vector<8x16x128xbf16>
    %49 = tpu.concatenate %44, %46, %48 in 2 : vector<8x16x128xbf16>, vector<8x16x128xbf16>, vector<8x16x128xbf16> -> vector<8x16x384xbf16>
    %50 = vector.shape_cast %49 : vector<8x16x384xbf16> to vector<128x384xbf16>
    %c6 = arith.constant 6 : index
    %c0_65 = arith.constant 0 : index
    %c0_66 = arith.constant 0 : index
    %51 = vector.load %arg5[%c6, %c0_65, %c0_66] : memref<9x384x128xbf16, #tpu.memory_space<vmem>>, vector<1x384x128xbf16>
    %52 = vector.shape_cast %51 : vector<1x384x128xbf16> to vector<384x128xbf16>
    %cst_67 = arith.constant dense<0.000000e+00> : vector<128x128xf32>
    %53 = tpu.matmul %50, %52, %cst_67 {dimension_numbers = #tpu.dot_dimension_numbers<[1], [0], [0], [1], [0, 0, 1, 1], [], []>} : vector<128x384xbf16>, vector<384x128xbf16>, vector<128x128xf32> -> vector<128x128xf32>
    %54 = arith.addf %34, %53 : vector<128x128xf32>
    %c7 = arith.constant 7 : index
    %c0_68 = arith.constant 0 : index
    %c0_69 = arith.constant 0 : index
    %55 = vector.load %arg5[%c7, %c0_68, %c0_69] : memref<9x384x128xbf16, #tpu.memory_space<vmem>>, vector<1x384x128xbf16>
    %56 = vector.shape_cast %55 : vector<1x384x128xbf16> to vector<384x128xbf16>
    %cst_70 = arith.constant dense<0.000000e+00> : vector<128x128xf32>
    %57 = tpu.matmul %50, %56, %cst_70 {dimension_numbers = #tpu.dot_dimension_numbers<[1], [0], [0], [1], [0, 0, 1, 1], [], []>} : vector<128x384xbf16>, vector<384x128xbf16>, vector<128x128xf32> -> vector<128x128xf32>
    %58 = arith.addf %38, %57 : vector<128x128xf32>
    %c8 = arith.constant 8 : index
    %c0_71 = arith.constant 0 : index
    %c0_72 = arith.constant 0 : index
    %59 = vector.load %arg5[%c8, %c0_71, %c0_72] : memref<9x384x128xbf16, #tpu.memory_space<vmem>>, vector<1x384x128xbf16>
    %60 = vector.shape_cast %59 : vector<1x384x128xbf16> to vector<384x128xbf16>
    %cst_73 = arith.constant dense<0.000000e+00> : vector<128x128xf32>
    %61 = tpu.matmul %50, %60, %cst_73 {dimension_numbers = #tpu.dot_dimension_numbers<[1], [0], [0], [1], [0, 0, 1, 1], [], []>} : vector<128x384xbf16>, vector<384x128xbf16>, vector<128x128xf32> -> vector<128x128xf32>
    %62 = arith.addf %42, %61 : vector<128x128xf32>
    %63 = vector.shape_cast %54 : vector<128x128xf32> to vector<8x16x128xf32>
    %64 = vector.shape_cast %58 : vector<128x128xf32> to vector<8x16x128xf32>
    %65 = vector.shape_cast %62 : vector<128x128xf32> to vector<8x16x128xf32>
    %66 = vector.extract_strided_slice %63 {offsets = [0, 0, 0], sizes = [8, 8, 128], strides = [1, 1, 1]} : vector<8x16x128xf32> to vector<8x8x128xf32>
    %67 = vector.extract_strided_slice %64 {offsets = [0, 1, 0], sizes = [8, 8, 128], strides = [1, 1, 1]} : vector<8x16x128xf32> to vector<8x8x128xf32>
    %68 = arith.addf %66, %67 : vector<8x8x128xf32>
    %69 = vector.extract_strided_slice %65 {offsets = [0, 2, 0], sizes = [8, 8, 128], strides = [1, 1, 1]} : vector<8x16x128xf32> to vector<8x8x128xf32>
    %70 = arith.addf %68, %69 : vector<8x8x128xf32>
    %71 = arith.truncf %70 : vector<8x8x128xf32> to vector<8x8x128xbf16>
    %c0_74 = arith.constant 0 : index
    %c0_75 = arith.constant 0 : index
    %c0_76 = arith.constant 0 : index
    %c0_77 = arith.constant 0 : index
    %c0_78 = arith.constant 0 : index
    %72 = vector.load %arg6[%c0_74, %c0_75, %c0_76, %c0_77, %c0_78] : memref<1x1x8x8x128xbf16, #tpu.memory_space<vmem>>, vector<1x1x8x8x128xbf16>
    %73 = vector.shape_cast %72 : vector<1x1x8x8x128xbf16> to vector<8x8x128xbf16>
    %74 = vector.shape_cast %71 : vector<8x8x128xbf16> to vector<1x1x8x8x128xbf16>
    tpu.vector_store %arg6[%c0_74, %c0_75, %c0_76, %c0_77, %c0_78], %74 {strides = array<i32>} : memref<1x1x8x8x128xbf16, #tpu.memory_space<vmem>>, vector<1x1x8x8x128xbf16>,
    %cst_79 = arith.constant dense<0.000000e+00> : vector<128xf32>
    %75 = vector.multi_reduction <add>, %70, %cst_79 [0, 1] : vector<8x8x128xf32> to vector<128xf32>
    %76 = vector.shape_cast %75 : vector<128xf32> to vector<1x128xf32>
    %77 = arith.mulf %70, %70 : vector<8x8x128xf32>
    %cst_80 = arith.constant dense<0.000000e+00> : vector<128xf32>
    %78 = vector.multi_reduction <add>, %77, %cst_80 [0, 1] : vector<8x8x128xf32> to vector<128xf32>
    %79 = vector.shape_cast %78 : vector<128xf32> to vector<1x128xf32>
    %80 = tpu.concatenate %76, %79 in 0 : vector<1x128xf32>, vector<1x128xf32> -> vector<2x128xf32>
    %c0_81 = arith.constant 0 : index
    %c0_82 = arith.constant 0 : index
    %c0_83 = arith.constant 0 : index
    %c0_84 = arith.constant 0 : index
    %81 = vector.load %arg7[%c0_81, %c0_82, %c0_83, %c0_84] : memref<1x1x2x128xf32, #tpu.memory_space<vmem>>, vector<1x1x2x128xf32>
    %82 = vector.shape_cast %81 : vector<1x1x2x128xf32> to vector<2x128xf32>
    %83 = vector.shape_cast %80 : vector<2x128xf32> to vector<1x1x2x128xf32>
    tpu.vector_store %arg7[%c0_81, %c0_82, %c0_83, %c0_84], %83 {strides = array<i32>} : memref<1x1x2x128xf32, #tpu.memory_space<vmem>>, vector<1x1x2x128xf32>,
    return
  }
  func.func @transform_0(%arg0: i32, %arg1: i32) -> (i32, i32, i32, i32, i32) {
    %c0_i32 = arith.constant 0 : i32
    %0 = arith.addi %arg1, %c0_i32 : i32
    %c0_i32_0 = arith.constant 0 : i32
    %c0_i32_1 = arith.constant 0 : i32
    %c0_i32_2 = arith.constant 0 : i32
    %c0_i32_3 = arith.constant 0 : i32
    return %arg0, %0, %c0_i32_0, %c0_i32_1, %c0_i32_2 : i32, i32, i32, i32, i32
  }
  func.func @transform_1(%arg0: i32, %arg1: i32) -> (i32, i32, i32, i32, i32) {
    %c1_i32 = arith.constant 1 : i32
    %0 = arith.addi %arg1, %c1_i32 : i32
    %c0_i32 = arith.constant 0 : i32
    %c0_i32_0 = arith.constant 0 : i32
    %c0_i32_1 = arith.constant 0 : i32
    %c0_i32_2 = arith.constant 0 : i32
    return %arg0, %0, %c0_i32, %c0_i32_0, %c0_i32_1 : i32, i32, i32, i32, i32
  }
  func.func @transform_2(%arg0: i32, %arg1: i32) -> (i32, i32, i32, i32, i32) {
    %c2_i32 = arith.constant 2 : i32
    %0 = arith.addi %arg1, %c2_i32 : i32
    %c0_i32 = arith.constant 0 : i32
    %c0_i32_0 = arith.constant 0 : i32
    %c0_i32_1 = arith.constant 0 : i32
    %c0_i32_2 = arith.constant 0 : i32
    return %arg0, %0, %c0_i32, %c0_i32_0, %c0_i32_1 : i32, i32, i32, i32, i32
  }
  func.func @transform_3(%arg0: i32, %arg1: i32) -> (i32, i32, i32) {
    %c0_i32 = arith.constant 0 : i32
    %c0_i32_0 = arith.constant 0 : i32
    %c0_i32_1 = arith.constant 0 : i32
    %c0_i32_2 = arith.constant 0 : i32
    return %c0_i32, %c0_i32_0, %c0_i32_1 : i32, i32, i32
  }
  func.func @transform_4(%arg0: i32, %arg1: i32) -> (i32, i32, i32, i32, i32) {
    %c0_i32 = arith.constant 0 : i32
    %c0_i32_0 = arith.constant 0 : i32
    %c0_i32_1 = arith.constant 0 : i32
    %c0_i32_2 = arith.constant 0 : i32
    return %arg0, %arg1, %c0_i32, %c0_i32_0, %c0_i32_1 : i32, i32, i32, i32, i32
  }
  func.func @transform_5(%arg0: i32, %arg1: i32) -> (i32, i32, i32, i32) {
    %c0_i32 = arith.constant 0 : i32
    %c0_i32_0 = arith.constant 0 : i32
    %c0_i32_1 = arith.constant 0 : i32
    return %arg0, %arg1, %c0_i32, %c0_i32_0 : i32, i32, i32, i32
  }
}

module attributes {stable_mosaic.version = 11 : i64} {
  func.func @kernel(%arg0: i32, %arg1: i32, %arg2: memref<1x1x8x8x128xbf16, #tpu.memory_space<vmem>>, %arg3: memref<1x1x128xf32, #tpu.memory_space<vmem>>, %arg4: memref<1x1x128xf32, #tpu.memory_space<vmem>>, %arg5: memref<1x1x10x16x128xbf16, #tpu.memory_space<vmem>>) attributes {dimension_semantics = [#tpu.dimension_semantics<parallel>, #tpu.dimension_semantics<parallel>], iteration_bounds = array<i64: 2, 10>, scalar_prefetch = 0 : i64, scratch_operands = 0 : i64, tpu.core_type = #tpu.core_type<tc>, window_params = [{transform_indices = @transform_0, window_bounds = array<i64: 1, 1, 8, 8, 128>}, {pipeline_mode = #tpu.pipeline_mode<synchronous>, transform_indices = @transform_1, window_bounds = array<i64: 1, 1, 128>}, {pipeline_mode = #tpu.pipeline_mode<synchronous>, transform_indices = @transform_2, window_bounds = array<i64: 1, 1, 128>}, {transform_indices = @transform_3, window_bounds = array<i64: 1, 1, 10, 16, 128>}]} {
    %cst = arith.constant 0.000000e+00 : bf16
    %0 = vector.broadcast %cst : bf16 to vector<10x16x128xbf16>
    %c0 = arith.constant 0 : index
    %c0_0 = arith.constant 0 : index
    %c0_1 = arith.constant 0 : index
    %c0_2 = arith.constant 0 : index
    %c0_3 = arith.constant 0 : index
    %1 = vector.load %arg5[%c0, %c0_0, %c0_1, %c0_2, %c0_3] : memref<1x1x10x16x128xbf16, #tpu.memory_space<vmem>>, vector<1x1x10x16x128xbf16>
    %2 = vector.shape_cast %1 : vector<1x1x10x16x128xbf16> to vector<10x16x128xbf16>
    %3 = vector.shape_cast %0 : vector<10x16x128xbf16> to vector<1x1x10x16x128xbf16>
    tpu.vector_store %arg5[%c0, %c0_0, %c0_1, %c0_2, %c0_3], %3 {strides = array<i32>} : memref<1x1x10x16x128xbf16, #tpu.memory_space<vmem>>, vector<1x1x10x16x128xbf16>,
    %c1_i32 = arith.constant 1 : i32
    %4 = arith.cmpi sge, %arg1, %c1_i32 : i32
    %c8_i32 = arith.constant 8 : i32
    %5 = arith.cmpi sle, %arg1, %c8_i32 : i32
    %6 = arith.andi %4, %5 : i1
    %7 = arith.extui %6 : i1 to i32
    %c0_i32 = arith.constant 0 : i32
    %8 = arith.cmpi ne, %7, %c0_i32 : i32
    scf.if %8 {
      %c0_4 = arith.constant 0 : index
      %c0_5 = arith.constant 0 : index
      %c0_6 = arith.constant 0 : index
      %c0_7 = arith.constant 0 : index
      %c0_8 = arith.constant 0 : index
      %9 = vector.load %arg2[%c0_4, %c0_5, %c0_6, %c0_7, %c0_8] : memref<1x1x8x8x128xbf16, #tpu.memory_space<vmem>>, vector<1x1x8x8x128xbf16>
      %10 = vector.shape_cast %9 : vector<1x1x8x8x128xbf16> to vector<8x8x128xbf16>
      %11 = arith.extf %10 : vector<8x8x128xbf16> to vector<8x8x128xf32>
      %c0_9 = arith.constant 0 : index
      %c0_10 = arith.constant 0 : index
      %c0_11 = arith.constant 0 : index
      %12 = vector.load %arg3[%c0_9, %c0_10, %c0_11] : memref<1x1x128xf32, #tpu.memory_space<vmem>>, vector<1x1x128xf32>
      %13 = vector.broadcast %12 : vector<1x1x128xf32> to vector<8x8x128xf32>
      %14 = arith.mulf %11, %13 : vector<8x8x128xf32>
      %c0_12 = arith.constant 0 : index
      %c0_13 = arith.constant 0 : index
      %c0_14 = arith.constant 0 : index
      %15 = vector.load %arg4[%c0_12, %c0_13, %c0_14] : memref<1x1x128xf32, #tpu.memory_space<vmem>>, vector<1x1x128xf32>
      %16 = vector.broadcast %15 : vector<1x1x128xf32> to vector<8x8x128xf32>
      %17 = arith.addf %14, %16 : vector<8x8x128xf32>
      %cst_15 = arith.constant 0.000000e+00 : f32
      %18 = vector.broadcast %cst_15 : f32 to vector<8x8x128xf32>
      %19 = arith.maximumf %17, %18 : vector<8x8x128xf32>
      %20 = arith.truncf %19 : vector<8x8x128xf32> to vector<8x8x128xbf16>
      %c0_16 = arith.constant 0 : index
      %c0_17 = arith.constant 0 : index
      %c1 = arith.constant 1 : index
      %c1_18 = arith.constant 1 : index
      %c0_19 = arith.constant 0 : index
      %21 = vector.load %arg5[%c0_16, %c0_17, %c1, %c1_18, %c0_19] : memref<1x1x10x16x128xbf16, #tpu.memory_space<vmem>>, vector<1x1x8x8x128xbf16>
      %22 = vector.shape_cast %21 : vector<1x1x8x8x128xbf16> to vector<8x8x128xbf16>
      %23 = vector.shape_cast %20 : vector<8x8x128xbf16> to vector<1x1x8x8x128xbf16>
      tpu.vector_store %arg5[%c0_16, %c0_17, %c1, %c1_18, %c0_19], %23 {strides = array<i32>} : memref<1x1x10x16x128xbf16, #tpu.memory_space<vmem>>, vector<1x1x8x8x128xbf16>,
    } else {
    }
    return
  }
  func.func @transform_0(%arg0: i32, %arg1: i32) -> (i32, i32, i32, i32, i32) {
    %c1_i32 = arith.constant 1 : i32
    %0 = arith.subi %arg1, %c1_i32 : i32
    %c0_i32 = arith.constant 0 : i32
    %1 = arith.maxsi %0, %c0_i32 : i32
    %c7_i32 = arith.constant 7 : i32
    %2 = arith.minsi %1, %c7_i32 : i32
    %c0_i32_0 = arith.constant 0 : i32
    %c0_i32_1 = arith.constant 0 : i32
    %c0_i32_2 = arith.constant 0 : i32
    %c0_i32_3 = arith.constant 0 : i32
    return %arg0, %2, %c0_i32_0, %c0_i32_1, %c0_i32_2 : i32, i32, i32, i32, i32
  }
  func.func @transform_1(%arg0: i32, %arg1: i32) -> (i32, i32, i32) {
    %c0_i32 = arith.constant 0 : i32
    %c0_i32_0 = arith.constant 0 : i32
    %c0_i32_1 = arith.constant 0 : i32
    %c0_i32_2 = arith.constant 0 : i32
    return %c0_i32, %c0_i32_0, %c0_i32_1 : i32, i32, i32
  }
  func.func @transform_2(%arg0: i32, %arg1: i32) -> (i32, i32, i32) {
    %c0_i32 = arith.constant 0 : i32
    %c0_i32_0 = arith.constant 0 : i32
    %c0_i32_1 = arith.constant 0 : i32
    %c0_i32_2 = arith.constant 0 : i32
    return %c0_i32, %c0_i32_0, %c0_i32_1 : i32, i32, i32
  }
  func.func @transform_3(%arg0: i32, %arg1: i32) -> (i32, i32, i32, i32, i32) {
    %c0_i32 = arith.constant 0 : i32
    %c0_i32_0 = arith.constant 0 : i32
    %c0_i32_1 = arith.constant 0 : i32
    %c0_i32_2 = arith.constant 0 : i32
    return %arg0, %arg1, %c0_i32, %c0_i32_0, %c0_i32_1 : i32, i32, i32, i32, i32
  }
}

module attributes {stable_mosaic.version = 11 : i64} {
  func.func @_bn_add_relu_kernel(%arg0: i32, %arg1: i32, %arg2: memref<1x1x8x8x128xbf16, #tpu.memory_space<vmem>>, %arg3: memref<1x1x8x8x128xbf16, #tpu.memory_space<vmem>>, %arg4: memref<1x1x128xf32, #tpu.memory_space<vmem>>, %arg5: memref<1x1x128xf32, #tpu.memory_space<vmem>>, %arg6: memref<1x1x8x8x128xf32, #tpu.memory_space<vmem>>) attributes {dimension_semantics = [#tpu.dimension_semantics<parallel>, #tpu.dimension_semantics<parallel>], iteration_bounds = array<i64: 2, 8>, scalar_prefetch = 0 : i64, scratch_operands = 0 : i64, tpu.core_type = #tpu.core_type<tc>, window_params = [{transform_indices = @transform_0, window_bounds = array<i64: 1, 1, 8, 8, 128>}, {transform_indices = @transform_1, window_bounds = array<i64: 1, 1, 8, 8, 128>}, {pipeline_mode = #tpu.pipeline_mode<synchronous>, transform_indices = @transform_2, window_bounds = array<i64: 1, 1, 128>}, {pipeline_mode = #tpu.pipeline_mode<synchronous>, transform_indices = @transform_3, window_bounds = array<i64: 1, 1, 128>}, {transform_indices = @transform_4, window_bounds = array<i64: 1, 1, 8, 8, 128>}]} {
    %c0 = arith.constant 0 : index
    %c0_0 = arith.constant 0 : index
    %c0_1 = arith.constant 0 : index
    %c0_2 = arith.constant 0 : index
    %c0_3 = arith.constant 0 : index
    %0 = vector.load %arg2[%c0, %c0_0, %c0_1, %c0_2, %c0_3] : memref<1x1x8x8x128xbf16, #tpu.memory_space<vmem>>, vector<1x1x8x8x128xbf16>
    %1 = vector.shape_cast %0 : vector<1x1x8x8x128xbf16> to vector<8x8x128xbf16>
    %2 = arith.extf %1 : vector<8x8x128xbf16> to vector<8x8x128xf32>
    %c0_4 = arith.constant 0 : index
    %c0_5 = arith.constant 0 : index
    %c0_6 = arith.constant 0 : index
    %3 = vector.load %arg4[%c0_4, %c0_5, %c0_6] : memref<1x1x128xf32, #tpu.memory_space<vmem>>, vector<1x1x128xf32>
    %4 = vector.broadcast %3 : vector<1x1x128xf32> to vector<8x8x128xf32>
    %5 = arith.mulf %2, %4 : vector<8x8x128xf32>
    %c0_7 = arith.constant 0 : index
    %c0_8 = arith.constant 0 : index
    %c0_9 = arith.constant 0 : index
    %6 = vector.load %arg5[%c0_7, %c0_8, %c0_9] : memref<1x1x128xf32, #tpu.memory_space<vmem>>, vector<1x1x128xf32>
    %7 = vector.broadcast %6 : vector<1x1x128xf32> to vector<8x8x128xf32>
    %8 = arith.addf %5, %7 : vector<8x8x128xf32>
    %c0_10 = arith.constant 0 : index
    %c0_11 = arith.constant 0 : index
    %c0_12 = arith.constant 0 : index
    %c0_13 = arith.constant 0 : index
    %c0_14 = arith.constant 0 : index
    %9 = vector.load %arg3[%c0_10, %c0_11, %c0_12, %c0_13, %c0_14] : memref<1x1x8x8x128xbf16, #tpu.memory_space<vmem>>, vector<1x1x8x8x128xbf16>
    %10 = vector.shape_cast %9 : vector<1x1x8x8x128xbf16> to vector<8x8x128xbf16>
    %11 = arith.extf %10 : vector<8x8x128xbf16> to vector<8x8x128xf32>
    %12 = arith.addf %8, %11 : vector<8x8x128xf32>
    %cst = arith.constant 0.000000e+00 : f32
    %13 = vector.broadcast %cst : f32 to vector<8x8x128xf32>
    %14 = arith.maximumf %12, %13 : vector<8x8x128xf32>
    %c0_15 = arith.constant 0 : index
    %c0_16 = arith.constant 0 : index
    %c0_17 = arith.constant 0 : index
    %c0_18 = arith.constant 0 : index
    %c0_19 = arith.constant 0 : index
    %15 = vector.load %arg6[%c0_15, %c0_16, %c0_17, %c0_18, %c0_19] : memref<1x1x8x8x128xf32, #tpu.memory_space<vmem>>, vector<1x1x8x8x128xf32>
    %16 = vector.shape_cast %15 : vector<1x1x8x8x128xf32> to vector<8x8x128xf32>
    %17 = vector.shape_cast %14 : vector<8x8x128xf32> to vector<1x1x8x8x128xf32>
    tpu.vector_store %arg6[%c0_15, %c0_16, %c0_17, %c0_18, %c0_19], %17 {strides = array<i32>} : memref<1x1x8x8x128xf32, #tpu.memory_space<vmem>>, vector<1x1x8x8x128xf32>,
    return
  }
  func.func @transform_0(%arg0: i32, %arg1: i32) -> (i32, i32, i32, i32, i32) {
    %c0_i32 = arith.constant 0 : i32
    %c0_i32_0 = arith.constant 0 : i32
    %c0_i32_1 = arith.constant 0 : i32
    %c0_i32_2 = arith.constant 0 : i32
    return %arg0, %arg1, %c0_i32, %c0_i32_0, %c0_i32_1 : i32, i32, i32, i32, i32
  }
  func.func @transform_1(%arg0: i32, %arg1: i32) -> (i32, i32, i32, i32, i32) {
    %c0_i32 = arith.constant 0 : i32
    %c0_i32_0 = arith.constant 0 : i32
    %c0_i32_1 = arith.constant 0 : i32
    %c0_i32_2 = arith.constant 0 : i32
    return %arg0, %arg1, %c0_i32, %c0_i32_0, %c0_i32_1 : i32, i32, i32, i32, i32
  }
  func.func @transform_2(%arg0: i32, %arg1: i32) -> (i32, i32, i32) {
    %c0_i32 = arith.constant 0 : i32
    %c0_i32_0 = arith.constant 0 : i32
    %c0_i32_1 = arith.constant 0 : i32
    %c0_i32_2 = arith.constant 0 : i32
    return %c0_i32, %c0_i32_0, %c0_i32_1 : i32, i32, i32
  }
  func.func @transform_3(%arg0: i32, %arg1: i32) -> (i32, i32, i32) {
    %c0_i32 = arith.constant 0 : i32
    %c0_i32_0 = arith.constant 0 : i32
    %c0_i32_1 = arith.constant 0 : i32
    %c0_i32_2 = arith.constant 0 : i32
    return %c0_i32, %c0_i32_0, %c0_i32_1 : i32, i32, i32
  }
  func.func @transform_4(%arg0: i32, %arg1: i32) -> (i32, i32, i32, i32, i32) {
    %c0_i32 = arith.constant 0 : i32
    %c0_i32_0 = arith.constant 0 : i32
    %c0_i32_1 = arith.constant 0 : i32
    %c0_i32_2 = arith.constant 0 : i32
    return %arg0, %arg1, %c0_i32, %c0_i32_0, %c0_i32_1 : i32, i32, i32, i32, i32
  }
}

</mosaic_0001>

<llo_original>
// kernel: basic_block_forward.7
$region0: #{basic_block_forward.7}
  #allocation0 [shape = 'u32[]', space=smem, size = 0x4, offset = 0x4, fixed_abs, tag = 'smem constant byte address 0x4 - core index']
  #allocation1 [shape = 'u32[144,128]{1,0:T(1,128)}', space=vmem, size = 0x12000, scoped, tag = 'internal scratch']
  %s0 = inlined_call_operand.vmem [shape: bf16[2,8,8,8,128], index: 0, kind: input, shape index: {}]
  %s1 = inlined_call_operand.vmem [shape: bf16[2,8,8,8,128], index: 1, kind: input, shape index: {}]
  %s2 = inlined_call_operand.vmem [shape: f32[1,1,128], index: 2, kind: input, shape index: {}]
  %s3 = inlined_call_operand.vmem [shape: f32[1,1,128], index: 3, kind: input, shape index: {}]
  %s4 = inlined_call_operand.vmem [shape: f32[2,8,8,8,128], index: 4, kind: output, shape index: {}]
  %s5 = sld [smem:[#allocation0]]
  $region49: #{basic_block_forward.7} parent=0
    _
  %s7 = ssub.s32 1, %s5
  %s8 = scalar_select 0, %s7, %s5
  loop: start=0, step=1, limit=18
  $region2: #{basic_block_forward.7} parent=0 // loop_pre_header
    _
  $region3: #{basic_block_forward.7} parent=0 // loop_header
    %s10 = sphi 0, %s14
    %p11 = scmp.ge.s32.totalorder %s10, 18
    %s17 = sphi 0, %s29
    %s18 = sphi 0, %s25
    %s19 = sphi 0, %s17
    %s20 = sphi 0, %s18
    %s21 = sphi 0, %s19
    %s22 = sphi 0, %s20
    %s34 = sphi 0, %s36
    %s37 = sphi 0, %s34
    %s38 = sphi 0, %s37
    %s54 = sphi 0, %s38
    %s62 = sphi 0, %s64
    %s65 = sphi 0, %s62
    %s66 = sphi 0, %s65
    %s82 = sphi 0, %s66
    %s86 = sphi 0, %s86
    %s88 = sphi 0, %s86
    %s89 = sphi 0, %s88
    %s103 = sphi 0, %s89
    %s107 = sphi 0, %s107
    %s109 = sphi 0, %s107
    %s110 = sphi 0, %s109
    %s124 = sphi 0, %s110
    %s132 = sphi 0, %s134
    %s135 = sphi 0, %s132
    %s136 = sphi 0, %s135
    %s152 = sphi 0, %s136
  $region4: #{basic_block_forward.7} parent=0 // loop_header_branch
    %13 = sbr.rel (%p11) target = $region8
  $region5: #{basic_block_forward.7} parent=0 // loop_body
    %s15 = ssub.s32 %s10, 1
    %s16 = ssub.s32 %s10, 2
    %s23 = sadd.s32 1, %s18
    %p24 = scmp.ge.s32.totalorder %s23, 8
    %s25 = scalar_select %p24, 0, %s23
    %s26 = sadd.s32 1, %s17
    %s27 = scalar_select %p24, %s26, %s17
    %p28 = scmp.ge.s32.totalorder %s27, 2
    %s29 = scalar_select %p28, 0, %s27
    %s30 = ssub.s32 %s17, %s29
    %s31 = ssub.s32 %s18, %s25
    %s32 = sor.u32 %s30, %s31
    %p33 = scmp.eq.s32.totalorder %s32, 0
    %s35 = sadd.s32 %s34, 1
    %s36 = scalar_select %p33, %s34, %s35
    %p39 = pneg %p33
    %p40 = scmp.eq.s32.totalorder %s10, 15
    %p41 = por %p39, %p40
    %p42 = scmp.ne.s32.totalorder %s34, %s37
    %p43 = scmp.eq.s32.totalorder %s10, 0
    %p44 = por %p42, %p43
    %p45 = scmp.ne.s32.totalorder %s34, %s37
    %p46 = scmp.eq.s32.totalorder %s15, 15
    %p47 = por %p45, %p46
    %p48 = scmp.ne.s32.totalorder %s37, %s38
    %p49 = scmp.eq.s32.totalorder %s15, 0
    %p50 = por %p48, %p49
    %p51 = scmp.ne.s32.totalorder %s37, %s38
    %p52 = scmp.eq.s32.totalorder %s16, 15
    %p53 = por %p51, %p52
    %p55 = scmp.ne.s32.totalorder %s38, %s54
    %p56 = scmp.eq.s32.totalorder %s16, 0
    %p57 = por %p55, %p56
    %s58 = ssub.s32 %s17, %s29
    %s59 = ssub.s32 %s18, %s25
    %s60 = sor.u32 %s58, %s59
    %p61 = scmp.eq.s32.totalorder %s60, 0
    %s63 = sadd.s32 %s62, 1
    %s64 = scalar_select %p61, %s62, %s63
    %p67 = pneg %p61
    %p68 = scmp.eq.s32.totalorder %s10, 15
    %p69 = por %p67, %p68
    %p70 = scmp.ne.s32.totalorder %s62, %s65
    %p71 = scmp.eq.s32.totalorder %s10, 0
    %p72 = por %p70, %p71
    %p73 = scmp.ne.s32.totalorder %s62, %s65
    %p74 = scmp.eq.s32.totalorder %s15, 15
    %p75 = por %p73, %p74
    %p76 = scmp.ne.s32.totalorder %s65, %s66
    %p77 = scmp.eq.s32.totalorder %s15, 0
    %p78 = por %p76, %p77
    %p79 = scmp.ne.s32.totalorder %s65, %s66
    %p80 = scmp.eq.s32.totalorder %s16, 15
    %p81 = por %p79, %p80
    %p83 = scmp.ne.s32.totalorder %s66, %s82
    %p84 = scmp.eq.s32.totalorder %s16, 0
    %p85 = por %p83, %p84
    %s87 = sadd.s32 %s86, 1
    %p90 = scmp.eq.s32.totalorder %s10, 15
    %p91 = scmp.ne.s32.totalorder %s86, %s88
    %p92 = scmp.eq.s32.totalorder %s10, 0
    %p93 = por %p91, %p92
    %p94 = scmp.ne.s32.totalorder %s86, %s88
    %p95 = scmp.eq.s32.totalorder %s15, 15
    %p96 = por %p94, %p95
    %p97 = scmp.ne.s32.totalorder %s88, %s89
    %p98 = scmp.eq.s32.totalorder %s15, 0
    %p99 = por %p97, %p98
    %p100 = scmp.ne.s32.totalorder %s88, %s89
    %p101 = scmp.eq.s32.totalorder %s16, 15
    %p102 = por %p100, %p101
    %p104 = scmp.ne.s32.totalorder %s89, %s103
    %p105 = scmp.eq.s32.totalorder %s16, 0
    %p106 = por %p104, %p105
    %s108 = sadd.s32 %s107, 1
    %p111 = scmp.eq.s32.totalorder %s10, 15
    %p112 = scmp.ne.s32.totalorder %s107, %s109
    %p113 = scmp.eq.s32.totalorder %s10, 0
    %p114 = por %p112, %p113
    %p115 = scmp.ne.s32.totalorder %s107, %s109
    %p116 = scmp.eq.s32.totalorder %s15, 15
    %p117 = por %p115, %p116
    %p118 = scmp.ne.s32.totalorder %s109, %s110
    %p119 = scmp.eq.s32.totalorder %s15, 0
    %p120 = por %p118, %p119
    %p121 = scmp.ne.s32.totalorder %s109, %s110
    %p122 = scmp.eq.s32.totalorder %s16, 15
    %p123 = por %p121, %p122
    %p125 = scmp.ne.s32.totalorder %s110, %s124
    %p126 = scmp.eq.s32.totalorder %s16, 0
    %p127 = por %p125, %p126
    %s128 = ssub.s32 %s17, %s29
    %s129 = ssub.s32 %s18, %s25
    %s130 = sor.u32 %s128, %s129
    %p131 = scmp.eq.s32.totalorder %s130, 0
    %s133 = sadd.s32 %s132, 1
    %s134 = scalar_select %p131, %s132, %s133
    %p137 = pneg %p131
    %p138 = scmp.eq.s32.totalorder %s10, 15
    %p139 = por %p137, %p138
    %p140 = scmp.ne.s32.totalorder %s132, %s135
    %p141 = scmp.eq.s32.totalorder %s10, 0
    %p142 = por %p140, %p141
    %p143 = scmp.ne.s32.totalorder %s132, %s135
    %p144 = scmp.eq.s32.totalorder %s15, 15
    %p145 = por %p143, %p144
    %p146 = scmp.ne.s32.totalorder %s135, %s136
    %p147 = scmp.eq.s32.totalorder %s15, 0
    %p148 = por %p146, %p147
    %p149 = scmp.ne.s32.totalorder %s135, %s136
    %p150 = scmp.eq.s32.totalorder %s16, 15
    %p151 = por %p149, %p150
    %p153 = scmp.ne.s32.totalorder %s136, %s152
    %p154 = scmp.eq.s32.totalorder %s16, 0
    %p155 = por %p153, %p154
    %p156 = scmp.le.s32.totalorder 1, %s10
    %p157 = scmp.lt.s32.totalorder %s10, 17
    %p158 = pnand %p156, %p157
    %p159 = pneg %p158
    // Predicated region
    $region9: #{basic_block_forward.7} parent=5 // pred_check
      _
    $region10: #{basic_block_forward.7} parent=5 // pred_check_branch
      %161 = sbr.rel (%p158) target = $region12
    $region11: #{basic_block_forward.7} parent=5 // pred_region
      %s162 = ssub.s32 %s10, 1
      // Predicated region
      $region13: #{basic_block_forward.7} parent=11 // pred_check
        %p163 = pneg %p99
      $region14: #{basic_block_forward.7} parent=11 // pred_check_branch
        %165 = sbr.rel (%p163) target = $region16
      $region15: #{basic_block_forward.7} parent=11 // pred_region
        _
      $region16: #{basic_block_forward.7} parent=11 // pred_fallthru
        _
      // Predicated region
      $region17: #{basic_block_forward.7} parent=11 // pred_check
        %p166 = pneg %p120
      $region18: #{basic_block_forward.7} parent=11 // pred_check_branch
        %168 = sbr.rel (%p166) target = $region20
      $region19: #{basic_block_forward.7} parent=11 // pred_region
        _
      $region20: #{basic_block_forward.7} parent=11 // pred_fallthru
        _
    $region12: #{basic_block_forward.7} parent=5 // pred_fallthru
      _
    %p169 = scmp.lt.s32.totalorder %s10, 16
    // Predicated region
    $region21: #{basic_block_forward.7} parent=5 // pred_check
      %p170 = pneg %p169
    $region22: #{basic_block_forward.7} parent=5 // pred_check_branch
      %172 = sbr.rel (%p170) target = $region24
    $region23: #{basic_block_forward.7} parent=5 // pred_region
      // Predicated region
      $region25: #{basic_block_forward.7} parent=23 // pred_check
        %p173 = pneg %p44
      $region26: #{basic_block_forward.7} parent=23 // pred_check_branch
        %175 = sbr.rel (%p173) target = $region28
      $region27: #{basic_block_forward.7} parent=23 // pred_region
        %p176 = scmp.lt.s32.totalorder %s17, 1
        %s177 = scalar_select %p176, %s17, 1
        %p178 = scmp.lt.s32.totalorder %s18, 7
        %s179 = scalar_select %p178, %s18, 7
        %s180 = smul.addr %s179, 8
        %s181 = smul.addr %s177, 64
        %s182 = sadd.s32 %s180, %s181
        %s183 = smul.addr %s182, 4
        %s184 = scalar_lea.vmem %s0, %s183
      $region28: #{basic_block_forward.7} parent=23 // pred_fallthru
        _
      // Predicated region
      $region29: #{basic_block_forward.7} parent=23 // pred_check
        %p185 = pneg %p72
      $region30: #{basic_block_forward.7} parent=23 // pred_check_branch
        %187 = sbr.rel (%p185) target = $region32
      $region31: #{basic_block_forward.7} parent=23 // pred_region
        %p188 = scmp.lt.s32.totalorder %s17, 1
        %s189 = scalar_select %p188, %s17, 1
        %p190 = scmp.lt.s32.totalorder %s18, 7
        %s191 = scalar_select %p190, %s18, 7
        %s192 = smul.addr %s191, 8
        %s193 = smul.addr %s189, 64
        %s194 = sadd.s32 %s192, %s193
        %s195 = smul.addr %s194, 4
        %s196 = scalar_lea.vmem %s1, %s195
      $region32: #{basic_block_forward.7} parent=23 // pred_fallthru
        _
    $region24: #{basic_block_forward.7} parent=5 // pred_fallthru
      _
    %p197 = scmp.le.s32.totalorder 1, %s10
    %p198 = scmp.lt.s32.totalorder %s10, 17
    %p199 = pnand %p197, %p198
    %p200 = pneg %p199
    // Predicated region
    $region33: #{basic_block_forward.7} parent=5 // pred_check
      _
    $region34: #{basic_block_forward.7} parent=5 // pred_check_branch
      %202 = sbr.rel (%p199) target = $region36
    $region35: #{basic_block_forward.7} parent=5 // pred_region
      %s203 = ssub.s32 %s10, 1
      %p204 = scmp.lt.s32.totalorder %s19, 1
      %s205 = scalar_select %p204, %s19, 1
      %p206 = scmp.lt.s32.totalorder %s20, 7
      %s207 = scalar_select %p206, %s20, 7
      %s208 = smul.addr %s207, 8
      %s209 = smul.addr %s205, 64
      %s210 = sadd.s32 %s208, %s209
      %s211 = smul.addr %s210, 4
      %s212 = scalar_lea.vmem %s0, %s211
      %p213 = pneg %p50
      %p214 = pneg %p47
      %p215 = scmp.lt.s32.totalorder %s19, 1
      %s216 = scalar_select %p215, %s19, 1
      %p217 = scmp.lt.s32.totalorder %s20, 7
      %s218 = scalar_select %p217, %s20, 7
      %s219 = smul.addr %s218, 8
      %s220 = smul.addr %s216, 64
      %s221 = sadd.s32 %s219, %s220
      %s222 = smul.addr %s221, 4
      %s223 = scalar_lea.vmem %s1, %s222
      %p224 = pneg %p78
      %p225 = pneg %p75
      %p226 = pneg %p99
      %p227 = pneg %p96
      %p228 = pneg %p120
      %p229 = pneg %p117
      %p230 = pneg %p148
      %p231 = pneg %p145
      %p232 = scmp.lt.s32.totalorder %s19, 1
      %s233 = scalar_select %p232, %s19, 1
      %p234 = scmp.lt.s32.totalorder %s20, 7
      %s235 = scalar_select %p234, %s20, 7
      %s236 = smul.addr %s235, 8
      %s237 = smul.addr %s233, 64
      %s238 = sadd.s32 %s236, %s237
      %s239 = smul.addr %s238, 8
      %s240 = scalar_lea.vmem %s4, %s239
      %p241 = scmp.lt.s32.totalorder %s19, 1
      %s242 = scalar_select %p241, %s19, 1
      %p243 = scmp.lt.s32.totalorder %s20, 7
      %s244 = scalar_select %p243, %s20, 7
      %s245 = smul.addr %s244, 8
      %s246 = smul.addr %s242, 64
      %s247 = sadd.s32 %s245, %s246
      %s248 = smul.addr %s247, 4
      %s249 = scalar_lea.vmem %s0, %s248
      %p250 = scmp.lt.s32.totalorder %s19, 1
      %s251 = scalar_select %p250, %s19, 1
      %p252 = scmp.lt.s32.totalorder %s20, 7
      %s253 = scalar_select %p252, %s20, 7
      %s254 = smul.addr %s253, 8
      %s255 = smul.addr %s251, 64
      %s256 = sadd.s32 %s254, %s255
      %s257 = smul.addr %s256, 4
      %s258 = scalar_lea.vmem %s1, %s257
      %p259 = scmp.lt.s32.totalorder %s19, 1
      %s260 = scalar_select %p259, %s19, 1
      %p261 = scmp.lt.s32.totalorder %s20, 7
      %s262 = scalar_select %p261, %s20, 7
      %s263 = smul.addr %s262, 8
      %s264 = smul.addr %s260, 64
      %s265 = sadd.s32 %s263, %s264
      %s266 = smul.addr %s265, 8
      %s267 = scalar_lea.vmem %s4, %s266
      %v268 = vld [vmem:[%s249] sm:$0xf]
      %v269 = vld [vmem:[%s249 + $0x4] sm:$0xf]
      %v270 = vld [vmem:[%s249 + $0x8] sm:$0xf]
      %v271 = vld [vmem:[%s249 + $0xc] sm:$0xf]
      %v272 = vld [vmem:[%s249 + $0x10] sm:$0xf]
      %v273 = vld [vmem:[%s249 + $0x14] sm:$0xf]
      %v274 = vld [vmem:[%s249 + $0x18] sm:$0xf]
      %v275 = vld [vmem:[%s249 + $0x1c] sm:$0xf]
      %v276 = vunpack.c.l.bf16 %v268
      %v277 = vunpack.c.l.bf16 %v269
      %v278 = vunpack.c.l.bf16 %v270
      %v279 = vunpack.c.l.bf16 %v271
      %v280 = vunpack.c.l.bf16 %v272
      %v281 = vunpack.c.l.bf16 %v273
      %v282 = vunpack.c.l.bf16 %v274
      %v283 = vunpack.c.l.bf16 %v275
      %v284 = vld [vmem:[%s2] sm:$0x1]
      %v286 = vlaneseq
      %v287 = vshrl.u32 %v286, 7
      %v288 = vsub.s32 0, %v287
      %v289 = vrot.slane %v284, %v288
      %v291 = vmul.f32 %v276, %v289
      %v292 = vmul.f32 %v277, %v289
      %v293 = vmul.f32 %v278, %v289
      %v294 = vmul.f32 %v279, %v289
      %v295 = vmul.f32 %v280, %v289
      %v296 = vmul.f32 %v281, %v289
      %v297 = vmul.f32 %v282, %v289
      %v298 = vmul.f32 %v283, %v289
      %v299 = vld [vmem:[%s3] sm:$0x1]
      %v301 = vlaneseq
      %v302 = vshrl.u32 %v301, 7
      %v303 = vsub.s32 0, %v302
      %v304 = vrot.slane %v299, %v303
      %v306 = vadd.f32 %v291, %v304
      %v307 = vadd.f32 %v292, %v304
      %v308 = vadd.f32 %v293, %v304
      %v309 = vadd.f32 %v294, %v304
      %v310 = vadd.f32 %v295, %v304
      %v311 = vadd.f32 %v296, %v304
      %v312 = vadd.f32 %v297, %v304
      %v313 = vadd.f32 %v298, %v304
      %v314 = vld [vmem:[%s258] sm:$0xf]
      %v315 = vld [vmem:[%s258 + $0x4] sm:$0xf]
      %v316 = vld [vmem:[%s258 + $0x8] sm:$0xf]
      %v317 = vld [vmem:[%s258 + $0xc] sm:$0xf]
      %v318 = vld [vmem:[%s258 + $0x10] sm:$0xf]
      %v319 = vld [vmem:[%s258 + $0x14] sm:$0xf]
      %v320 = vld [vmem:[%s258 + $0x18] sm:$0xf]
      %v321 = vld [vmem:[%s258 + $0x1c] sm:$0xf]
      %v322 = vunpack.c.l.bf16 %v314
      %v323 = vunpack.c.l.bf16 %v315
      %v324 = vunpack.c.l.bf16 %v316
      %v325 = vunpack.c.l.bf16 %v317
      %v326 = vunpack.c.l.bf16 %v318
      %v327 = vunpack.c.l.bf16 %v319
      %v328 = vunpack.c.l.bf16 %v320
      %v329 = vunpack.c.l.bf16 %v321
      %v330 = vadd.f32 %v306, %v322
      %v331 = vadd.f32 %v307, %v323
      %v332 = vadd.f32 %v308, %v324
      %v333 = vadd.f32 %v309, %v325
      %v334 = vadd.f32 %v310, %v326
      %v335 = vadd.f32 %v311, %v327
      %v336 = vadd.f32 %v312, %v328
      %v337 = vadd.f32 %v313, %v329
      %v338 = vmax.f32 %v330, 0.0
      %v339 = vmax.f32 %v331, 0.0
      %v340 = vmax.f32 %v332, 0.0
      %v341 = vmax.f32 %v333, 0.0
      %v342 = vmax.f32 %v334, 0.0
      %v343 = vmax.f32 %v335, 0.0
      %v344 = vmax.f32 %v336, 0.0
      %v345 = vmax.f32 %v337, 0.0
      %346 = vst [vmem:[%s267] sm:$0xff] %v338
      %347 = vst [vmem:[%s267 + $0x8] sm:$0xff] %v339
      %348 = vst [vmem:[%s267 + $0x10] sm:$0xff] %v340
      %349 = vst [vmem:[%s267 + $0x18] sm:$0xff] %v341
      %350 = vst [vmem:[%s267 + $0x20] sm:$0xff] %v342
      %351 = vst [vmem:[%s267 + $0x28] sm:$0xff] %v343
      %352 = vst [vmem:[%s267 + $0x30] sm:$0xff] %v344
      %353 = vst [vmem:[%s267 + $0x38] sm:$0xff] %v345
      %p354 = scmp.lt.s32.totalorder %s19, 1
      %s355 = scalar_select %p354, %s19, 1
      %p356 = scmp.lt.s32.totalorder %s20, 7
      %s357 = scalar_select %p356, %s20, 7
      %s358 = smul.addr %s357, 8
      %s359 = smul.addr %s355, 64
      %s360 = sadd.s32 %s358, %s359
      %s361 = smul.addr %s360, 8
      %s362 = scalar_lea.vmem %s4, %s361
      // Predicated region
      $region37: #{basic_block_forward.7} parent=35 // pred_check
        %p363 = pneg %p145
      $region38: #{basic_block_forward.7} parent=35 // pred_check_branch
        %365 = sbr.rel (%p363) target = $region40
      $region39: #{basic_block_forward.7} parent=35 // pred_region
        _
      $region40: #{basic_block_forward.7} parent=35 // pred_fallthru
        _
    $region36: #{basic_block_forward.7} parent=5 // pred_fallthru
      _
    %p366 = scmp.le.s32.totalorder 2, %s10
    // Predicated region
    $region41: #{basic_block_forward.7} parent=5 // pred_check
      %p367 = pneg %p366
    $region42: #{basic_block_forward.7} parent=5 // pred_check_branch
      %369 = sbr.rel (%p367) target = $region44
    $region43: #{basic_block_forward.7} parent=5 // pred_region
      %s370 = ssub.s32 %s10, 2
      // Predicated region
      $region45: #{basic_block_forward.7} parent=43 // pred_check
        %p371 = pneg %p151
      $region46: #{basic_block_forward.7} parent=43 // pred_check_branch
        %373 = sbr.rel (%p371) target = $region48
      $region47: #{basic_block_forward.7} parent=43 // pred_region
        %p374 = scmp.lt.s32.totalorder %s21, 1
        %s375 = scalar_select %p374, %s21, 1
        %p376 = scmp.lt.s32.totalorder %s22, 7
        %s377 = scalar_select %p376, %s22, 7
        %s378 = smul.addr %s377, 8
        %s379 = smul.addr %s375, 64
        %s380 = sadd.s32 %s378, %s379
        %s381 = smul.addr %s380, 8
        %s382 = scalar_lea.vmem %s4, %s381
      $region48: #{basic_block_forward.7} parent=43 // pred_fallthru
        _
    $region44: #{basic_block_forward.7} parent=5 // pred_fallthru
      _
  $region6: #{basic_block_forward.7} parent=0 // loop_footer
    %s14 = sadd.s32 1, %s10
  $region7: #{basic_block_forward.7} parent=0 // loop_footer_branch
    %9 = sbr.rel target = $region3
  $region8: #{basic_block_forward.7} parent=0 // loop_exit
    _

// kernel: basic_block_forward.5
$region0: #{basic_block_forward.5}
  #allocation0 [shape = 'u32[]', space=smem, size = 0x4, offset = 0x4, fixed_abs, tag = 'smem constant byte address 0x4 - core index']
  #allocation1 [shape = 'u32[144,128]{1,0:T(1,128)}', space=vmem, size = 0x12000, scoped, tag = 'internal scratch']
  %s0 = inlined_call_operand.vmem [shape: bf16[2,8,8,8,128], index: 0, kind: input, shape index: {}]
  %s1 = inlined_call_operand.vmem [shape: f32[1,1,128], index: 1, kind: input, shape index: {}]
  %s2 = inlined_call_operand.vmem [shape: f32[1,1,128], index: 2, kind: input, shape index: {}]
  %s3 = inlined_call_operand.vmem [shape: bf16[2,10,10,16,128], index: 3, kind: output, shape index: {}]
  %s4 = sld [smem:[#allocation0]]
  $region49: #{basic_block_forward.5} parent=0
    _
  %s6 = ssub.s32 1, %s4
  %s7 = scalar_select 0, %s6, %s4
  loop: start=0, step=1, limit=22
  $region2: #{basic_block_forward.5} parent=0 // loop_pre_header
    _
  $region3: #{basic_block_forward.5} parent=0 // loop_header
    %s9 = sphi 0, %s13
    %p10 = scmp.ge.s32.totalorder %s9, 22
    %s16 = sphi 0, %s28
    %s17 = sphi 0, %s24
    %s18 = sphi 0, %s16
    %s19 = sphi 0, %s17
    %s20 = sphi 0, %s18
    %s21 = sphi 0, %s19
    %s43 = sphi 0, %s45
    %s46 = sphi 0, %s43
    %s47 = sphi 0, %s46
    %s63 = sphi 0, %s47
    %s67 = sphi 0, %s67
    %s69 = sphi 0, %s67
    %s70 = sphi 0, %s69
    %s84 = sphi 0, %s70
    %s88 = sphi 0, %s88
    %s90 = sphi 0, %s88
    %s91 = sphi 0, %s90
    %s105 = sphi 0, %s91
    %s113 = sphi 0, %s115
    %s116 = sphi 0, %s113
    %s117 = sphi 0, %s116
    %s133 = sphi 0, %s117
  $region4: #{basic_block_forward.5} parent=0 // loop_header_branch
    %12 = sbr.rel (%p10) target = $region8
  $region5: #{basic_block_forward.5} parent=0 // loop_body
    %s14 = ssub.s32 %s9, 1
    %s15 = ssub.s32 %s9, 2
    %s22 = sadd.s32 1, %s17
    %p23 = scmp.ge.s32.totalorder %s22, 10
    %s24 = scalar_select %p23, 0, %s22
    %s25 = sadd.s32 1, %s16
    %s26 = scalar_select %p23, %s25, %s16
    %p27 = scmp.ge.s32.totalorder %s26, 2
    %s28 = scalar_select %p27, 0, %s26
    %s29 = ssub.s32 %s17, 1
    %p30 = scmp.gt.s32.totalorder %s29, 0
    %s31 = scalar_select %p30, %s29, 0
    %p32 = scmp.lt.s32.totalorder %s31, 7
    %s33 = scalar_select %p32, %s31, 7
    %s34 = ssub.s32 %s24, 1
    %p35 = scmp.gt.s32.totalorder %s34, 0
    %s36 = scalar_select %p35, %s34, 0
    %p37 = scmp.lt.s32.totalorder %s36, 7
    %s38 = scalar_select %p37, %s36, 7
    %s39 = ssub.s32 %s16, %s28
    %s40 = ssub.s32 %s33, %s38
    %s41 = sor.u32 %s39, %s40
    %p42 = scmp.eq.s32.totalorder %s41, 0
    %s44 = sadd.s32 %s43, 1
    %s45 = scalar_select %p42, %s43, %s44
    %p48 = pneg %p42
    %p49 = scmp.eq.s32.totalorder %s9, 19
    %p50 = por %p48, %p49
    %p51 = scmp.ne.s32.totalorder %s43, %s46
    %p52 = scmp.eq.s32.totalorder %s9, 0
    %p53 = por %p51, %p52
    %p54 = scmp.ne.s32.totalorder %s43, %s46
    %p55 = scmp.eq.s32.totalorder %s14, 19
    %p56 = por %p54, %p55
    %p57 = scmp.ne.s32.totalorder %s46, %s47
    %p58 = scmp.eq.s32.totalorder %s14, 0
    %p59 = por %p57, %p58
    %p60 = scmp.ne.s32.totalorder %s46, %s47
    %p61 = scmp.eq.s32.totalorder %s15, 19
    %p62 = por %p60, %p61
    %p64 = scmp.ne.s32.totalorder %s47, %s63
    %p65 = scmp.eq.s32.totalorder %s15, 0
    %p66 = por %p64, %p65
    %s68 = sadd.s32 %s67, 1
    %p71 = scmp.eq.s32.totalorder %s9, 19
    %p72 = scmp.ne.s32.totalorder %s67, %s69
    %p73 = scmp.eq.s32.totalorder %s9, 0
    %p74 = por %p72, %p73
    %p75 = scmp.ne.s32.totalorder %s67, %s69
    %p76 = scmp.eq.s32.totalorder %s14, 19
    %p77 = por %p75, %p76
    %p78 = scmp.ne.s32.totalorder %s69, %s70
    %p79 = scmp.eq.s32.totalorder %s14, 0
    %p80 = por %p78, %p79
    %p81 = scmp.ne.s32.totalorder %s69, %s70
    %p82 = scmp.eq.s32.totalorder %s15, 19
    %p83 = por %p81, %p82
    %p85 = scmp.ne.s32.totalorder %s70, %s84
    %p86 = scmp.eq.s32.totalorder %s15, 0
    %p87 = por %p85, %p86
    %s89 = sadd.s32 %s88, 1
    %p92 = scmp.eq.s32.totalorder %s9, 19
    %p93 = scmp.ne.s32.totalorder %s88, %s90
    %p94 = scmp.eq.s32.totalorder %s9, 0
    %p95 = por %p93, %p94
    %p96 = scmp.ne.s32.totalorder %s88, %s90
    %p97 = scmp.eq.s32.totalorder %s14, 19
    %p98 = por %p96, %p97
    %p99 = scmp.ne.s32.totalorder %s90, %s91
    %p100 = scmp.eq.s32.totalorder %s14, 0
    %p101 = por %p99, %p100
    %p102 = scmp.ne.s32.totalorder %s90, %s91
    %p103 = scmp.eq.s32.totalorder %s15, 19
    %p104 = por %p102, %p103
    %p106 = scmp.ne.s32.totalorder %s91, %s105
    %p107 = scmp.eq.s32.totalorder %s15, 0
    %p108 = por %p106, %p107
    %s109 = ssub.s32 %s16, %s28
    %s110 = ssub.s32 %s17, %s24
    %s111 = sor.u32 %s109, %s110
    %p112 = scmp.eq.s32.totalorder %s111, 0
    %s114 = sadd.s32 %s113, 1
    %s115 = scalar_select %p112, %s113, %s114
    %p118 = pneg %p112
    %p119 = scmp.eq.s32.totalorder %s9, 19
    %p120 = por %p118, %p119
    %p121 = scmp.ne.s32.totalorder %s113, %s116
    %p122 = scmp.eq.s32.totalorder %s9, 0
    %p123 = por %p121, %p122
    %p124 = scmp.ne.s32.totalorder %s113, %s116
    %p125 = scmp.eq.s32.totalorder %s14, 19
    %p126 = por %p124, %p125
    %p127 = scmp.ne.s32.totalorder %s116, %s117
    %p128 = scmp.eq.s32.totalorder %s14, 0
    %p129 = por %p127, %p128
    %p130 = scmp.ne.s32.totalorder %s116, %s117
    %p131 = scmp.eq.s32.totalorder %s15, 19
    %p132 = por %p130, %p131
    %p134 = scmp.ne.s32.totalorder %s117, %s133
    %p135 = scmp.eq.s32.totalorder %s15, 0
    %p136 = por %p134, %p135
    %p137 = scmp.le.s32.totalorder 1, %s9
    %p138 = scmp.lt.s32.totalorder %s9, 21
    %p139 = pnand %p137, %p138
    %p140 = pneg %p139
    // Predicated region
    $region9: #{basic_block_forward.5} parent=5 // pred_check
      _
    $region10: #{basic_block_forward.5} parent=5 // pred_check_branch
      %142 = sbr.rel (%p139) target = $region12
    $region11: #{basic_block_forward.5} parent=5 // pred_region
      %s143 = ssub.s32 %s9, 1
      // Predicated region
      $region13: #{basic_block_forward.5} parent=11 // pred_check
        %p144 = pneg %p80
      $region14: #{basic_block_forward.5} parent=11 // pred_check_branch
        %146 = sbr.rel (%p144) target = $region16
      $region15: #{basic_block_forward.5} parent=11 // pred_region
        _
      $region16: #{basic_block_forward.5} parent=11 // pred_fallthru
        _
      // Predicated region
      $region17: #{basic_block_forward.5} parent=11 // pred_check
        %p147 = pneg %p101
      $region18: #{basic_block_forward.5} parent=11 // pred_check_branch
        %149 = sbr.rel (%p147) target = $region20
      $region19: #{basic_block_forward.5} parent=11 // pred_region
        _
      $region20: #{basic_block_forward.5} parent=11 // pred_fallthru
        _
    $region12: #{basic_block_forward.5} parent=5 // pred_fallthru
      _
    %p150 = scmp.lt.s32.totalorder %s9, 20
    // Predicated region
    $region21: #{basic_block_forward.5} parent=5 // pred_check
      %p151 = pneg %p150
    $region22: #{basic_block_forward.5} parent=5 // pred_check_branch
      %153 = sbr.rel (%p151) target = $region24
    $region23: #{basic_block_forward.5} parent=5 // pred_region
      // Predicated region
      $region25: #{basic_block_forward.5} parent=23 // pred_check
        %p154 = pneg %p53
      $region26: #{basic_block_forward.5} parent=23 // pred_check_branch
        %156 = sbr.rel (%p154) target = $region28
      $region27: #{basic_block_forward.5} parent=23 // pred_region
        %s157 = ssub.s32 %s17, 1
        %p158 = scmp.gt.s32.totalorder %s157, 0
        %s159 = scalar_select %p158, %s157, 0
        %p160 = scmp.lt.s32.totalorder %s159, 7
        %s161 = scalar_select %p160, %s159, 7
        %p162 = scmp.lt.s32.totalorder %s16, 1
        %s163 = scalar_select %p162, %s16, 1
        %p164 = scmp.lt.s32.totalorder %s161, 7
        %s165 = scalar_select %p164, %s161, 7
        %s166 = smul.addr %s165, 8
        %s167 = smul.addr %s163, 64
        %s168 = sadd.s32 %s166, %s167
        %s169 = smul.addr %s168, 4
        %s170 = scalar_lea.vmem %s0, %s169
        %s171 = ssub.s32 %s17, 1
        %p172 = scmp.gt.s32.totalorder %s171, 0
        %s173 = scalar_select %p172, %s171, 0
        %p174 = scmp.lt.s32.totalorder %s173, 7
        %s175 = scalar_select %p174, %s173, 7
      $region28: #{basic_block_forward.5} parent=23 // pred_fallthru
        _
    $region24: #{basic_block_forward.5} parent=5 // pred_fallthru
      _
    %p176 = scmp.le.s32.totalorder 1, %s9
    %p177 = scmp.lt.s32.totalorder %s9, 21
    %p178 = pnand %p176, %p177
    %p179 = pneg %p178
    // Predicated region
    $region29: #{basic_block_forward.5} parent=5 // pred_check
      _
    $region30: #{basic_block_forward.5} parent=5 // pred_check_branch
      %181 = sbr.rel (%p178) target = $region32
    $region31: #{basic_block_forward.5} parent=5 // pred_region
      %s182 = ssub.s32 %s9, 1
      %s183 = ssub.s32 %s19, 1
      %p184 = scmp.gt.s32.totalorder %s183, 0
      %s185 = scalar_select %p184, %s183, 0
      %p186 = scmp.lt.s32.totalorder %s185, 7
      %s187 = scalar_select %p186, %s185, 7
      %p188 = scmp.lt.s32.totalorder %s18, 1
      %s189 = scalar_select %p188, %s18, 1
      %p190 = scmp.lt.s32.totalorder %s187, 7
      %s191 = scalar_select %p190, %s187, 7
      %s192 = smul.addr %s191, 8
      %s193 = smul.addr %s189, 64
      %s194 = sadd.s32 %s192, %s193
      %s195 = smul.addr %s194, 4
      %s196 = scalar_lea.vmem %s0, %s195
      %p197 = pneg %p59
      %p198 = pneg %p56
      %p199 = pneg %p80
      %p200 = pneg %p77
      %p201 = pneg %p101
      %p202 = pneg %p98
      %p203 = pneg %p129
      %p204 = pneg %p126
      %p205 = scmp.lt.s32.totalorder %s18, 1
      %s206 = scalar_select %p205, %s18, 1
      %p207 = scmp.lt.s32.totalorder %s19, 9
      %s208 = scalar_select %p207, %s19, 9
      %s209 = smul.addr %s208, 20
      %s210 = smul.addr %s206, 200
      %s211 = sadd.s32 %s209, %s210
      %s212 = smul.addr %s211, 4
      %s213 = scalar_lea.vmem %s3, %s212
      %s214 = ssub.s32 %s19, 1
      %p215 = scmp.gt.s32.totalorder %s214, 0
      %s216 = scalar_select %p215, %s214, 0
      %p217 = scmp.lt.s32.totalorder %s216, 7
      %s218 = scalar_select %p217, %s216, 7
      %p219 = scmp.lt.s32.totalorder %s18, 1
      %s220 = scalar_select %p219, %s18, 1
      %p221 = scmp.lt.s32.totalorder %s218, 7
      %s222 = scalar_select %p221, %s218, 7
      %s223 = smul.addr %s222, 8
      %s224 = smul.addr %s220, 64
      %s225 = sadd.s32 %s223, %s224
      %s226 = smul.addr %s225, 4
      %s227 = scalar_lea.vmem %s0, %s226
      %s228 = ssub.s32 %s19, 1
      %p229 = scmp.gt.s32.totalorder %s228, 0
      %s230 = scalar_select %p229, %s228, 0
      %p231 = scmp.lt.s32.totalorder %s230, 7
      %s232 = scalar_select %p231, %s230, 7
      %p233 = scmp.lt.s32.totalorder %s18, 1
      %s234 = scalar_select %p233, %s18, 1
      %p235 = scmp.lt.s32.totalorder %s19, 9
      %s236 = scalar_select %p235, %s19, 9
      %s237 = smul.addr %s236, 20
      %s238 = smul.addr %s234, 200
      %s239 = sadd.s32 %s237, %s238
      %s240 = smul.addr %s239, 4
      %s241 = scalar_lea.vmem %s3, %s240
      %243 = vst [vmem:[%s241] sm:$0xf] 0
      %244 = vst [vmem:[%s241 + $0x4] sm:$0xf] 0
      %245 = vst [vmem:[%s241 + $0x8] sm:$0xf] 0
      %246 = vst [vmem:[%s241 + $0xc] sm:$0xf] 0
      %247 = vst [vmem:[%s241 + $0x10] sm:$0xf] 0
      %248 = vst [vmem:[%s241 + $0x14] sm:$0xf] 0
      %249 = vst [vmem:[%s241 + $0x18] sm:$0xf] 0
      %250 = vst [vmem:[%s241 + $0x1c] sm:$0xf] 0
      %251 = vst [vmem:[%s241 + $0x20] sm:$0xf] 0
      %252 = vst [vmem:[%s241 + $0x24] sm:$0xf] 0
      %253 = vst [vmem:[%s241 + $0x28] sm:$0xf] 0
      %254 = vst [vmem:[%s241 + $0x2c] sm:$0xf] 0
      %255 = vst [vmem:[%s241 + $0x30] sm:$0xf] 0
      %256 = vst [vmem:[%s241 + $0x34] sm:$0xf] 0
      %257 = vst [vmem:[%s241 + $0x38] sm:$0xf] 0
      %258 = vst [vmem:[%s241 + $0x3c] sm:$0xf] 0
      %259 = vst [vmem:[%s241 + $0x40] sm:$0xf] 0
      %260 = vst [vmem:[%s241 + $0x44] sm:$0xf] 0
      %261 = vst [vmem:[%s241 + $0x48] sm:$0xf] 0
      %262 = vst [vmem:[%s241 + $0x4c] sm:$0xf] 0
      %p263 = scmp.ge.s32.totalorder %s19, 1
      %p264 = scmp.le.s32.totalorder %s19, 8
      %p265 = pnand %p263, %p264
      %p266 = pneg %p265
      // Predicated region
      $region33: #{basic_block_forward.5} parent=31 // pred_check
        _
      $region34: #{basic_block_forward.5} parent=31 // pred_check_branch
        %268 = sbr.rel (%p265) target = $region36
      $region35: #{basic_block_forward.5} parent=31 // pred_region
        %v269 = vld [vmem:[%s227] sm:$0xf]
        %v270 = vld [vmem:[%s227 + $0x4] sm:$0xf]
        %v271 = vld [vmem:[%s227 + $0x8] sm:$0xf]
        %v272 = vld [vmem:[%s227 + $0xc] sm:$0xf]
        %v273 = vld [vmem:[%s227 + $0x10] sm:$0xf]
        %v274 = vld [vmem:[%s227 + $0x14] sm:$0xf]
        %v275 = vld [vmem:[%s227 + $0x18] sm:$0xf]
        %v276 = vld [vmem:[%s227 + $0x1c] sm:$0xf]
        %v277 = vunpack.c.l.bf16 %v269
        %v278 = vunpack.c.l.bf16 %v270
        %v279 = vunpack.c.l.bf16 %v271
        %v280 = vunpack.c.l.bf16 %v272
        %v281 = vunpack.c.l.bf16 %v273
        %v282 = vunpack.c.l.bf16 %v274
        %v283 = vunpack.c.l.bf16 %v275
        %v284 = vunpack.c.l.bf16 %v276
        %v285 = vld [vmem:[%s1] sm:$0x1]
        %v287 = vlaneseq
        %v288 = vshrl.u32 %v287, 7
        %v289 = vsub.s32 0, %v288
        %v290 = vrot.slane %v285, %v289
        %v292 = vmul.f32 %v277, %v290
        %v293 = vmul.f32 %v278, %v290
        %v294 = vmul.f32 %v279, %v290
        %v295 = vmul.f32 %v280, %v290
        %v296 = vmul.f32 %v281, %v290
        %v297 = vmul.f32 %v282, %v290
        %v298 = vmul.f32 %v283, %v290
        %v299 = vmul.f32 %v284, %v290
        %v300 = vld [vmem:[%s2] sm:$0x1]
        %v302 = vlaneseq
        %v303 = vshrl.u32 %v302, 7
        %v304 = vsub.s32 0, %v303
        %v305 = vrot.slane %v300, %v304
        %v307 = vadd.f32 %v292, %v305
        %v308 = vadd.f32 %v293, %v305
        %v309 = vadd.f32 %v294, %v305
        %v310 = vadd.f32 %v295, %v305
        %v311 = vadd.f32 %v296, %v305
        %v312 = vadd.f32 %v297, %v305
        %v313 = vadd.f32 %v298, %v305
        %v314 = vadd.f32 %v299, %v305
        %v315 = vmax.f32 %v307, 0.0
        %v316 = vmax.f32 %v308, 0.0
        %v317 = vmax.f32 %v309, 0.0
        %v318 = vmax.f32 %v310, 0.0
        %v319 = vmax.f32 %v311, 0.0
        %v320 = vmax.f32 %v312, 0.0
        %v321 = vmax.f32 %v313, 0.0
        %v322 = vmax.f32 %v314, 0.0
        %v323 = vpack.c.bf16 %v315, %v315
        %v324 = vpack.c.bf16 %v316, %v316
        %v325 = vpack.c.bf16 %v317, %v317
        %v326 = vpack.c.bf16 %v318, %v318
        %v327 = vpack.c.bf16 %v319, %v319
        %v328 = vpack.c.bf16 %v320, %v320
        %v329 = vpack.c.bf16 %v321, %v321
        %v330 = vpack.c.bf16 %v322, %v322
        %v339 = vunpack.c.l.b16 %v323
        %v340 = vunpack.c.l.b16 %v324
        %v341 = vunpack.c.l.b16 %v325
        %v342 = vunpack.c.l.b16 %v326
        %v343 = vunpack.c.l.b16 %v327
        %v344 = vunpack.c.l.b16 %v328
        %v345 = vunpack.c.l.b16 %v329
        %v346 = vunpack.c.l.b16 %v330
        %v347 = vpack.c.b16 %v339, %v339
        %v348 = vpack.c.b16 %v340, %v340
        %v349 = vpack.c.b16 %v341, %v341
        %v350 = vpack.c.b16 %v342, %v342
        %v351 = vpack.c.b16 %v343, %v343
        %v352 = vpack.c.b16 %v344, %v344
        %v353 = vpack.c.b16 %v345, %v345
        %v354 = vpack.c.b16 %v346, %v346
        %v356 = vshrl.u32 %v347, 16
        %v358 = vrot.slane %v356, 7
        %v359 = vshll.u32 %v347, 16
        %v361 = vor.u32 %v358, %v359
        %v362 = vrot.slane %v358, 4
        %v364 = vshrl.u32 %v348, 16
        %v366 = vrot.slane %v364, 7
        %v367 = vshll.u32 %v348, 16
        %v369 = vor.u32 %v366, %v367
        %v370 = vrot.slane %v366, 4
        %v372 = vshrl.u32 %v349, 16
        %v374 = vrot.slane %v372, 7
        %v375 = vshll.u32 %v349, 16
        %v377 = vor.u32 %v374, %v375
        %v378 = vrot.slane %v374, 4
        %v380 = vshrl.u32 %v350, 16
        %v382 = vrot.slane %v380, 7
        %v383 = vshll.u32 %v350, 16
        %v385 = vor.u32 %v382, %v383
        %v386 = vrot.slane %v382, 4
        %v388 = vshrl.u32 %v351, 16
        %v390 = vrot.slane %v388, 7
        %v391 = vshll.u32 %v351, 16
        %v393 = vor.u32 %v390, %v391
        %v394 = vrot.slane %v390, 4
        %v396 = vshrl.u32 %v352, 16
        %v398 = vrot.slane %v396, 7
        %v399 = vshll.u32 %v352, 16
        %v401 = vor.u32 %v398, %v399
        %v402 = vrot.slane %v398, 4
        %v404 = vshrl.u32 %v353, 16
        %v406 = vrot.slane %v404, 7
        %v407 = vshll.u32 %v353, 16
        %v409 = vor.u32 %v406, %v407
        %v410 = vrot.slane %v406, 4
        %v412 = vshrl.u32 %v354, 16
        %v414 = vrot.slane %v412, 7
        %v415 = vshll.u32 %v354, 16
        %v417 = vor.u32 %v414, %v415
        %v418 = vrot.slane %v414, 4
        %s435 = scalar_lea.vmem %s241, 8
        %vm436 = vcmask 1043456
        %vm437 = vsmask.f32 7938
        %vm438 = vmand %vm436, %vm437
        %v439 = vld [vmem:[%s435] sm:$0xf]
        %v440 = vsel %vm438, %v361, %v439
        %441 = vst [vmem:[%s435] sm:$0xf] %v440
        %vm442 = vcmask 1040384
        %vm443 = vsmask.f32 256
        %vm444 = vmand %vm442, %vm443
        %v445 = vld [vmem:[%s435 + $0x4] sm:$0x1]
        %v446 = vsel %vm444, %v362, %v445
        %447 = vst [vmem:[%s435 + $0x4] sm:$0x1] %v446
        %v448 = vld [vmem:[%s435 + $0x8] sm:$0xf]
        %v449 = vsel %vm438, %v369, %v448
        %450 = vst [vmem:[%s435 + $0x8] sm:$0xf] %v449
        %v451 = vld [vmem:[%s435 + $0xc] sm:$0x1]
        %v452 = vsel %vm444, %v370, %v451
        %453 = vst [vmem:[%s435 + $0xc] sm:$0x1] %v452
        %v454 = vld [vmem:[%s435 + $0x10] sm:$0xf]
        %v455 = vsel %vm438, %v377, %v454
        %456 = vst [vmem:[%s435 + $0x10] sm:$0xf] %v455
        %v457 = vld [vmem:[%s435 + $0x14] sm:$0x1]
        %v458 = vsel %vm444, %v378, %v457
        %459 = vst [vmem:[%s435 + $0x14] sm:$0x1] %v458
        %v460 = vld [vmem:[%s435 + $0x18] sm:$0xf]
        %v461 = vsel %vm438, %v385, %v460
        %462 = vst [vmem:[%s435 + $0x18] sm:$0xf] %v461
        %v463 = vld [vmem:[%s435 + $0x1c] sm:$0x1]
        %v464 = vsel %vm444, %v386, %v463
        %465 = vst [vmem:[%s435 + $0x1c] sm:$0x1] %v464
        %v466 = vld [vmem:[%s435 + $0x20] sm:$0xf]
        %v467 = vsel %vm438, %v393, %v466
        %468 = vst [vmem:[%s435 + $0x20] sm:$0xf] %v467
        %v469 = vld [vmem:[%s435 + $0x24] sm:$0x1]
        %v470 = vsel %vm444, %v394, %v469
        %471 = vst [vmem:[%s435 + $0x24] sm:$0x1] %v470
        %v472 = vld [vmem:[%s435 + $0x28] sm:$0xf]
        %v473 = vsel %vm438, %v401, %v472
        %474 = vst [vmem:[%s435 + $0x28] sm:$0xf] %v473
        %v475 = vld [vmem:[%s435 + $0x2c] sm:$0x1]
        %v476 = vsel %vm444, %v402, %v475
        %477 = vst [vmem:[%s435 + $0x2c] sm:$0x1] %v476
        %v478 = vld [vmem:[%s435 + $0x30] sm:$0xf]
        %v479 = vsel %vm438, %v409, %v478
        %480 = vst [vmem:[%s435 + $0x30] sm:$0xf] %v479
        %v481 = vld [vmem:[%s435 + $0x34] sm:$0x1]
        %v482 = vsel %vm444, %v410, %v481
        %483 = vst [vmem:[%s435 + $0x34] sm:$0x1] %v482
        %v484 = vld [vmem:[%s435 + $0x38] sm:$0xf]
        %v485 = vsel %vm438, %v417, %v484
        %486 = vst [vmem:[%s435 + $0x38] sm:$0xf] %v485
        %v487 = vld [vmem:[%s435 + $0x3c] sm:$0x1]
        %v488 = vsel %vm444, %v418, %v487
        %489 = vst [vmem:[%s435 + $0x3c] sm:$0x1] %v488
      $region36: #{basic_block_forward.5} parent=31 // pred_fallthru
        _
      %p490 = scmp.lt.s32.totalorder %s18, 1
      %s491 = scalar_select %p490, %s18, 1
      %p492 = scmp.lt.s32.totalorder %s19, 9
      %s493 = scalar_select %p492, %s19, 9
      %s494 = smul.addr %s493, 20
      %s495 = smul.addr %s491, 200
      %s496 = sadd.s32 %s494, %s495
      %s497 = smul.addr %s496, 4
      %s498 = scalar_lea.vmem %s3, %s497
      // Predicated region
      $region37: #{basic_block_forward.5} parent=31 // pred_check
        %p499 = pneg %p126
      $region38: #{basic_block_forward.5} parent=31 // pred_check_branch
        %501 = sbr.rel (%p499) target = $region40
      $region39: #{basic_block_forward.5} parent=31 // pred_region
        _
      $region40: #{basic_block_forward.5} parent=31 // pred_fallthru
        _
    $region32: #{basic_block_forward.5} parent=5 // pred_fallthru
      _
    %p502 = scmp.le.s32.totalorder 2, %s9
    // Predicated region
    $region41: #{basic_block_forward.5} parent=5 // pred_check
      %p503 = pneg %p502
    $region42: #{basic_block_forward.5} parent=5 // pred_check_branch
      %505 = sbr.rel (%p503) target = $region44
    $region43: #{basic_block_forward.5} parent=5 // pred_region
      %s506 = ssub.s32 %s9, 2
      // Predicated region
      $region45: #{basic_block_forward.5} parent=43 // pred_check
        %p507 = pneg %p132
      $region46: #{basic_block_forward.5} parent=43 // pred_check_branch
        %509 = sbr.rel (%p507) target = $region48
      $region47: #{basic_block_forward.5} parent=43 // pred_region
        %p510 = scmp.lt.s32.totalorder %s20, 1
        %s511 = scalar_select %p510, %s20, 1
        %p512 = scmp.lt.s32.totalorder %s21, 9
        %s513 = scalar_select %p512, %s21, 9
        %s514 = smul.addr %s513, 20
        %s515 = smul.addr %s511, 200
        %s516 = sadd.s32 %s514, %s515
        %s517 = smul.addr %s516, 4
        %s518 = scalar_lea.vmem %s3, %s517
      $region48: #{basic_block_forward.5} parent=43 // pred_fallthru
        _
    $region44: #{basic_block_forward.5} parent=5 // pred_fallthru
      _
  $region6: #{basic_block_forward.5} parent=0 // loop_footer
    %s13 = sadd.s32 1, %s9
  $region7: #{basic_block_forward.5} parent=0 // loop_footer_branch
    %8 = sbr.rel target = $region3
  $region8: #{basic_block_forward.5} parent=0 // loop_exit
    _

// kernel: basic_block_forward.4
$region0: #{basic_block_forward.4}
  #allocation0 [shape = 'u32[]', space=smem, size = 0x4, offset = 0x4, fixed_abs, tag = 'smem constant byte address 0x4 - core index']
  #allocation1 [shape = 'u32[144,128]{1,0:T(1,128)}', space=vmem, size = 0x12000, scoped, tag = 'internal scratch']
  %s0 = inlined_call_operand.vmem [shape: bf16[2,10,10,16,128], index: 0, kind: input, shape index: {}, may-alias: {0,1,2}]
  %s1 = inlined_call_operand.vmem [shape: bf16[2,10,10,16,128], index: 1, kind: input, shape index: {}, may-alias: {0,1,2}]
  %s2 = inlined_call_operand.vmem [shape: bf16[2,10,10,16,128], index: 2, kind: input, shape index: {}, may-alias: {0,1,2}]
  %s3 = inlined_call_operand.vmem [shape: bf16[9,384,128], index: 3, kind: input, shape index: {}]
  %s4 = inlined_call_operand.vmem [shape: bf16[2,8,8,8,128], index: 4, kind: output, shape index: {0}]
  %s5 = inlined_call_operand.vmem [shape: f32[2,8,2,128], index: 5, kind: output, shape index: {1}]
  %6 = xla_tuple %s4, %s5
  %s7 = sld [smem:[#allocation0]]
  $region57: #{basic_block_forward.4} parent=0
    _
  %s9 = ssub.s32 1, %s7
  %s10 = scalar_select 0, %s9, %s7
  loop: start=0, step=1, limit=18
  $region2: #{basic_block_forward.4} parent=0 // loop_pre_header
    _
  $region3: #{basic_block_forward.4} parent=0 // loop_header
    %s12 = sphi 0, %s16
    %p13 = scmp.ge.s32.totalorder %s12, 18
    %s19 = sphi 0, %s31
    %s20 = sphi 0, %s27
    %s21 = sphi 0, %s19
    %s22 = sphi 0, %s20
    %s23 = sphi 0, %s21
    %s24 = sphi 0, %s22
    %s36 = sphi 0, %s38
    %s39 = sphi 0, %s36
    %s40 = sphi 0, %s39
    %s56 = sphi 0, %s40
    %s66 = sphi 0, %s68
    %s69 = sphi 0, %s66
    %s70 = sphi 0, %s69
    %s86 = sphi 0, %s70
    %s96 = sphi 0, %s98
    %s99 = sphi 0, %s96
    %s100 = sphi 0, %s99
    %s116 = sphi 0, %s100
    %s120 = sphi 0, %s120
    %s122 = sphi 0, %s120
    %s123 = sphi 0, %s122
    %s137 = sphi 0, %s123
    %s145 = sphi 0, %s147
    %s148 = sphi 0, %s145
    %s149 = sphi 0, %s148
    %s165 = sphi 0, %s149
    %s173 = sphi 0, %s175
    %s176 = sphi 0, %s173
    %s177 = sphi 0, %s176
    %s193 = sphi 0, %s177
  $region4: #{basic_block_forward.4} parent=0 // loop_header_branch
    %15 = sbr.rel (%p13) target = $region8
  $region5: #{basic_block_forward.4} parent=0 // loop_body
    %s17 = ssub.s32 %s12, 1
    %s18 = ssub.s32 %s12, 2
    %s25 = sadd.s32 1, %s20
    %p26 = scmp.ge.s32.totalorder %s25, 8
    %s27 = scalar_select %p26, 0, %s25
    %s28 = sadd.s32 1, %s19
    %s29 = scalar_select %p26, %s28, %s19
    %p30 = scmp.ge.s32.totalorder %s29, 2
    %s31 = scalar_select %p30, 0, %s29
    %s32 = ssub.s32 %s19, %s31
    %s33 = ssub.s32 %s20, %s27
    %s34 = sor.u32 %s32, %s33
    %p35 = scmp.eq.s32.totalorder %s34, 0
    %s37 = sadd.s32 %s36, 1
    %s38 = scalar_select %p35, %s36, %s37
    %p41 = pneg %p35
    %p42 = scmp.eq.s32.totalorder %s12, 15
    %p43 = por %p41, %p42
    %p44 = scmp.ne.s32.totalorder %s36, %s39
    %p45 = scmp.eq.s32.totalorder %s12, 0
    %p46 = por %p44, %p45
    %p47 = scmp.ne.s32.totalorder %s36, %s39
    %p48 = scmp.eq.s32.totalorder %s17, 15
    %p49 = por %p47, %p48
    %p50 = scmp.ne.s32.totalorder %s39, %s40
    %p51 = scmp.eq.s32.totalorder %s17, 0
    %p52 = por %p50, %p51
    %p53 = scmp.ne.s32.totalorder %s39, %s40
    %p54 = scmp.eq.s32.totalorder %s18, 15
    %p55 = por %p53, %p54
    %p57 = scmp.ne.s32.totalorder %s40, %s56
    %p58 = scmp.eq.s32.totalorder %s18, 0
    %p59 = por %p57, %p58
    %s60 = sadd.s32 %s20, 1
    %s61 = sadd.s32 %s27, 1
    %s62 = ssub.s32 %s19, %s31
    %s63 = ssub.s32 %s60, %s61
    %s64 = sor.u32 %s62, %s63
    %p65 = scmp.eq.s32.totalorder %s64, 0
    %s67 = sadd.s32 %s66, 1
    %s68 = scalar_select %p65, %s66, %s67
    %p71 = pneg %p65
    %p72 = scmp.eq.s32.totalorder %s12, 15
    %p73 = por %p71, %p72
    %p74 = scmp.ne.s32.totalorder %s66, %s69
    %p75 = scmp.eq.s32.totalorder %s12, 0
    %p76 = por %p74, %p75
    %p77 = scmp.ne.s32.totalorder %s66, %s69
    %p78 = scmp.eq.s32.totalorder %s17, 15
    %p79 = por %p77, %p78
    %p80 = scmp.ne.s32.totalorder %s69, %s70
    %p81 = scmp.eq.s32.totalorder %s17, 0
    %p82 = por %p80, %p81
    %p83 = scmp.ne.s32.totalorder %s69, %s70
    %p84 = scmp.eq.s32.totalorder %s18, 15
    %p85 = por %p83, %p84
    %p87 = scmp.ne.s32.totalorder %s70, %s86
    %p88 = scmp.eq.s32.totalorder %s18, 0
    %p89 = por %p87, %p88
    %s90 = sadd.s32 %s20, 2
    %s91 = sadd.s32 %s27, 2
    %s92 = ssub.s32 %s19, %s31
    %s93 = ssub.s32 %s90, %s91
    %s94 = sor.u32 %s92, %s93
    %p95 = scmp.eq.s32.totalorder %s94, 0
    %s97 = sadd.s32 %s96, 1
    %s98 = scalar_select %p95, %s96, %s97
    %p101 = pneg %p95
    %p102 = scmp.eq.s32.totalorder %s12, 15
    %p103 = por %p101, %p102
    %p104 = scmp.ne.s32.totalorder %s96, %s99
    %p105 = scmp.eq.s32.totalorder %s12, 0
    %p106 = por %p104, %p105
    %p107 = scmp.ne.s32.totalorder %s96, %s99
    %p108 = scmp.eq.s32.totalorder %s17, 15
    %p109 = por %p107, %p108
    %p110 = scmp.ne.s32.totalorder %s99, %s100
    %p111 = scmp.eq.s32.totalorder %s17, 0
    %p112 = por %p110, %p111
    %p113 = scmp.ne.s32.totalorder %s99, %s100
    %p114 = scmp.eq.s32.totalorder %s18, 15
    %p115 = por %p113, %p114
    %p117 = scmp.ne.s32.totalorder %s100, %s116
    %p118 = scmp.eq.s32.totalorder %s18, 0
    %p119 = por %p117, %p118
    %s121 = sadd.s32 %s120, 1
    %p124 = scmp.eq.s32.totalorder %s12, 15
    %p125 = scmp.ne.s32.totalorder %s120, %s122
    %p126 = scmp.eq.s32.totalorder %s12, 0
    %p127 = por %p125, %p126
    %p128 = scmp.ne.s32.totalorder %s120, %s122
    %p129 = scmp.eq.s32.totalorder %s17, 15
    %p130 = por %p128, %p129
    %p131 = scmp.ne.s32.totalorder %s122, %s123
    %p132 = scmp.eq.s32.totalorder %s17, 0
    %p133 = por %p131, %p132
    %p134 = scmp.ne.s32.totalorder %s122, %s123
    %p135 = scmp.eq.s32.totalorder %s18, 15
    %p136 = por %p134, %p135
    %p138 = scmp.ne.s32.totalorder %s123, %s137
    %p139 = scmp.eq.s32.totalorder %s18, 0
    %p140 = por %p138, %p139
    %s141 = ssub.s32 %s19, %s31
    %s142 = ssub.s32 %s20, %s27
    %s143 = sor.u32 %s141, %s142
    %p144 = scmp.eq.s32.totalorder %s143, 0
    %s146 = sadd.s32 %s145, 1
    %s147 = scalar_select %p144, %s145, %s146
    %p150 = pneg %p144
    %p151 = scmp.eq.s32.totalorder %s12, 15
    %p152 = por %p150, %p151
    %p153 = scmp.ne.s32.totalorder %s145, %s148
    %p154 = scmp.eq.s32.totalorder %s12, 0
    %p155 = por %p153, %p154
    %p156 = scmp.ne.s32.totalorder %s145, %s148
    %p157 = scmp.eq.s32.totalorder %s17, 15
    %p158 = por %p156, %p157
    %p159 = scmp.ne.s32.totalorder %s148, %s149
    %p160 = scmp.eq.s32.totalorder %s17, 0
    %p161 = por %p159, %p160
    %p162 = scmp.ne.s32.totalorder %s148, %s149
    %p163 = scmp.eq.s32.totalorder %s18, 15
    %p164 = por %p162, %p163
    %p166 = scmp.ne.s32.totalorder %s149, %s165
    %p167 = scmp.eq.s32.totalorder %s18, 0
    %p168 = por %p166, %p167
    %s169 = ssub.s32 %s19, %s31
    %s170 = ssub.s32 %s20, %s27
    %s171 = sor.u32 %s169, %s170
    %p172 = scmp.eq.s32.totalorder %s171, 0
    %s174 = sadd.s32 %s173, 1
    %s175 = scalar_select %p172, %s173, %s174
    %p178 = pneg %p172
    %p179 = scmp.eq.s32.totalorder %s12, 15
    %p180 = por %p178, %p179
    %p181 = scmp.ne.s32.totalorder %s173, %s176
    %p182 = scmp.eq.s32.totalorder %s12, 0
    %p183 = por %p181, %p182
    %p184 = scmp.ne.s32.totalorder %s173, %s176
    %p185 = scmp.eq.s32.totalorder %s17, 15
    %p186 = por %p184, %p185
    %p187 = scmp.ne.s32.totalorder %s176, %s177
    %p188 = scmp.eq.s32.totalorder %s17, 0
    %p189 = por %p187, %p188
    %p190 = scmp.ne.s32.totalorder %s176, %s177
    %p191 = scmp.eq.s32.totalorder %s18, 15
    %p192 = por %p190, %p191
    %p194 = scmp.ne.s32.totalorder %s177, %s193
    %p195 = scmp.eq.s32.totalorder %s18, 0
    %p196 = por %p194, %p195
    %p197 = scmp.le.s32.totalorder 1, %s12
    %p198 = scmp.lt.s32.totalorder %s12, 17
    %p199 = pnand %p197, %p198
    %p200 = pneg %p199
    // Predicated region
    $region9: #{basic_block_forward.4} parent=5 // pred_check
      _
    $region10: #{basic_block_forward.4} parent=5 // pred_check_branch
      %202 = sbr.rel (%p199) target = $region12
    $region11: #{basic_block_forward.4} parent=5 // pred_region
      %s203 = ssub.s32 %s12, 1
      // Predicated region
      $region13: #{basic_block_forward.4} parent=11 // pred_check
        %p204 = pneg %p133
      $region14: #{basic_block_forward.4} parent=11 // pred_check_branch
        %206 = sbr.rel (%p204) target = $region16
      $region15: #{basic_block_forward.4} parent=11 // pred_region
        _
      $region16: #{basic_block_forward.4} parent=11 // pred_fallthru
        _
    $region12: #{basic_block_forward.4} parent=5 // pred_fallthru
      _
    %p207 = scmp.lt.s32.totalorder %s12, 16
    // Predicated region
    $region17: #{basic_block_forward.4} parent=5 // pred_check
      %p208 = pneg %p207
    $region18: #{basic_block_forward.4} parent=5 // pred_check_branch
      %210 = sbr.rel (%p208) target = $region20
    $region19: #{basic_block_forward.4} parent=5 // pred_region
      // Predicated region
      $region21: #{basic_block_forward.4} parent=19 // pred_check
        %p211 = pneg %p46
      $region22: #{basic_block_forward.4} parent=19 // pred_check_branch
        %213 = sbr.rel (%p211) target = $region24
      $region23: #{basic_block_forward.4} parent=19 // pred_region
        %p214 = scmp.lt.s32.totalorder %s19, 1
        %s215 = scalar_select %p214, %s19, 1
        %p216 = scmp.lt.s32.totalorder %s20, 9
        %s217 = scalar_select %p216, %s20, 9
        %s218 = smul.addr %s217, 20
        %s219 = smul.addr %s215, 200
        %s220 = sadd.s32 %s218, %s219
        %s221 = smul.addr %s220, 4
        %s222 = scalar_lea.vmem %s0, %s221
      $region24: #{basic_block_forward.4} parent=19 // pred_fallthru
        _
      // Predicated region
      $region25: #{basic_block_forward.4} parent=19 // pred_check
        %p223 = pneg %p76
      $region26: #{basic_block_forward.4} parent=19 // pred_check_branch
        %225 = sbr.rel (%p223) target = $region28
      $region27: #{basic_block_forward.4} parent=19 // pred_region
        %s226 = sadd.s32 %s20, 1
        %p227 = scmp.lt.s32.totalorder %s19, 1
        %s228 = scalar_select %p227, %s19, 1
        %p229 = scmp.lt.s32.totalorder %s226, 9
        %s230 = scalar_select %p229, %s226, 9
        %s231 = smul.addr %s230, 20
        %s232 = smul.addr %s228, 200
        %s233 = sadd.s32 %s231, %s232
        %s234 = smul.addr %s233, 4
        %s235 = scalar_lea.vmem %s1, %s234
        %s236 = sadd.s32 %s20, 1
      $region28: #{basic_block_forward.4} parent=19 // pred_fallthru
        _
      // Predicated region
      $region29: #{basic_block_forward.4} parent=19 // pred_check
        %p237 = pneg %p106
      $region30: #{basic_block_forward.4} parent=19 // pred_check_branch
        %239 = sbr.rel (%p237) target = $region32
      $region31: #{basic_block_forward.4} parent=19 // pred_region
        %s240 = sadd.s32 %s20, 2
        %p241 = scmp.lt.s32.totalorder %s19, 1
        %s242 = scalar_select %p241, %s19, 1
        %p243 = scmp.lt.s32.totalorder %s240, 9
        %s244 = scalar_select %p243, %s240, 9
        %s245 = smul.addr %s244, 20
        %s246 = smul.addr %s242, 200
        %s247 = sadd.s32 %s245, %s246
        %s248 = smul.addr %s247, 4
        %s249 = scalar_lea.vmem %s2, %s248
        %s250 = sadd.s32 %s20, 2
      $region32: #{basic_block_forward.4} parent=19 // pred_fallthru
        _
    $region20: #{basic_block_forward.4} parent=5 // pred_fallthru
      _
    %p251 = scmp.le.s32.totalorder 1, %s12
    %p252 = scmp.lt.s32.totalorder %s12, 17
    %p253 = pnand %p251, %p252
    %p254 = pneg %p253
    // Predicated region
    $region33: #{basic_block_forward.4} parent=5 // pred_check
      _
    $region34: #{basic_block_forward.4} parent=5 // pred_check_branch
      %256 = sbr.rel (%p253) target = $region36
    $region35: #{basic_block_forward.4} parent=5 // pred_region
      %s257 = ssub.s32 %s12, 1
      %p258 = scmp.lt.s32.totalorder %s21, 1
      %s259 = scalar_select %p258, %s21, 1
      %p260 = scmp.lt.s32.totalorder %s22, 9
      %s261 = scalar_select %p260, %s22, 9
      %s262 = smul.addr %s261, 20
      %s263 = smul.addr %s259, 200
      %s264 = sadd.s32 %s262, %s263
      %s265 = smul.addr %s264, 4
      %s266 = scalar_lea.vmem %s0, %s265
      %p267 = pneg %p52
      %p268 = pneg %p49
      %s269 = sadd.s32 %s22, 1
      %p270 = scmp.lt.s32.totalorder %s21, 1
      %s271 = scalar_select %p270, %s21, 1
      %p272 = scmp.lt.s32.totalorder %s269, 9
      %s273 = scalar_select %p272, %s269, 9
      %s274 = smul.addr %s273, 20
      %s275 = smul.addr %s271, 200
      %s276 = sadd.s32 %s274, %s275
      %s277 = smul.addr %s276, 4
      %s278 = scalar_lea.vmem %s1, %s277
      %p279 = pneg %p82
      %p280 = pneg %p79
      %s281 = sadd.s32 %s22, 2
      %p282 = scmp.lt.s32.totalorder %s21, 1
      %s283 = scalar_select %p282, %s21, 1
      %p284 = scmp.lt.s32.totalorder %s281, 9
      %s285 = scalar_select %p284, %s281, 9
      %s286 = smul.addr %s285, 20
      %s287 = smul.addr %s283, 200
      %s288 = sadd.s32 %s286, %s287
      %s289 = smul.addr %s288, 4
      %s290 = scalar_lea.vmem %s2, %s289
      %p291 = pneg %p112
      %p292 = pneg %p109
      %p293 = pneg %p133
      %p294 = pneg %p130
      %p295 = pneg %p161
      %p296 = pneg %p158
      %p297 = scmp.lt.s32.totalorder %s21, 1
      %s298 = scalar_select %p297, %s21, 1
      %p299 = scmp.lt.s32.totalorder %s22, 7
      %s300 = scalar_select %p299, %s22, 7
      %s301 = smul.addr %s300, 8
      %s302 = smul.addr %s298, 64
      %s303 = sadd.s32 %s301, %s302
      %s304 = smul.addr %s303, 4
      %s305 = scalar_lea.vmem %s4, %s304
      %p306 = pneg %p189
      %p307 = pneg %p186
      %p308 = scmp.lt.s32.totalorder %s21, 1
      %s309 = scalar_select %p308, %s21, 1
      %p310 = scmp.lt.s32.totalorder %s22, 7
      %s311 = scalar_select %p310, %s22, 7
      %s312 = smul.addr %s309, 8
      %s313 = sadd.s32 %s311, %s312
      %s314 = smul.addr %s313, 2
      %s315 = scalar_lea.vmem %s5, %s314
      %p316 = scmp.lt.s32.totalorder %s21, 1
      %s317 = scalar_select %p316, %s21, 1
      %p318 = scmp.lt.s32.totalorder %s22, 9
      %s319 = scalar_select %p318, %s22, 9
      %s320 = smul.addr %s319, 20
      %s321 = smul.addr %s317, 200
      %s322 = sadd.s32 %s320, %s321
      %s323 = smul.addr %s322, 4
      %s324 = scalar_lea.vmem %s0, %s323
      %s325 = sadd.s32 %s22, 1
      %p326 = scmp.lt.s32.totalorder %s21, 1
      %s327 = scalar_select %p326, %s21, 1
      %p328 = scmp.lt.s32.totalorder %s325, 9
      %s329 = scalar_select %p328, %s325, 9
      %s330 = smul.addr %s329, 20
      %s331 = smul.addr %s327, 200
      %s332 = sadd.s32 %s330, %s331
      %s333 = smul.addr %s332, 4
      %s334 = scalar_lea.vmem %s1, %s333
      %s335 = sadd.s32 %s22, 1
      %s336 = sadd.s32 %s22, 2
      %p337 = scmp.lt.s32.totalorder %s21, 1
      %s338 = scalar_select %p337, %s21, 1
      %p339 = scmp.lt.s32.totalorder %s336, 9
      %s340 = scalar_select %p339, %s336, 9
      %s341 = smul.addr %s340, 20
      %s342 = smul.addr %s338, 200
      %s343 = sadd.s32 %s341, %s342
      %s344 = smul.addr %s343, 4
      %s345 = scalar_lea.vmem %s2, %s344
      %s346 = sadd.s32 %s22, 2
      %p347 = scmp.lt.s32.totalorder %s21, 1
      %s348 = scalar_select %p347, %s21, 1
      %p349 = scmp.lt.s32.totalorder %s22, 7
      %s350 = scalar_select %p349, %s22, 7
      %s351 = smul.addr %s350, 8
      %s352 = smul.addr %s348, 64
      %s353 = sadd.s32 %s351, %s352
      %s354 = smul.addr %s353, 4
      %s355 = scalar_lea.vmem %s4, %s354
      %p356 = scmp.lt.s32.totalorder %s21, 1
      %s357 = scalar_select %p356, %s21, 1
      %p358 = scmp.lt.s32.totalorder %s22, 7
      %s359 = scalar_select %p358, %s22, 7
      %s360 = smul.addr %s357, 8
      %s361 = sadd.s32 %s359, %s360
      %s362 = smul.addr %s361, 2
      %s363 = scalar_lea.vmem %s5, %s362
      %v365 = vld [vmem:[%s324] sm:$0xf]
      %v366 = vld [vmem:[%s324 + $0x4] sm:$0xf]
      %v367 = vld [vmem:[%s324 + $0x8] sm:$0xf]
      %v368 = vld [vmem:[%s324 + $0xc] sm:$0xf]
      %v369 = vld [vmem:[%s324 + $0x10] sm:$0xf]
      %v370 = vld [vmem:[%s324 + $0x14] sm:$0xf]
      %v371 = vld [vmem:[%s324 + $0x18] sm:$0xf]
      %v372 = vld [vmem:[%s324 + $0x1c] sm:$0xf]
      %v373 = vld [vmem:[%s324 + $0x20] sm:$0xf]
      %v374 = vld [vmem:[%s324 + $0x24] sm:$0xf]
      %v375 = vld [vmem:[%s324 + $0x28] sm:$0xf]
      %v376 = vld [vmem:[%s324 + $0x2c] sm:$0xf]
      %v377 = vld [vmem:[%s324 + $0x30] sm:$0xf]
      %v378 = vld [vmem:[%s324 + $0x34] sm:$0xf]
      %v379 = vld [vmem:[%s324 + $0x38] sm:$0xf]
      %v380 = vld [vmem:[%s324 + $0x3c] sm:$0xf]
      %v381 = vld [vmem:[%s334] sm:$0xf]
      %v382 = vld [vmem:[%s334 + $0x4] sm:$0xf]
      %v383 = vld [vmem:[%s334 + $0x8] sm:$0xf]
      %v384 = vld [vmem:[%s334 + $0xc] sm:$0xf]
      %v385 = vld [vmem:[%s334 + $0x10] sm:$0xf]
      %v386 = vld [vmem:[%s334 + $0x14] sm:$0xf]
      %v387 = vld [vmem:[%s334 + $0x18] sm:$0xf]
      %v388 = vld [vmem:[%s334 + $0x1c] sm:$0xf]
      %v389 = vld [vmem:[%s334 + $0x20] sm:$0xf]
      %v390 = vld [vmem:[%s334 + $0x24] sm:$0xf]
      %v391 = vld [vmem:[%s334 + $0x28] sm:$0xf]
      %v392 = vld [vmem:[%s334 + $0x2c] sm:$0xf]
      %v393 = vld [vmem:[%s334 + $0x30] sm:$0xf]
      %v394 = vld [vmem:[%s334 + $0x34] sm:$0xf]
      %v395 = vld [vmem:[%s334 + $0x38] sm:$0xf]
      %v396 = vld [vmem:[%s334 + $0x3c] sm:$0xf]
      %v397 = vld [vmem:[%s345] sm:$0xf]
      %v398 = vld [vmem:[%s345 + $0x4] sm:$0xf]
      %v399 = vld [vmem:[%s345 + $0x8] sm:$0xf]
      %v400 = vld [vmem:[%s345 + $0xc] sm:$0xf]
      %v401 = vld [vmem:[%s345 + $0x10] sm:$0xf]
      %v402 = vld [vmem:[%s345 + $0x14] sm:$0xf]
      %v403 = vld [vmem:[%s345 + $0x18] sm:$0xf]
      %v404 = vld [vmem:[%s345 + $0x1c] sm:$0xf]
      %v405 = vld [vmem:[%s345 + $0x20] sm:$0xf]
      %v406 = vld [vmem:[%s345 + $0x24] sm:$0xf]
      %v407 = vld [vmem:[%s345 + $0x28] sm:$0xf]
      %v408 = vld [vmem:[%s345 + $0x2c] sm:$0xf]
      %v409 = vld [vmem:[%s345 + $0x30] sm:$0xf]
      %v410 = vld [vmem:[%s345 + $0x34] sm:$0xf]
      %v411 = vld [vmem:[%s345 + $0x38] sm:$0xf]
      %v412 = vld [vmem:[%s345 + $0x3c] sm:$0xf]
      %v429 = vunpack.c.l.b16 %v365
      %v430 = vunpack.c.l.b16 %v366
      %v431 = vunpack.c.l.b16 %v367
      %v432 = vunpack.c.l.b16 %v368
      %v433 = vunpack.c.l.b16 %v369
      %v434 = vunpack.c.l.b16 %v370
      %v435 = vunpack.c.l.b16 %v371
      %v436 = vunpack.c.l.b16 %v372
      %v437 = vunpack.c.l.b16 %v373
      %v438 = vunpack.c.l.b16 %v374
      %v439 = vunpack.c.l.b16 %v375
      %v440 = vunpack.c.l.b16 %v376
      %v441 = vunpack.c.l.b16 %v377
      %v442 = vunpack.c.l.b16 %v378
      %v443 = vunpack.c.l.b16 %v379
      %v444 = vunpack.c.l.b16 %v380
      %v445 = vpack.c.b16 %v430, %v429
      %v446 = vpack.c.b16 %v432, %v431
      %v447 = vpack.c.b16 %v434, %v433
      %v448 = vpack.c.b16 %v436, %v435
      %v449 = vpack.c.b16 %v438, %v437
      %v450 = vpack.c.b16 %v440, %v439
      %v451 = vpack.c.b16 %v442, %v441
      %v452 = vpack.c.b16 %v444, %v443
      %v477 = vunpack.c.l.b16 %v381
      %v478 = vunpack.c.l.b16 %v382
      %v479 = vunpack.c.l.b16 %v383
      %v480 = vunpack.c.l.b16 %v384
      %v481 = vunpack.c.l.b16 %v385
      %v482 = vunpack.c.l.b16 %v386
      %v483 = vunpack.c.l.b16 %v387
      %v484 = vunpack.c.l.b16 %v388
      %v485 = vunpack.c.l.b16 %v389
      %v486 = vunpack.c.l.b16 %v390
      %v487 = vunpack.c.l.b16 %v391
      %v488 = vunpack.c.l.b16 %v392
      %v489 = vunpack.c.l.b16 %v393
      %v490 = vunpack.c.l.b16 %v394
      %v491 = vunpack.c.l.b16 %v395
      %v492 = vunpack.c.l.b16 %v396
      %v493 = vpack.c.b16 %v478, %v477
      %v494 = vpack.c.b16 %v480, %v479
      %v495 = vpack.c.b16 %v482, %v481
      %v496 = vpack.c.b16 %v484, %v483
      %v497 = vpack.c.b16 %v486, %v485
      %v498 = vpack.c.b16 %v488, %v487
      %v499 = vpack.c.b16 %v490, %v489
      %v500 = vpack.c.b16 %v492, %v491
      %v525 = vunpack.c.l.b16 %v397
      %v526 = vunpack.c.l.b16 %v398
      %v527 = vunpack.c.l.b16 %v399
      %v528 = vunpack.c.l.b16 %v400
      %v529 = vunpack.c.l.b16 %v401
      %v530 = vunpack.c.l.b16 %v402
      %v531 = vunpack.c.l.b16 %v403
      %v532 = vunpack.c.l.b16 %v404
      %v533 = vunpack.c.l.b16 %v405
      %v534 = vunpack.c.l.b16 %v406
      %v535 = vunpack.c.l.b16 %v407
      %v536 = vunpack.c.l.b16 %v408
      %v537 = vunpack.c.l.b16 %v409
      %v538 = vunpack.c.l.b16 %v410
      %v539 = vunpack.c.l.b16 %v411
      %v540 = vunpack.c.l.b16 %v412
      %v541 = vpack.c.b16 %v526, %v525
      %v542 = vpack.c.b16 %v528, %v527
      %v543 = vpack.c.b16 %v530, %v529
      %v544 = vpack.c.b16 %v532, %v531
      %v545 = vpack.c.b16 %v534, %v533
      %v546 = vpack.c.b16 %v536, %v535
      %v547 = vpack.c.b16 %v538, %v537
      %v548 = vpack.c.b16 %v540, %v539
      %v557 = vld [vmem:[%s3] sm:$0xf]
      %v558 = vld [vmem:[%s3 + $0x4] sm:$0xf]
      %v559 = vld [vmem:[%s3 + $0x8] sm:$0xf]
      %v560 = vld [vmem:[%s3 + $0xc] sm:$0xf]
      %v561 = vld [vmem:[%s3 + $0x10] sm:$0xf]
      %v562 = vld [vmem:[%s3 + $0x14] sm:$0xf]
      %v563 = vld [vmem:[%s3 + $0x18] sm:$0xf]
      %v564 = vld [vmem:[%s3 + $0x1c] sm:$0xf]
      %v565 = vld [vmem:[%s3 + $0x20] sm:$0xf]
      %v566 = vld [vmem:[%s3 + $0x24] sm:$0xf]
      %v567 = vld [vmem:[%s3 + $0x28] sm:$0xf]
      %v568 = vld [vmem:[%s3 + $0x2c] sm:$0xf]
      %v569 = vld [vmem:[%s3 + $0x30] sm:$0xf]
      %v570 = vld [vmem:[%s3 + $0x34] sm:$0xf]
      %v571 = vld [vmem:[%s3 + $0x38] sm:$0xf]
      %v572 = vld [vmem:[%s3 + $0x3c] sm:$0xf]
      %v573 = vld [vmem:[%s3 + $0x40] sm:$0xf]
      %v574 = vld [vmem:[%s3 + $0x44] sm:$0xf]
      %v575 = vld [vmem:[%s3 + $0x48] sm:$0xf]
      %v576 = vld [vmem:[%s3 + $0x4c] sm:$0xf]
      %v577 = vld [vmem:[%s3 + $0x50] sm:$0xf]
      %v578 = vld [vmem:[%s3 + $0x54] sm:$0xf]
      %v579 = vld [vmem:[%s3 + $0x58] sm:$0xf]
      %v580 = vld [vmem:[%s3 + $0x5c] sm:$0xf]
      %v581 = vld [vmem:[%s3 + $0x60] sm:$0xf]
      %v582 = vld [vmem:[%s3 + $0x64] sm:$0xf]
      %v583 = vld [vmem:[%s3 + $0x68] sm:$0xf]
      %v584 = vld [vmem:[%s3 + $0x6c] sm:$0xf]
      %v585 = vld [vmem:[%s3 + $0x70] sm:$0xf]
      %v586 = vld [vmem:[%s3 + $0x74] sm:$0xf]
      %v587 = vld [vmem:[%s3 + $0x78] sm:$0xf]
      %v588 = vld [vmem:[%s3 + $0x7c] sm:$0xf]
      %v589 = vld [vmem:[%s3 + $0x80] sm:$0xf]
      %v590 = vld [vmem:[%s3 + $0x84] sm:$0xf]
      %v591 = vld [vmem:[%s3 + $0x88] sm:$0xf]
      %v592 = vld [vmem:[%s3 + $0x8c] sm:$0xf]
      %v593 = vld [vmem:[%s3 + $0x90] sm:$0xf]
      %v594 = vld [vmem:[%s3 + $0x94] sm:$0xf]
      %v595 = vld [vmem:[%s3 + $0x98] sm:$0xf]
      %v596 = vld [vmem:[%s3 + $0x9c] sm:$0xf]
      %v597 = vld [vmem:[%s3 + $0xa0] sm:$0xf]
      %v598 = vld [vmem:[%s3 + $0xa4] sm:$0xf]
      %v599 = vld [vmem:[%s3 + $0xa8] sm:$0xf]
      %v600 = vld [vmem:[%s3 + $0xac] sm:$0xf]
      %v601 = vld [vmem:[%s3 + $0xb0] sm:$0xf]
      %v602 = vld [vmem:[%s3 + $0xb4] sm:$0xf]
      %v603 = vld [vmem:[%s3 + $0xb8] sm:$0xf]
      %v604 = vld [vmem:[%s3 + $0xbc] sm:$0xf]
      %s605 = scalar_lea.vmem %s3, 192
      %v606 = vld [vmem:[%s605] sm:$0xf]
      %v607 = vld [vmem:[%s605 + $0x4] sm:$0xf]
      %v608 = vld [vmem:[%s605 + $0x8] sm:$0xf]
      %v609 = vld [vmem:[%s605 + $0xc] sm:$0xf]
      %v610 = vld [vmem:[%s605 + $0x10] sm:$0xf]
      %v611 = vld [vmem:[%s605 + $0x14] sm:$0xf]
      %v612 = vld [vmem:[%s605 + $0x18] sm:$0xf]
      %v613 = vld [vmem:[%s605 + $0x1c] sm:$0xf]
      %v614 = vld [vmem:[%s605 + $0x20] sm:$0xf]
      %v615 = vld [vmem:[%s605 + $0x24] sm:$0xf]
      %v616 = vld [vmem:[%s605 + $0x28] sm:$0xf]
      %v617 = vld [vmem:[%s605 + $0x2c] sm:$0xf]
      %v618 = vld [vmem:[%s605 + $0x30] sm:$0xf]
      %v619 = vld [vmem:[%s605 + $0x34] sm:$0xf]
      %v620 = vld [vmem:[%s605 + $0x38] sm:$0xf]
      %v621 = vld [vmem:[%s605 + $0x3c] sm:$0xf]
      %v622 = vld [vmem:[%s605 + $0x40] sm:$0xf]
      %v623 = vld [vmem:[%s605 + $0x44] sm:$0xf]
      %v624 = vld [vmem:[%s605 + $0x48] sm:$0xf]
      %v625 = vld [vmem:[%s605 + $0x4c] sm:$0xf]
      %v626 = vld [vmem:[%s605 + $0x50] sm:$0xf]
      %v627 = vld [vmem:[%s605 + $0x54] sm:$0xf]
      %v628 = vld [vmem:[%s605 + $0x58] sm:$0xf]
      %v629 = vld [vmem:[%s605 + $0x5c] sm:$0xf]
      %v630 = vld [vmem:[%s605 + $0x60] sm:$0xf]
      %v631 = vld [vmem:[%s605 + $0x64] sm:$0xf]
      %v632 = vld [vmem:[%s605 + $0x68] sm:$0xf]
      %v633 = vld [vmem:[%s605 + $0x6c] sm:$0xf]
      %v634 = vld [vmem:[%s605 + $0x70] sm:$0xf]
      %v635 = vld [vmem:[%s605 + $0x74] sm:$0xf]
      %v636 = vld [vmem:[%s605 + $0x78] sm:$0xf]
      %v637 = vld [vmem:[%s605 + $0x7c] sm:$0xf]
      %v638 = vld [vmem:[%s605 + $0x80] sm:$0xf]
      %v639 = vld [vmem:[%s605 + $0x84] sm:$0xf]
      %v640 = vld [vmem:[%s605 + $0x88] sm:$0xf]
      %v641 = vld [vmem:[%s605 + $0x8c] sm:$0xf]
      %v642 = vld [vmem:[%s605 + $0x90] sm:$0xf]
      %v643 = vld [vmem:[%s605 + $0x94] sm:$0xf]
      %v644 = vld [vmem:[%s605 + $0x98] sm:$0xf]
      %v645 = vld [vmem:[%s605 + $0x9c] sm:$0xf]
      %v646 = vld [vmem:[%s605 + $0xa0] sm:$0xf]
      %v647 = vld [vmem:[%s605 + $0xa4] sm:$0xf]
      %v648 = vld [vmem:[%s605 + $0xa8] sm:$0xf]
      %v649 = vld [vmem:[%s605 + $0xac] sm:$0xf]
      %v650 = vld [vmem:[%s605 + $0xb0] sm:$0xf]
      %v651 = vld [vmem:[%s605 + $0xb4] sm:$0xf]
      %v652 = vld [vmem:[%s605 + $0xb8] sm:$0xf]
      %v653 = vld [vmem:[%s605 + $0xbc] sm:$0xf]
      %s654 = scalar_lea.vmem %s3, 384
      %v655 = vld [vmem:[%s654] sm:$0xf]
      %v656 = vld [vmem:[%s654 + $0x4] sm:$0xf]
      %v657 = vld [vmem:[%s654 + $0x8] sm:$0xf]
      %v658 = vld [vmem:[%s654 + $0xc] sm:$0xf]
      %v659 = vld [vmem:[%s654 + $0x10] sm:$0xf]
      %v660 = vld [vmem:[%s654 + $0x14] sm:$0xf]
      %v661 = vld [vmem:[%s654 + $0x18] sm:$0xf]
      %v662 = vld [vmem:[%s654 + $0x1c] sm:$0xf]
      %v663 = vld [vmem:[%s654 + $0x20] sm:$0xf]
      %v664 = vld [vmem:[%s654 + $0x24] sm:$0xf]
      %v665 = vld [vmem:[%s654 + $0x28] sm:$0xf]
      %v666 = vld [vmem:[%s654 + $0x2c] sm:$0xf]
      %v667 = vld [vmem:[%s654 + $0x30] sm:$0xf]
      %v668 = vld [vmem:[%s654 + $0x34] sm:$0xf]
      %v669 = vld [vmem:[%s654 + $0x38] sm:$0xf]
      %v670 = vld [vmem:[%s654 + $0x3c] sm:$0xf]
      %v671 = vld [vmem:[%s654 + $0x40] sm:$0xf]
      %v672 = vld [vmem:[%s654 + $0x44] sm:$0xf]
      %v673 = vld [vmem:[%s654 + $0x48] sm:$0xf]
      %v674 = vld [vmem:[%s654 + $0x4c] sm:$0xf]
      %v675 = vld [vmem:[%s654 + $0x50] sm:$0xf]
      %v676 = vld [vmem:[%s654 + $0x54] sm:$0xf]
      %v677 = vld [vmem:[%s654 + $0x58] sm:$0xf]
      %v678 = vld [vmem:[%s654 + $0x5c] sm:$0xf]
      %v679 = vld [vmem:[%s654 + $0x60] sm:$0xf]
      %v680 = vld [vmem:[%s654 + $0x64] sm:$0xf]
      %v681 = vld [vmem:[%s654 + $0x68] sm:$0xf]
      %v682 = vld [vmem:[%s654 + $0x6c] sm:$0xf]
      %v683 = vld [vmem:[%s654 + $0x70] sm:$0xf]
      %v684 = vld [vmem:[%s654 + $0x74] sm:$0xf]
      %v685 = vld [vmem:[%s654 + $0x78] sm:$0xf]
      %v686 = vld [vmem:[%s654 + $0x7c] sm:$0xf]
      %v687 = vld [vmem:[%s654 + $0x80] sm:$0xf]
      %v688 = vld [vmem:[%s654 + $0x84] sm:$0xf]
      %v689 = vld [vmem:[%s654 + $0x88] sm:$0xf]
      %v690 = vld [vmem:[%s654 + $0x8c] sm:$0xf]
      %v691 = vld [vmem:[%s654 + $0x90] sm:$0xf]
      %v692 = vld [vmem:[%s654 + $0x94] sm:$0xf]
      %v693 = vld [vmem:[%s654 + $0x98] sm:$0xf]
      %v694 = vld [vmem:[%s654 + $0x9c] sm:$0xf]
      %v695 = vld [vmem:[%s654 + $0xa0] sm:$0xf]
      %v696 = vld [vmem:[%s654 + $0xa4] sm:$0xf]
      %v697 = vld [vmem:[%s654 + $0xa8] sm:$0xf]
      %v698 = vld [vmem:[%s654 + $0xac] sm:$0xf]
      %v699 = vld [vmem:[%s654 + $0xb0] sm:$0xf]
      %v700 = vld [vmem:[%s654 + $0xb4] sm:$0xf]
      %v701 = vld [vmem:[%s654 + $0xb8] sm:$0xf]
      %v702 = vld [vmem:[%s654 + $0xbc] sm:$0xf]
      %s703 = scalar_lea.vmem %s324, 8
      %v704 = vld [vmem:[%s703] sm:$0xf]
      %v705 = vld [vmem:[%s703 + $0x4] sm:$0xf]
      %v706 = vld [vmem:[%s703 + $0x8] sm:$0xf]
      %v707 = vld [vmem:[%s703 + $0xc] sm:$0xf]
      %v708 = vld [vmem:[%s703 + $0x10] sm:$0xf]
      %v709 = vld [vmem:[%s703 + $0x14] sm:$0xf]
      %v710 = vld [vmem:[%s703 + $0x18] sm:$0xf]
      %v711 = vld [vmem:[%s703 + $0x1c] sm:$0xf]
      %v712 = vld [vmem:[%s703 + $0x20] sm:$0xf]
      %v713 = vld [vmem:[%s703 + $0x24] sm:$0xf]
      %v714 = vld [vmem:[%s703 + $0x28] sm:$0xf]
      %v715 = vld [vmem:[%s703 + $0x2c] sm:$0xf]
      %v716 = vld [vmem:[%s703 + $0x30] sm:$0xf]
      %v717 = vld [vmem:[%s703 + $0x34] sm:$0xf]
      %v718 = vld [vmem:[%s703 + $0x38] sm:$0xf]
      %v719 = vld [vmem:[%s703 + $0x3c] sm:$0xf]
      %s720 = scalar_lea.vmem %s334, 8
      %v721 = vld [vmem:[%s720] sm:$0xf]
      %v722 = vld [vmem:[%s720 + $0x4] sm:$0xf]
      %v723 = vld [vmem:[%s720 + $0x8] sm:$0xf]
      %v724 = vld [vmem:[%s720 + $0xc] sm:$0xf]
      %v725 = vld [vmem:[%s720 + $0x10] sm:$0xf]
      %v726 = vld [vmem:[%s720 + $0x14] sm:$0xf]
      %v727 = vld [vmem:[%s720 + $0x18] sm:$0xf]
      %v728 = vld [vmem:[%s720 + $0x1c] sm:$0xf]
      %v729 = vld [vmem:[%s720 + $0x20] sm:$0xf]
      %v730 = vld [vmem:[%s720 + $0x24] sm:$0xf]
      %v731 = vld [vmem:[%s720 + $0x28] sm:$0xf]
      %v732 = vld [vmem:[%s720 + $0x2c] sm:$0xf]
      %v733 = vld [vmem:[%s720 + $0x30] sm:$0xf]
      %v734 = vld [vmem:[%s720 + $0x34] sm:$0xf]
      %v735 = vld [vmem:[%s720 + $0x38] sm:$0xf]
      %v736 = vld [vmem:[%s720 + $0x3c] sm:$0xf]
      %s737 = scalar_lea.vmem %s345, 8
      %v738 = vld [vmem:[%s737] sm:$0xf]
      %v739 = vld [vmem:[%s737 + $0x4] sm:$0xf]
      %v740 = vld [vmem:[%s737 + $0x8] sm:$0xf]
      %v741 = vld [vmem:[%s737 + $0xc] sm:$0xf]
      %v742 = vld [vmem:[%s737 + $0x10] sm:$0xf]
      %v743 = vld [vmem:[%s737 + $0x14] sm:$0xf]
      %v744 = vld [vmem:[%s737 + $0x18] sm:$0xf]
      %v745 = vld [vmem:[%s737 + $0x1c] sm:$0xf]
      %v746 = vld [vmem:[%s737 + $0x20] sm:$0xf]
      %v747 = vld [vmem:[%s737 + $0x24] sm:$0xf]
      %v748 = vld [vmem:[%s737 + $0x28] sm:$0xf]
      %v749 = vld [vmem:[%s737 + $0x2c] sm:$0xf]
      %v750 = vld [vmem:[%s737 + $0x30] sm:$0xf]
      %v751 = vld [vmem:[%s737 + $0x34] sm:$0xf]
      %v752 = vld [vmem:[%s737 + $0x38] sm:$0xf]
      %v753 = vld [vmem:[%s737 + $0x3c] sm:$0xf]
      %v770 = vunpack.c.l.b16 %v704
      %v771 = vunpack.c.l.b16 %v705
      %v772 = vunpack.c.l.b16 %v706
      %v773 = vunpack.c.l.b16 %v707
      %v774 = vunpack.c.l.b16 %v708
      %v775 = vunpack.c.l.b16 %v709
      %v776 = vunpack.c.l.b16 %v710
      %v777 = vunpack.c.l.b16 %v711
      %v778 = vunpack.c.l.b16 %v712
      %v779 = vunpack.c.l.b16 %v713
      %v780 = vunpack.c.l.b16 %v714
      %v781 = vunpack.c.l.b16 %v715
      %v782 = vunpack.c.l.b16 %v716
      %v783 = vunpack.c.l.b16 %v717
      %v784 = vunpack.c.l.b16 %v718
      %v785 = vunpack.c.l.b16 %v719
      %v786 = vpack.c.b16 %v771, %v770
      %v787 = vpack.c.b16 %v773, %v772
      %v788 = vpack.c.b16 %v775, %v774
      %v789 = vpack.c.b16 %v777, %v776
      %v790 = vpack.c.b16 %v779, %v778
      %v791 = vpack.c.b16 %v781, %v780
      %v792 = vpack.c.b16 %v783, %v782
      %v793 = vpack.c.b16 %v785, %v784
      %v818 = vunpack.c.l.b16 %v721
      %v819 = vunpack.c.l.b16 %v722
      %v820 = vunpack.c.l.b16 %v723
      %v821 = vunpack.c.l.b16 %v724
      %v822 = vunpack.c.l.b16 %v725
      %v823 = vunpack.c.l.b16 %v726
      %v824 = vunpack.c.l.b16 %v727
      %v825 = vunpack.c.l.b16 %v728
      %v826 = vunpack.c.l.b16 %v729
      %v827 = vunpack.c.l.b16 %v730
      %v828 = vunpack.c.l.b16 %v731
      %v829 = vunpack.c.l.b16 %v732
      %v830 = vunpack.c.l.b16 %v733
      %v831 = vunpack.c.l.b16 %v734
      %v832 = vunpack.c.l.b16 %v735
      %v833 = vunpack.c.l.b16 %v736
      %v834 = vpack.c.b16 %v819, %v818
      %v835 = vpack.c.b16 %v821, %v820
      %v836 = vpack.c.b16 %v823, %v822
      %v837 = vpack.c.b16 %v825, %v824
      %v838 = vpack.c.b16 %v827, %v826
      %v839 = vpack.c.b16 %v829, %v828
      %v840 = vpack.c.b16 %v831, %v830
      %v841 = vpack.c.b16 %v833, %v832
      %v866 = vunpack.c.l.b16 %v738
      %v867 = vunpack.c.l.b16 %v739
      %v868 = vunpack.c.l.b16 %v740
      %v869 = vunpack.c.l.b16 %v741
      %v870 = vunpack.c.l.b16 %v742
      %v871 = vunpack.c.l.b16 %v743
      %v872 = vunpack.c.l.b16 %v744
      %v873 = vunpack.c.l.b16 %v745
      %v874 = vunpack.c.l.b16 %v746
      %v875 = vunpack.c.l.b16 %v747
      %v876 = vunpack.c.l.b16 %v748
      %v877 = vunpack.c.l.b16 %v749
      %v878 = vunpack.c.l.b16 %v750
      %v879 = vunpack.c.l.b16 %v751
      %v880 = vunpack.c.l.b16 %v752
      %v881 = vunpack.c.l.b16 %v753
      %v882 = vpack.c.b16 %v867, %v866
      %v883 = vpack.c.b16 %v869, %v868
      %v884 = vpack.c.b16 %v871, %v870
      %v885 = vpack.c.b16 %v873, %v872
      %v886 = vpack.c.b16 %v875, %v874
      %v887 = vpack.c.b16 %v877, %v876
      %v888 = vpack.c.b16 %v879, %v878
      %v889 = vpack.c.b16 %v881, %v880
      %s898 = scalar_lea.vmem %s3, 576
      %v899 = vld [vmem:[%s898] sm:$0xf]
      %v900 = vld [vmem:[%s898 + $0x4] sm:$0xf]
      %v901 = vld [vmem:[%s898 + $0x8] sm:$0xf]
      %v902 = vld [vmem:[%s898 + $0xc] sm:$0xf]
      %v903 = vld [vmem:[%s898 + $0x10] sm:$0xf]
      %v904 = vld [vmem:[%s898 + $0x14] sm:$0xf]
      %v905 = vld [vmem:[%s898 + $0x18] sm:$0xf]
      %v906 = vld [vmem:[%s898 + $0x1c] sm:$0xf]
      %v907 = vld [vmem:[%s898 + $0x20] sm:$0xf]
      %v908 = vld [vmem:[%s898 + $0x24] sm:$0xf]
      %v909 = vld [vmem:[%s898 + $0x28] sm:$0xf]
      %v910 = vld [vmem:[%s898 + $0x2c] sm:$0xf]
      %v911 = vld [vmem:[%s898 + $0x30] sm:$0xf]
      %v912 = vld [vmem:[%s898 + $0x34] sm:$0xf]
      %v913 = vld [vmem:[%s898 + $0x38] sm:$0xf]
      %v914 = vld [vmem:[%s898 + $0x3c] sm:$0xf]
      %v915 = vld [vmem:[%s898 + $0x40] sm:$0xf]
      %v916 = vld [vmem:[%s898 + $0x44] sm:$0xf]
      %v917 = vld [vmem:[%s898 + $0x48] sm:$0xf]
      %v918 = vld [vmem:[%s898 + $0x4c] sm:$0xf]
      %v919 = vld [vmem:[%s898 + $0x50] sm:$0xf]
      %v920 = vld [vmem:[%s898 + $0x54] sm:$0xf]
      %v921 = vld [vmem:[%s898 + $0x58] sm:$0xf]
      %v922 = vld [vmem:[%s898 + $0x5c] sm:$0xf]
      %v923 = vld [vmem:[%s898 + $0x60] sm:$0xf]
      %v924 = vld [vmem:[%s898 + $0x64] sm:$0xf]
      %v925 = vld [vmem:[%s898 + $0x68] sm:$0xf]
      %v926 = vld [vmem:[%s898 + $0x6c] sm:$0xf]
      %v927 = vld [vmem:[%s898 + $0x70] sm:$0xf]
      %v928 = vld [vmem:[%s898 + $0x74] sm:$0xf]
      %v929 = vld [vmem:[%s898 + $0x78] sm:$0xf]
      %v930 = vld [vmem:[%s898 + $0x7c] sm:$0xf]
      %v931 = vld [vmem:[%s898 + $0x80] sm:$0xf]
      %v932 = vld [vmem:[%s898 + $0x84] sm:$0xf]
      %v933 = vld [vmem:[%s898 + $0x88] sm:$0xf]
      %v934 = vld [vmem:[%s898 + $0x8c] sm:$0xf]
      %v935 = vld [vmem:[%s898 + $0x90] sm:$0xf]
      %v936 = vld [vmem:[%s898 + $0x94] sm:$0xf]
      %v937 = vld [vmem:[%s898 + $0x98] sm:$0xf]
      %v938 = vld [vmem:[%s898 + $0x9c] sm:$0xf]
      %v939 = vld [vmem:[%s898 + $0xa0] sm:$0xf]
      %v940 = vld [vmem:[%s898 + $0xa4] sm:$0xf]
      %v941 = vld [vmem:[%s898 + $0xa8] sm:$0xf]
      %v942 = vld [vmem:[%s898 + $0xac] sm:$0xf]
      %v943 = vld [vmem:[%s898 + $0xb0] sm:$0xf]
      %v944 = vld [vmem:[%s898 + $0xb4] sm:$0xf]
      %v945 = vld [vmem:[%s898 + $0xb8] sm:$0xf]
      %v946 = vld [vmem:[%s898 + $0xbc] sm:$0xf]
      %v995 = vunpack.c.l.b16 %v899
      %v996 = vunpack.c.l.b16 %v900
      %v997 = vunpack.c.l.b16 %v901
      %v998 = vunpack.c.l.b16 %v902
      %v999 = vunpack.c.l.b16 %v903
      %v1000 = vunpack.c.l.b16 %v904
      %v1001 = vunpack.c.l.b16 %v905
      %v1002 = vunpack.c.l.b16 %v906
      %v1003 = vunpack.c.l.b16 %v907
      %v1004 = vunpack.c.l.b16 %v908
      %v1005 = vunpack.c.l.b16 %v909
      %v1006 = vunpack.c.l.b16 %v910
      %v1007 = vunpack.c.l.b16 %v911
      %v1008 = vunpack.c.l.b16 %v912
      %v1009 = vunpack.c.l.b16 %v913
      %v1010 = vunpack.c.l.b16 %v914
      %v1011 = vunpack.c.l.b16 %v915
      %v1012 = vunpack.c.l.b16 %v916
      %v1013 = vunpack.c.l.b16 %v917
      %v1014 = vunpack.c.l.b16 %v918
      %v1015 = vunpack.c.l.b16 %v919
      %v1016 = vunpack.c.l.b16 %v920
      %v1017 = vunpack.c.l.b16 %v921
      %v1018 = vunpack.c.l.b16 %v922
      %v1019 = vunpack.c.l.b16 %v923
      %v1020 = vunpack.c.l.b16 %v924
      %v1021 = vunpack.c.l.b16 %v925
      %v1022 = vunpack.c.l.b16 %v926
      %v1023 = vunpack.c.l.b16 %v927
      %v1024 = vunpack.c.l.b16 %v928
      %v1025 = vunpack.c.l.b16 %v929
      %v1026 = vunpack.c.l.b16 %v930
      %v1027 = vunpack.c.l.b16 %v931
      %v1028 = vunpack.c.l.b16 %v932
      %v1029 = vunpack.c.l.b16 %v933
      %v1030 = vunpack.c.l.b16 %v934
      %v1031 = vunpack.c.l.b16 %v935
      %v1032 = vunpack.c.l.b16 %v936
      %v1033 = vunpack.c.l.b16 %v937
      %v1034 = vunpack.c.l.b16 %v938
      %v1035 = vunpack.c.l.b16 %v939
      %v1036 = vunpack.c.l.b16 %v940
      %v1037 = vunpack.c.l.b16 %v941
      %v1038 = vunpack.c.l.b16 %v942
      %v1039 = vunpack.c.l.b16 %v943
      %v1040 = vunpack.c.l.b16 %v944
      %v1041 = vunpack.c.l.b16 %v945
      %v1042 = vunpack.c.l.b16 %v946
      %v1043 = vpack.c.b16 %v996, %v995
      %v1044 = vpack.c.b16 %v998, %v997
      %v1045 = vpack.c.b16 %v1000, %v999
      %v1046 = vpack.c.b16 %v1002, %v1001
      %v1047 = vpack.c.b16 %v1004, %v1003
      %v1048 = vpack.c.b16 %v1006, %v1005
      %v1049 = vpack.c.b16 %v1008, %v1007
      %v1050 = vpack.c.b16 %v1010, %v1009
      %v1051 = vpack.c.b16 %v1012, %v1011
      %v1052 = vpack.c.b16 %v1014, %v1013
      %v1053 = vpack.c.b16 %v1016, %v1015
      %v1054 = vpack.c.b16 %v1018, %v1017
      %v1055 = vpack.c.b16 %v1020, %v1019
      %v1056 = vpack.c.b16 %v1022, %v1021
      %v1057 = vpack.c.b16 %v1024, %v1023
      %v1058 = vpack.c.b16 %v1026, %v1025
      %v1059 = vpack.c.b16 %v1028, %v1027
      %v1060 = vpack.c.b16 %v1030, %v1029
      %v1061 = vpack.c.b16 %v1032, %v1031
      %v1062 = vpack.c.b16 %v1034, %v1033
      %v1063 = vpack.c.b16 %v1036, %v1035
      %v1064 = vpack.c.b16 %v1038, %v1037
      %v1065 = vpack.c.b16 %v1040, %v1039
      %v1066 = vpack.c.b16 %v1042, %v1041
      %1091 = vmatprep.subr.bf16.mxu0 0
      %1092 = vmatpush1.bf16.msra.mxu0 %v1043
      %1093 = vmatprep.subr.bf16.mxu0 0
      %1094 = vmatpush1.bf16.msra.mxu0 %v1044
      %1095 = vmatprep.subr.bf16.mxu0 0
      %1096 = vmatpush1.bf16.msra.mxu0 %v1045
      %1097 = vmatprep.subr.bf16.mxu0 0
      %1098 = vmatpush1.bf16.msra.mxu0 %v1046
      %1099 = vmatprep.subr.bf16.mxu0 0
      %1100 = vmatpush1.bf16.msra.mxu0 %v1047
      %1101 = vmatprep.subr.bf16.mxu0 0
      %1102 = vmatpush1.bf16.msra.mxu0 %v1048
      %1103 = vmatprep.subr.bf16.mxu0 0
      %1104 = vmatpush1.bf16.msra.mxu0 %v1049
      %1105 = vmatprep.subr.bf16.mxu0 0
      %1106 = vmatpush1.bf16.msra.mxu0 %v1050
      %1107 = vmatprep.subr.bf16.mxu0 0
      %1108 = vmatpush1.bf16.msra.mxu0 %v1051
      %1109 = vmatprep.subr.bf16.mxu0 0
      %1110 = vmatpush1.bf16.msra.mxu0 %v1052
      %1111 = vmatprep.subr.bf16.mxu0 0
      %1112 = vmatpush1.bf16.msra.mxu0 %v1053
      %1113 = vmatprep.subr.bf16.mxu0 0
      %1114 = vmatpush1.bf16.msra.mxu0 %v1054
      %1115 = vmatprep.subr.bf16.mxu0 0
      %1116 = vmatpush1.bf16.msra.mxu0 %v1055
      %1117 = vmatprep.subr.bf16.mxu0 0
      %1118 = vmatpush1.bf16.msra.mxu0 %v1056
      %1119 = vmatprep.subr.bf16.mxu0 0
      %1120 = vmatpush1.bf16.msra.mxu0 %v1057
      %1121 = vmatprep.subr.bf16.mxu0 0
      %1122 = vmatpush1.bf16.msra.mxu0 %v1058
      %1123 = vmatprep.mubr.bf16.mxu0 %v834
      %1124 = vmatmul.mubr.bf16.gmra.mrb[0].mxu0 %v786
      %v1125 = vpop.f32.mrb[0].mxu0
      %v1126 = vadd.f32 0.0, %v1125
      %v1127 = vpop.f32.mrb[0].mxu0
      %v1128 = vpop.f32.mrb[0].mxu0
      %v1129 = vpop.f32.mrb[0].mxu0
      %1130 = vmatprep.mubr.bf16.mxu0 %v835
      %1131 = vmatmul.mubr.bf16.gmra.mrb[0].mxu0 %v787
      %v1132 = vpop.f32.mrb[0].mxu0
      %v1133 = vadd.f32 0.0, %v1132
      %v1134 = vpop.f32.mrb[0].mxu0
      %v1135 = vpop.f32.mrb[0].mxu0
      %v1136 = vpop.f32.mrb[0].mxu0
      %1137 = vmatprep.mubr.bf16.mxu0 %v836
      %1138 = vmatmul.mubr.bf16.gmra.mrb[0].mxu0 %v788
      %v1139 = vpop.f32.mrb[0].mxu0
      %v1140 = vadd.f32 0.0, %v1139
      %v1141 = vpop.f32.mrb[0].mxu0
      %v1142 = vpop.f32.mrb[0].mxu0
      %v1143 = vpop.f32.mrb[0].mxu0
      %1144 = vmatprep.mubr.bf16.mxu0 %v837
      %1145 = vmatmul.mubr.bf16.gmra.mrb[0].mxu0 %v789
      %v1146 = vpop.f32.mrb[0].mxu0
      %v1147 = vadd.f32 0.0, %v1146
      %v1148 = vpop.f32.mrb[0].mxu0
      %v1149 = vpop.f32.mrb[0].mxu0
      %v1150 = vpop.f32.mrb[0].mxu0
      %1151 = vmatprep.mubr.bf16.mxu0 %v838
      %1152 = vmatmul.mubr.bf16.gmra.mrb[0].mxu0 %v790
      %v1153 = vpop.f32.mrb[0].mxu0
      %v1154 = vadd.f32 0.0, %v1153
      %v1155 = vpop.f32.mrb[0].mxu0
      %v1156 = vpop.f32.mrb[0].mxu0
      %v1157 = vpop.f32.mrb[0].mxu0
      %1158 = vmatprep.mubr.bf16.mxu0 %v839
      %1159 = vmatmul.mubr.bf16.gmra.mrb[0].mxu0 %v791
      %v1160 = vpop.f32.mrb[0].mxu0
      %v1161 = vadd.f32 0.0, %v1160
      %v1162 = vpop.f32.mrb[0].mxu0
      %v1163 = vpop.f32.mrb[0].mxu0
      %v1164 = vpop.f32.mrb[0].mxu0
      %1165 = vmatprep.mubr.bf16.mxu0 %v840
      %1166 = vmatmul.mubr.bf16.gmra.mrb[0].mxu0 %v792
      %v1167 = vpop.f32.mrb[0].mxu0
      %v1168 = vadd.f32 0.0, %v1167
      %v1169 = vpop.f32.mrb[0].mxu0
      %v1170 = vpop.f32.mrb[0].mxu0
      %v1171 = vpop.f32.mrb[0].mxu0
      %1172 = vmatprep.mubr.bf16.mxu0 %v841
      %1173 = vmatmul.mubr.bf16.gmra.mrb[0].mxu0 %v793
      %v1174 = vpop.f32.mrb[0].mxu0
      %v1175 = vadd.f32 0.0, %v1174
      %v1176 = vpop.f32.mrb[0].mxu0
      %v1177 = vpop.f32.mrb[0].mxu0
      %v1178 = vpop.f32.mrb[0].mxu0
      %1179 = vdwg.mxu0
      %1180 = vmatprep.subr.bf16.mxu0 0
      %1181 = vmatpush1.bf16.msra.mxu0 %v1059
      %1182 = vmatprep.subr.bf16.mxu0 0
      %1183 = vmatpush1.bf16.msra.mxu0 %v1060
      %1184 = vmatprep.subr.bf16.mxu0 0
      %1185 = vmatpush1.bf16.msra.mxu0 %v1061
      %1186 = vmatprep.subr.bf16.mxu0 0
      %1187 = vmatpush1.bf16.msra.mxu0 %v1062
      %1188 = vmatprep.subr.bf16.mxu0 0
      %1189 = vmatpush1.bf16.msra.mxu0 %v1063
      %1190 = vmatprep.subr.bf16.mxu0 0
      %1191 = vmatpush1.bf16.msra.mxu0 %v1064
      %1192 = vmatprep.subr.bf16.mxu0 0
      %1193 = vmatpush1.bf16.msra.mxu0 %v1065
      %1194 = vmatprep.subr.bf16.mxu0 0
      %1195 = vmatpush1.bf16.msra.mxu0 %v1066
      %1196 = vmatprep.subr.bf16.mxu0 0
      %1197 = vmatpush1.bf16.msra.mxu0 0
      %1198 = vmatprep.subr.bf16.mxu0 0
      %1199 = vmatpush1.bf16.msra.mxu0 0
      %1200 = vmatprep.subr.bf16.mxu0 0
      %1201 = vmatpush1.bf16.msra.mxu0 0
      %1202 = vmatprep.subr.bf16.mxu0 0
      %1203 = vmatpush1.bf16.msra.mxu0 0
      %1204 = vmatprep.subr.bf16.mxu0 0
      %1205 = vmatpush1.bf16.msra.mxu0 0
      %1206 = vmatprep.subr.bf16.mxu0 0
      %1207 = vmatpush1.bf16.msra.mxu0 0
      %1208 = vmatprep.subr.bf16.mxu0 0
      %1209 = vmatpush1.bf16.msra.mxu0 0
      %1210 = vmatprep.subr.bf16.mxu0 0
      %1211 = vmatpush1.bf16.msra.mxu0 0
      %1212 = vmatprep.mubr.bf16.mxu0 0
      %1213 = vmatmul.mubr.bf16.gmra.mrb[0].mxu0 %v882
      %v1214 = vpop.f32.mrb[0].mxu0
      %v1215 = vadd.f32 %v1126, %v1214
      %v1216 = vpop.f32.mrb[0].mxu0
      %v1217 = vpop.f32.mrb[0].mxu0
      %v1218 = vpop.f32.mrb[0].mxu0
      %1219 = vmatprep.mubr.bf16.mxu0 0
      %1220 = vmatmul.mubr.bf16.gmra.mrb[0].mxu0 %v883
      %v1221 = vpop.f32.mrb[0].mxu0
      %v1222 = vadd.f32 %v1133, %v1221
      %v1223 = vpop.f32.mrb[0].mxu0
      %v1224 = vpop.f32.mrb[0].mxu0
      %v1225 = vpop.f32.mrb[0].mxu0
      %1226 = vmatprep.mubr.bf16.mxu0 0
      %1227 = vmatmul.mubr.bf16.gmra.mrb[0].mxu0 %v884
      %v1228 = vpop.f32.mrb[0].mxu0
      %v1229 = vadd.f32 %v1140, %v1228
      %v1230 = vpop.f32.mrb[0].mxu0
      %v1231 = vpop.f32.mrb[0].mxu0
      %v1232 = vpop.f32.mrb[0].mxu0
      %1233 = vmatprep.mubr.bf16.mxu0 0
      %1234 = vmatmul.mubr.bf16.gmra.mrb[0].mxu0 %v885
      %v1235 = vpop.f32.mrb[0].mxu0
      %v1236 = vadd.f32 %v1147, %v1235
      %v1237 = vpop.f32.mrb[0].mxu0
      %v1238 = vpop.f32.mrb[0].mxu0
      %v1239 = vpop.f32.mrb[0].mxu0
      %1240 = vmatprep.mubr.bf16.mxu0 0
      %1241 = vmatmul.mubr.bf16.gmra.mrb[0].mxu0 %v886
      %v1242 = vpop.f32.mrb[0].mxu0
      %v1243 = vadd.f32 %v1154, %v1242
      %v1244 = vpop.f32.mrb[0].mxu0
      %v1245 = vpop.f32.mrb[0].mxu0
      %v1246 = vpop.f32.mrb[0].mxu0
      %1247 = vmatprep.mubr.bf16.mxu0 0
      %1248 = vmatmul.mubr.bf16.gmra.mrb[0].mxu0 %v887
      %v1249 = vpop.f32.mrb[0].mxu0
      %v1250 = vadd.f32 %v1161, %v1249
      %v1251 = vpop.f32.mrb[0].mxu0
      %v1252 = vpop.f32.mrb[0].mxu0
      %v1253 = vpop.f32.mrb[0].mxu0
      %1254 = vmatprep.mubr.bf16.mxu0 0
      %1255 = vmatmul.mubr.bf16.gmra.mrb[0].mxu0 %v888
      %v1256 = vpop.f32.mrb[0].mxu0
      %v1257 = vadd.f32 %v1168, %v1256
      %v1258 = vpop.f32.mrb[0].mxu0
      %v1259 = vpop.f32.mrb[0].mxu0
      %v1260 = vpop.f32.mrb[0].mxu0
      %1261 = vmatprep.mubr.bf16.mxu0 0
      %1262 = vmatmul.mubr.bf16.gmra.mrb[0].mxu0 %v889
      %v1263 = vpop.f32.mrb[0].mxu0
      %v1264 = vadd.f32 %v1175, %v1263
      %v1265 = vpop.f32.mrb[0].mxu0
      %v1266 = vpop.f32.mrb[0].mxu0
      %v1267 = vpop.f32.mrb[0].mxu0
      %1268 = vdwg.mxu0
      %v1317 = vunpack.c.l.b16 %v557
      %v1318 = vunpack.c.l.b16 %v558
      %v1319 = vunpack.c.l.b16 %v559
      %v1320 = vunpack.c.l.b16 %v560
      %v1321 = vunpack.c.l.b16 %v561
      %v1322 = vunpack.c.l.b16 %v562
      %v1323 = vunpack.c.l.b16 %v563
      %v1324 = vunpack.c.l.b16 %v564
      %v1325 = vunpack.c.l.b16 %v565
      %v1326 = vunpack.c.l.b16 %v566
      %v1327 = vunpack.c.l.b16 %v567
      %v1328 = vunpack.c.l.b16 %v568
      %v1329 = vunpack.c.l.b16 %v569
      %v1330 = vunpack.c.l.b16 %v570
      %v1331 = vunpack.c.l.b16 %v571
      %v1332 = vunpack.c.l.b16 %v572
      %v1333 = vunpack.c.l.b16 %v573
      %v1334 = vunpack.c.l.b16 %v574
      %v1335 = vunpack.c.l.b16 %v575
      %v1336 = vunpack.c.l.b16 %v576
      %v1337 = vunpack.c.l.b16 %v577
      %v1338 = vunpack.c.l.b16 %v578
      %v1339 = vunpack.c.l.b16 %v579
      %v1340 = vunpack.c.l.b16 %v580
      %v1341 = vunpack.c.l.b16 %v581
      %v1342 = vunpack.c.l.b16 %v582
      %v1343 = vunpack.c.l.b16 %v583
      %v1344 = vunpack.c.l.b16 %v584
      %v1345 = vunpack.c.l.b16 %v585
      %v1346 = vunpack.c.l.b16 %v586
      %v1347 = vunpack.c.l.b16 %v587
      %v1348 = vunpack.c.l.b16 %v588
      %v1349 = vunpack.c.l.b16 %v589
      %v1350 = vunpack.c.l.b16 %v590
      %v1351 = vunpack.c.l.b16 %v591
      %v1352 = vunpack.c.l.b16 %v592
      %v1353 = vunpack.c.l.b16 %v593
      %v1354 = vunpack.c.l.b16 %v594
      %v1355 = vunpack.c.l.b16 %v595
      %v1356 = vunpack.c.l.b16 %v596
      %v1357 = vunpack.c.l.b16 %v597
      %v1358 = vunpack.c.l.b16 %v598
      %v1359 = vunpack.c.l.b16 %v599
      %v1360 = vunpack.c.l.b16 %v600
      %v1361 = vunpack.c.l.b16 %v601
      %v1362 = vunpack.c.l.b16 %v602
      %v1363 = vunpack.c.l.b16 %v603
      %v1364 = vunpack.c.l.b16 %v604
      %v1365 = vpack.c.b16 %v1318, %v1317
      %v1366 = vpack.c.b16 %v1320, %v1319
      %v1367 = vpack.c.b16 %v1322, %v1321
      %v1368 = vpack.c.b16 %v1324, %v1323
      %v1369 = vpack.c.b16 %v1326, %v1325
      %v1370 = vpack.c.b16 %v1328, %v1327
      %v1371 = vpack.c.b16 %v1330, %v1329
      %v1372 = vpack.c.b16 %v1332, %v1331
      %v1373 = vpack.c.b16 %v1334, %v1333
      %v1374 = vpack.c.b16 %v1336, %v1335
      %v1375 = vpack.c.b16 %v1338, %v1337
      %v1376 = vpack.c.b16 %v1340, %v1339
      %v1377 = vpack.c.b16 %v1342, %v1341
      %v1378 = vpack.c.b16 %v1344, %v1343
      %v1379 = vpack.c.b16 %v1346, %v1345
      %v1380 = vpack.c.b16 %v1348, %v1347
      %v1381 = vpack.c.b16 %v1350, %v1349
      %v1382 = vpack.c.b16 %v1352, %v1351
      %v1383 = vpack.c.b16 %v1354, %v1353
      %v1384 = vpack.c.b16 %v1356, %v1355
      %v1385 = vpack.c.b16 %v1358, %v1357
      %v1386 = vpack.c.b16 %v1360, %v1359
      %v1387 = vpack.c.b16 %v1362, %v1361
      %v1388 = vpack.c.b16 %v1364, %v1363
      %1413 = vmatprep.subr.bf16.mxu0 0
      %1414 = vmatpush1.bf16.msra.mxu0 %v1365
      %1415 = vmatprep.subr.bf16.mxu0 0
      %1416 = vmatpush1.bf16.msra.mxu0 %v1366
      %1417 = vmatprep.subr.bf16.mxu0 0
      %1418 = vmatpush1.bf16.msra.mxu0 %v1367
      %1419 = vmatprep.subr.bf16.mxu0 0
      %1420 = vmatpush1.bf16.msra.mxu0 %v1368
      %1421 = vmatprep.subr.bf16.mxu0 0
      %1422 = vmatpush1.bf16.msra.mxu0 %v1369
      %1423 = vmatprep.subr.bf16.mxu0 0
      %1424 = vmatpush1.bf16.msra.mxu0 %v1370
      %1425 = vmatprep.subr.bf16.mxu0 0
      %1426 = vmatpush1.bf16.msra.mxu0 %v1371
      %1427 = vmatprep.subr.bf16.mxu0 0
      %1428 = vmatpush1.bf16.msra.mxu0 %v1372
      %1429 = vmatprep.subr.bf16.mxu0 0
      %1430 = vmatpush1.bf16.msra.mxu0 %v1373
      %1431 = vmatprep.subr.bf16.mxu0 0
      %1432 = vmatpush1.bf16.msra.mxu0 %v1374
      %1433 = vmatprep.subr.bf16.mxu0 0
      %1434 = vmatpush1.bf16.msra.mxu0 %v1375
      %1435 = vmatprep.subr.bf16.mxu0 0
      %1436 = vmatpush1.bf16.msra.mxu0 %v1376
      %1437 = vmatprep.subr.bf16.mxu0 0
      %1438 = vmatpush1.bf16.msra.mxu0 %v1377
      %1439 = vmatprep.subr.bf16.mxu0 0
      %1440 = vmatpush1.bf16.msra.mxu0 %v1378
      %1441 = vmatprep.subr.bf16.mxu0 0
      %1442 = vmatpush1.bf16.msra.mxu0 %v1379
      %1443 = vmatprep.subr.bf16.mxu0 0
      %1444 = vmatpush1.bf16.msra.mxu0 %v1380
      %1445 = vmatprep.mubr.bf16.mxu0 %v493
      %1446 = vmatmul.mubr.bf16.gmra.mrb[0].mxu0 %v445
      %v1447 = vpop.f32.mrb[0].mxu0
      %v1448 = vadd.f32 %v1215, %v1447
      %v1449 = vpop.f32.mrb[0].mxu0
      %v1450 = vpop.f32.mrb[0].mxu0
      %v1451 = vpop.f32.mrb[0].mxu0
      %1452 = vmatprep.mubr.bf16.mxu0 %v494
      %1453 = vmatmul.mubr.bf16.gmra.mrb[0].mxu0 %v446
      %v1454 = vpop.f32.mrb[0].mxu0
      %v1455 = vadd.f32 %v1222, %v1454
      %v1456 = vpop.f32.mrb[0].mxu0
      %v1457 = vpop.f32.mrb[0].mxu0
      %v1458 = vpop.f32.mrb[0].mxu0
      %1459 = vmatprep.mubr.bf16.mxu0 %v495
      %1460 = vmatmul.mubr.bf16.gmra.mrb[0].mxu0 %v447
      %v1461 = vpop.f32.mrb[0].mxu0
      %v1462 = vadd.f32 %v1229, %v1461
      %v1463 = vpop.f32.mrb[0].mxu0
      %v1464 = vpop.f32.mrb[0].mxu0
      %v1465 = vpop.f32.mrb[0].mxu0
      %1466 = vmatprep.mubr.bf16.mxu0 %v496
      %1467 = vmatmul.mubr.bf16.gmra.mrb[0].mxu0 %v448
      %v1468 = vpop.f32.mrb[0].mxu0
      %v1469 = vadd.f32 %v1236, %v1468
      %v1470 = vpop.f32.mrb[0].mxu0
      %v1471 = vpop.f32.mrb[0].mxu0
      %v1472 = vpop.f32.mrb[0].mxu0
      %1473 = vmatprep.mubr.bf16.mxu0 %v497
      %1474 = vmatmul.mubr.bf16.gmra.mrb[0].mxu0 %v449
      %v1475 = vpop.f32.mrb[0].mxu0
      %v1476 = vadd.f32 %v1243, %v1475
      %v1477 = vpop.f32.mrb[0].mxu0
      %v1478 = vpop.f32.mrb[0].mxu0
      %v1479 = vpop.f32.mrb[0].mxu0
      %1480 = vmatprep.mubr.bf16.mxu0 %v498
      %1481 = vmatmul.mubr.bf16.gmra.mrb[0].mxu0 %v450
      %v1482 = vpop.f32.mrb[0].mxu0
      %v1483 = vadd.f32 %v1250, %v1482
      %v1484 = vpop.f32.mrb[0].mxu0
      %v1485 = vpop.f32.mrb[0].mxu0
      %v1486 = vpop.f32.mrb[0].mxu0
      %1487 = vmatprep.mubr.bf16.mxu0 %v499
      %1488 = vmatmul.mubr.bf16.gmra.mrb[0].mxu0 %v451
      %v1489 = vpop.f32.mrb[0].mxu0
      %v1490 = vadd.f32 %v1257, %v1489
      %v1491 = vpop.f32.mrb[0].mxu0
      %v1492 = vpop.f32.mrb[0].mxu0
      %v1493 = vpop.f32.mrb[0].mxu0
      %1494 = vmatprep.mubr.bf16.mxu0 %v500
      %1495 = vmatmul.mubr.bf16.gmra.mrb[0].mxu0 %v452
      %v1496 = vpop.f32.mrb[0].mxu0
      %v1497 = vadd.f32 %v1264, %v1496
      %v1498 = vpop.f32.mrb[0].mxu0
      %v1499 = vpop.f32.mrb[0].mxu0
      %v1500 = vpop.f32.mrb[0].mxu0
      %1501 = vdwg.mxu0
      %1502 = vmatprep.subr.bf16.mxu0 0
      %1503 = vmatpush1.bf16.msra.mxu0 %v1381
      %1504 = vmatprep.subr.bf16.mxu0 0
      %1505 = vmatpush1.bf16.msra.mxu0 %v1382
      %1506 = vmatprep.subr.bf16.mxu0 0
      %1507 = vmatpush1.bf16.msra.mxu0 %v1383
      %1508 = vmatprep.subr.bf16.mxu0 0
      %1509 = vmatpush1.bf16.msra.mxu0 %v1384
      %1510 = vmatprep.subr.bf16.mxu0 0
      %1511 = vmatpush1.bf16.msra.mxu0 %v1385
      %1512 = vmatprep.subr.bf16.mxu0 0
      %1513 = vmatpush1.bf16.msra.mxu0 %v1386
      %1514 = vmatprep.subr.bf16.mxu0 0
      %1515 = vmatpush1.bf16.msra.mxu0 %v1387
      %1516 = vmatprep.subr.bf16.mxu0 0
      %1517 = vmatpush1.bf16.msra.mxu0 %v1388
      %1518 = vmatprep.subr.bf16.mxu0 0
      %1519 = vmatpush1.bf16.msra.mxu0 0
      %1520 = vmatprep.subr.bf16.mxu0 0
      %1521 = vmatpush1.bf16.msra.mxu0 0
      %1522 = vmatprep.subr.bf16.mxu0 0
      %1523 = vmatpush1.bf16.msra.mxu0 0
      %1524 = vmatprep.subr.bf16.mxu0 0
      %1525 = vmatpush1.bf16.msra.mxu0 0
      %1526 = vmatprep.subr.bf16.mxu0 0
      %1527 = vmatpush1.bf16.msra.mxu0 0
      %1528 = vmatprep.subr.bf16.mxu0 0
      %1529 = vmatpush1.bf16.msra.mxu0 0
      %1530 = vmatprep.subr.bf16.mxu0 0
      %1531 = vmatpush1.bf16.msra.mxu0 0
      %1532 = vmatprep.subr.bf16.mxu0 0
      %1533 = vmatpush1.bf16.msra.mxu0 0
      %1534 = vmatprep.mubr.bf16.mxu0 0
      %1535 = vmatmul.mubr.bf16.gmra.mrb[0].mxu0 %v541
      %v1536 = vpop.f32.mrb[0].mxu0
      %v1537 = vadd.f32 %v1448, %v1536
      %v1538 = vpop.f32.mrb[0].mxu0
      %v1539 = vpop.f32.mrb[0].mxu0
      %v1540 = vpop.f32.mrb[0].mxu0
      %1541 = vmatprep.mubr.bf16.mxu0 0
      %1542 = vmatmul.mubr.bf16.gmra.mrb[0].mxu0 %v542
      %v1543 = vpop.f32.mrb[0].mxu0
      %v1544 = vadd.f32 %v1455, %v1543
      %v1545 = vpop.f32.mrb[0].mxu0
      %v1546 = vpop.f32.mrb[0].mxu0
      %v1547 = vpop.f32.mrb[0].mxu0
      %1548 = vmatprep.mubr.bf16.mxu0 0
      %1549 = vmatmul.mubr.bf16.gmra.mrb[0].mxu0 %v543
      %v1550 = vpop.f32.mrb[0].mxu0
      %v1551 = vadd.f32 %v1462, %v1550
      %v1552 = vpop.f32.mrb[0].mxu0
      %v1553 = vpop.f32.mrb[0].mxu0
      %v1554 = vpop.f32.mrb[0].mxu0
      %1555 = vmatprep.mubr.bf16.mxu0 0
      %1556 = vmatmul.mubr.bf16.gmra.mrb[0].mxu0 %v544
      %v1557 = vpop.f32.mrb[0].mxu0
      %v1558 = vadd.f32 %v1469, %v1557
      %v1559 = vpop.f32.mrb[0].mxu0
      %v1560 = vpop.f32.mrb[0].mxu0
      %v1561 = vpop.f32.mrb[0].mxu0
      %1562 = vmatprep.mubr.bf16.mxu0 0
      %1563 = vmatmul.mubr.bf16.gmra.mrb[0].mxu0 %v545
      %v1564 = vpop.f32.mrb[0].mxu0
      %v1565 = vadd.f32 %v1476, %v1564
      %v1566 = vpop.f32.mrb[0].mxu0
      %v1567 = vpop.f32.mrb[0].mxu0
      %v1568 = vpop.f32.mrb[0].mxu0
      %1569 = vmatprep.mubr.bf16.mxu0 0
      %1570 = vmatmul.mubr.bf16.gmra.mrb[0].mxu0 %v546
      %v1571 = vpop.f32.mrb[0].mxu0
      %v1572 = vadd.f32 %v1483, %v1571
      %v1573 = vpop.f32.mrb[0].mxu0
      %v1574 = vpop.f32.mrb[0].mxu0
      %v1575 = vpop.f32.mrb[0].mxu0
      %1576 = vmatprep.mubr.bf16.mxu0 0
      %1577 = vmatmul.mubr.bf16.gmra.mrb[0].mxu0 %v547
      %v1578 = vpop.f32.mrb[0].mxu0
      %v1579 = vadd.f32 %v1490, %v1578
      %v1580 = vpop.f32.mrb[0].mxu0
      %v1581 = vpop.f32.mrb[0].mxu0
      %v1582 = vpop.f32.mrb[0].mxu0
      %1583 = vmatprep.mubr.bf16.mxu0 0
      %1584 = vmatmul.mubr.bf16.gmra.mrb[0].mxu0 %v548
      %v1585 = vpop.f32.mrb[0].mxu0
      %v1586 = vadd.f32 %v1497, %v1585
      %v1587 = vpop.f32.mrb[0].mxu0
      %v1588 = vpop.f32.mrb[0].mxu0
      %v1589 = vpop.f32.mrb[0].mxu0
      %1590 = vdwg.mxu0
      %s1591 = scalar_lea.vmem %s3, 768
      %v1592 = vld [vmem:[%s1591] sm:$0xf]
      %v1593 = vld [vmem:[%s1591 + $0x4] sm:$0xf]
      %v1594 = vld [vmem:[%s1591 + $0x8] sm:$0xf]
      %v1595 = vld [vmem:[%s1591 + $0xc] sm:$0xf]
      %v1596 = vld [vmem:[%s1591 + $0x10] sm:$0xf]
      %v1597 = vld [vmem:[%s1591 + $0x14] sm:$0xf]
      %v1598 = vld [vmem:[%s1591 + $0x18] sm:$0xf]
      %v1599 = vld [vmem:[%s1591 + $0x1c] sm:$0xf]
      %v1600 = vld [vmem:[%s1591 + $0x20] sm:$0xf]
      %v1601 = vld [vmem:[%s1591 + $0x24] sm:$0xf]
      %v1602 = vld [vmem:[%s1591 + $0x28] sm:$0xf]
      %v1603 = vld [vmem:[%s1591 + $0x2c] sm:$0xf]
      %v1604 = vld [vmem:[%s1591 + $0x30] sm:$0xf]
      %v1605 = vld [vmem:[%s1591 + $0x34] sm:$0xf]
      %v1606 = vld [vmem:[%s1591 + $0x38] sm:$0xf]
      %v1607 = vld [vmem:[%s1591 + $0x3c] sm:$0xf]
      %v1608 = vld [vmem:[%s1591 + $0x40] sm:$0xf]
      %v1609 = vld [vmem:[%s1591 + $0x44] sm:$0xf]
      %v1610 = vld [vmem:[%s1591 + $0x48] sm:$0xf]
      %v1611 = vld [vmem:[%s1591 + $0x4c] sm:$0xf]
      %v1612 = vld [vmem:[%s1591 + $0x50] sm:$0xf]
      %v1613 = vld [vmem:[%s1591 + $0x54] sm:$0xf]
      %v1614 = vld [vmem:[%s1591 + $0x58] sm:$0xf]
      %v1615 = vld [vmem:[%s1591 + $0x5c] sm:$0xf]
      %v1616 = vld [vmem:[%s1591 + $0x60] sm:$0xf]
      %v1617 = vld [vmem:[%s1591 + $0x64] sm:$0xf]
      %v1618 = vld [vmem:[%s1591 + $0x68] sm:$0xf]
      %v1619 = vld [vmem:[%s1591 + $0x6c] sm:$0xf]
      %v1620 = vld [vmem:[%s1591 + $0x70] sm:$0xf]
      %v1621 = vld [vmem:[%s1591 + $0x74] sm:$0xf]
      %v1622 = vld [vmem:[%s1591 + $0x78] sm:$0xf]
      %v1623 = vld [vmem:[%s1591 + $0x7c] sm:$0xf]
      %v1624 = vld [vmem:[%s1591 + $0x80] sm:$0xf]
      %v1625 = vld [vmem:[%s1591 + $0x84] sm:$0xf]
      %v1626 = vld [vmem:[%s1591 + $0x88] sm:$0xf]
      %v1627 = vld [vmem:[%s1591 + $0x8c] sm:$0xf]
      %v1628 = vld [vmem:[%s1591 + $0x90] sm:$0xf]
      %v1629 = vld [vmem:[%s1591 + $0x94] sm:$0xf]
      %v1630 = vld [vmem:[%s1591 + $0x98] sm:$0xf]
      %v1631 = vld [vmem:[%s1591 + $0x9c] sm:$0xf]
      %v1632 = vld [vmem:[%s1591 + $0xa0] sm:$0xf]
      %v1633 = vld [vmem:[%s1591 + $0xa4] sm:$0xf]
      %v1634 = vld [vmem:[%s1591 + $0xa8] sm:$0xf]
      %v1635 = vld [vmem:[%s1591 + $0xac] sm:$0xf]
      %v1636 = vld [vmem:[%s1591 + $0xb0] sm:$0xf]
      %v1637 = vld [vmem:[%s1591 + $0xb4] sm:$0xf]
      %v1638 = vld [vmem:[%s1591 + $0xb8] sm:$0xf]
      %v1639 = vld [vmem:[%s1591 + $0xbc] sm:$0xf]
      %v1688 = vunpack.c.l.b16 %v1592
      %v1689 = vunpack.c.l.b16 %v1593
      %v1690 = vunpack.c.l.b16 %v1594
      %v1691 = vunpack.c.l.b16 %v1595
      %v1692 = vunpack.c.l.b16 %v1596
      %v1693 = vunpack.c.l.b16 %v1597
      %v1694 = vunpack.c.l.b16 %v1598
      %v1695 = vunpack.c.l.b16 %v1599
      %v1696 = vunpack.c.l.b16 %v1600
      %v1697 = vunpack.c.l.b16 %v1601
      %v1698 = vunpack.c.l.b16 %v1602
      %v1699 = vunpack.c.l.b16 %v1603
      %v1700 = vunpack.c.l.b16 %v1604
      %v1701 = vunpack.c.l.b16 %v1605
      %v1702 = vunpack.c.l.b16 %v1606
      %v1703 = vunpack.c.l.b16 %v1607
      %v1704 = vunpack.c.l.b16 %v1608
      %v1705 = vunpack.c.l.b16 %v1609
      %v1706 = vunpack.c.l.b16 %v1610
      %v1707 = vunpack.c.l.b16 %v1611
      %v1708 = vunpack.c.l.b16 %v1612
      %v1709 = vunpack.c.l.b16 %v1613
      %v1710 = vunpack.c.l.b16 %v1614
      %v1711 = vunpack.c.l.b16 %v1615
      %v1712 = vunpack.c.l.b16 %v1616
      %v1713 = vunpack.c.l.b16 %v1617
      %v1714 = vunpack.c.l.b16 %v1618
      %v1715 = vunpack.c.l.b16 %v1619
      %v1716 = vunpack.c.l.b16 %v1620
      %v1717 = vunpack.c.l.b16 %v1621
      %v1718 = vunpack.c.l.b16 %v1622
      %v1719 = vunpack.c.l.b16 %v1623
      %v1720 = vunpack.c.l.b16 %v1624
      %v1721 = vunpack.c.l.b16 %v1625
      %v1722 = vunpack.c.l.b16 %v1626
      %v1723 = vunpack.c.l.b16 %v1627
      %v1724 = vunpack.c.l.b16 %v1628
      %v1725 = vunpack.c.l.b16 %v1629
      %v1726 = vunpack.c.l.b16 %v1630
      %v1727 = vunpack.c.l.b16 %v1631
      %v1728 = vunpack.c.l.b16 %v1632
      %v1729 = vunpack.c.l.b16 %v1633
      %v1730 = vunpack.c.l.b16 %v1634
      %v1731 = vunpack.c.l.b16 %v1635
      %v1732 = vunpack.c.l.b16 %v1636
      %v1733 = vunpack.c.l.b16 %v1637
      %v1734 = vunpack.c.l.b16 %v1638
      %v1735 = vunpack.c.l.b16 %v1639
      %v1736 = vpack.c.b16 %v1689, %v1688
      %v1737 = vpack.c.b16 %v1691, %v1690
      %v1738 = vpack.c.b16 %v1693, %v1692
      %v1739 = vpack.c.b16 %v1695, %v1694
      %v1740 = vpack.c.b16 %v1697, %v1696
      %v1741 = vpack.c.b16 %v1699, %v1698
      %v1742 = vpack.c.b16 %v1701, %v1700
      %v1743 = vpack.c.b16 %v1703, %v1702
      %v1744 = vpack.c.b16 %v1705, %v1704
      %v1745 = vpack.c.b16 %v1707, %v1706
      %v1746 = vpack.c.b16 %v1709, %v1708
      %v1747 = vpack.c.b16 %v1711, %v1710
      %v1748 = vpack.c.b16 %v1713, %v1712
      %v1749 = vpack.c.b16 %v1715, %v1714
      %v1750 = vpack.c.b16 %v1717, %v1716
      %v1751 = vpack.c.b16 %v1719, %v1718
      %v1752 = vpack.c.b16 %v1721, %v1720
      %v1753 = vpack.c.b16 %v1723, %v1722
      %v1754 = vpack.c.b16 %v1725, %v1724
      %v1755 = vpack.c.b16 %v1727, %v1726
      %v1756 = vpack.c.b16 %v1729, %v1728
      %v1757 = vpack.c.b16 %v1731, %v1730
      %v1758 = vpack.c.b16 %v1733, %v1732
      %v1759 = vpack.c.b16 %v1735, %v1734
      %1784 = vmatprep.subr.bf16.mxu0 0
      %1785 = vmatpush1.bf16.msra.mxu0 %v1736
      %1786 = vmatprep.subr.bf16.mxu0 0
      %1787 = vmatpush1.bf16.msra.mxu0 %v1737
      %1788 = vmatprep.subr.bf16.mxu0 0
      %1789 = vmatpush1.bf16.msra.mxu0 %v1738
      %1790 = vmatprep.subr.bf16.mxu0 0
      %1791 = vmatpush1.bf16.msra.mxu0 %v1739
      %1792 = vmatprep.subr.bf16.mxu0 0
      %1793 = vmatpush1.bf16.msra.mxu0 %v1740
      %1794 = vmatprep.subr.bf16.mxu0 0
      %1795 = vmatpush1.bf16.msra.mxu0 %v1741
      %1796 = vmatprep.subr.bf16.mxu0 0
      %1797 = vmatpush1.bf16.msra.mxu0 %v1742
      %1798 = vmatprep.subr.bf16.mxu0 0
      %1799 = vmatpush1.bf16.msra.mxu0 %v1743
      %1800 = vmatprep.subr.bf16.mxu0 0
      %1801 = vmatpush1.bf16.msra.mxu0 %v1744
      %1802 = vmatprep.subr.bf16.mxu0 0
      %1803 = vmatpush1.bf16.msra.mxu0 %v1745
      %1804 = vmatprep.subr.bf16.mxu0 0
      %1805 = vmatpush1.bf16.msra.mxu0 %v1746
      %1806 = vmatprep.subr.bf16.mxu0 0
      %1807 = vmatpush1.bf16.msra.mxu0 %v1747
      %1808 = vmatprep.subr.bf16.mxu0 0
      %1809 = vmatpush1.bf16.msra.mxu0 %v1748
      %1810 = vmatprep.subr.bf16.mxu0 0
      %1811 = vmatpush1.bf16.msra.mxu0 %v1749
      %1812 = vmatprep.subr.bf16.mxu0 0
      %1813 = vmatpush1.bf16.msra.mxu0 %v1750
      %1814 = vmatprep.subr.bf16.mxu0 0
      %1815 = vmatpush1.bf16.msra.mxu0 %v1751
      %1816 = vmatprep.mubr.bf16.mxu0 %v834
      %1817 = vmatmul.mubr.bf16.gmra.mrb[0].mxu0 %v786
      %v1818 = vpop.f32.mrb[0].mxu0
      %v1819 = vadd.f32 0.0, %v1818
      %v1820 = vpop.f32.mrb[0].mxu0
      %v1821 = vpop.f32.mrb[0].mxu0
      %v1822 = vadd.f32 0.0, %v1821
      %v1823 = vpop.f32.mrb[0].mxu0
      %1824 = vmatprep.mubr.bf16.mxu0 %v835
      %1825 = vmatmul.mubr.bf16.gmra.mrb[0].mxu0 %v787
      %v1826 = vpop.f32.mrb[0].mxu0
      %v1827 = vadd.f32 0.0, %v1826
      %v1828 = vpop.f32.mrb[0].mxu0
      %v1829 = vpop.f32.mrb[0].mxu0
      %v1830 = vadd.f32 0.0, %v1829
      %v1831 = vpop.f32.mrb[0].mxu0
      %1832 = vmatprep.mubr.bf16.mxu0 %v836
      %1833 = vmatmul.mubr.bf16.gmra.mrb[0].mxu0 %v788
      %v1834 = vpop.f32.mrb[0].mxu0
      %v1835 = vadd.f32 0.0, %v1834
      %v1836 = vpop.f32.mrb[0].mxu0
      %v1837 = vpop.f32.mrb[0].mxu0
      %v1838 = vadd.f32 0.0, %v1837
      %v1839 = vpop.f32.mrb[0].mxu0
      %1840 = vmatprep.mubr.bf16.mxu0 %v837
      %1841 = vmatmul.mubr.bf16.gmra.mrb[0].mxu0 %v789
      %v1842 = vpop.f32.mrb[0].mxu0
      %v1843 = vadd.f32 0.0, %v1842
      %v1844 = vpop.f32.mrb[0].mxu0
      %v1845 = vpop.f32.mrb[0].mxu0
      %v1846 = vadd.f32 0.0, %v1845
      %v1847 = vpop.f32.mrb[0].mxu0
      %1848 = vmatprep.mubr.bf16.mxu0 %v838
      %1849 = vmatmul.mubr.bf16.gmra.mrb[0].mxu0 %v790
      %v1850 = vpop.f32.mrb[0].mxu0
      %v1851 = vadd.f32 0.0, %v1850
      %v1852 = vpop.f32.mrb[0].mxu0
      %v1853 = vpop.f32.mrb[0].mxu0
      %v1854 = vadd.f32 0.0, %v1853
      %v1855 = vpop.f32.mrb[0].mxu0
      %1856 = vmatprep.mubr.bf16.mxu0 %v839
      %1857 = vmatmul.mubr.bf16.gmra.mrb[0].mxu0 %v791
      %v1858 = vpop.f32.mrb[0].mxu0
      %v1859 = vadd.f32 0.0, %v1858
      %v1860 = vpop.f32.mrb[0].mxu0
      %v1861 = vpop.f32.mrb[0].mxu0
      %v1862 = vadd.f32 0.0, %v1861
      %v1863 = vpop.f32.mrb[0].mxu0
      %1864 = vmatprep.mubr.bf16.mxu0 %v840
      %1865 = vmatmul.mubr.bf16.gmra.mrb[0].mxu0 %v792
      %v1866 = vpop.f32.mrb[0].mxu0
      %v1867 = vadd.f32 0.0, %v1866
      %v1868 = vpop.f32.mrb[0].mxu0
      %v1869 = vpop.f32.mrb[0].mxu0
      %v1870 = vadd.f32 0.0, %v1869
      %v1871 = vpop.f32.mrb[0].mxu0
      %1872 = vmatprep.mubr.bf16.mxu0 %v841
      %1873 = vmatmul.mubr.bf16.gmra.mrb[0].mxu0 %v793
      %v1874 = vpop.f32.mrb[0].mxu0
      %v1875 = vadd.f32 0.0, %v1874
      %v1876 = vpop.f32.mrb[0].mxu0
      %v1877 = vpop.f32.mrb[0].mxu0
      %v1878 = vadd.f32 0.0, %v1877
      %v1879 = vpop.f32.mrb[0].mxu0
      %1880 = vdwg.mxu0
      %1881 = vmatprep.subr.bf16.mxu0 0
      %1882 = vmatpush1.bf16.msra.mxu0 %v1752
      %1883 = vmatprep.subr.bf16.mxu0 0
      %1884 = vmatpush1.bf16.msra.mxu0 %v1753
      %1885 = vmatprep.subr.bf16.mxu0 0
      %1886 = vmatpush1.bf16.msra.mxu0 %v1754
      %1887 = vmatprep.subr.bf16.mxu0 0
      %1888 = vmatpush1.bf16.msra.mxu0 %v1755
      %1889 = vmatprep.subr.bf16.mxu0 0
      %1890 = vmatpush1.bf16.msra.mxu0 %v1756
      %1891 = vmatprep.subr.bf16.mxu0 0
      %1892 = vmatpush1.bf16.msra.mxu0 %v1757
      %1893 = vmatprep.subr.bf16.mxu0 0
      %1894 = vmatpush1.bf16.msra.mxu0 %v1758
      %1895 = vmatprep.subr.bf16.mxu0 0
      %1896 = vmatpush1.bf16.msra.mxu0 %v1759
      %1897 = vmatprep.subr.bf16.mxu0 0
      %1898 = vmatpush1.bf16.msra.mxu0 0
      %1899 = vmatprep.subr.bf16.mxu0 0
      %1900 = vmatpush1.bf16.msra.mxu0 0
      %1901 = vmatprep.subr.bf16.mxu0 0
      %1902 = vmatpush1.bf16.msra.mxu0 0
      %1903 = vmatprep.subr.bf16.mxu0 0
      %1904 = vmatpush1.bf16.msra.mxu0 0
      %1905 = vmatprep.subr.bf16.mxu0 0
      %1906 = vmatpush1.bf16.msra.mxu0 0
      %1907 = vmatprep.subr.bf16.mxu0 0
      %1908 = vmatpush1.bf16.msra.mxu0 0
      %1909 = vmatprep.subr.bf16.mxu0 0
      %1910 = vmatpush1.bf16.msra.mxu0 0
      %1911 = vmatprep.subr.bf16.mxu0 0
      %1912 = vmatpush1.bf16.msra.mxu0 0
      %1913 = vmatprep.mubr.bf16.mxu0 0
      %1914 = vmatmul.mubr.bf16.gmra.mrb[0].mxu0 %v882
      %v1915 = vpop.f32.mrb[0].mxu0
      %v1916 = vadd.f32 %v1819, %v1915
      %v1917 = vpop.f32.mrb[0].mxu0
      %v1918 = vpop.f32.mrb[0].mxu0
      %v1919 = vadd.f32 %v1822, %v1918
      %v1920 = vpop.f32.mrb[0].mxu0
      %1921 = vmatprep.mubr.bf16.mxu0 0
      %1922 = vmatmul.mubr.bf16.gmra.mrb[0].mxu0 %v883
      %v1923 = vpop.f32.mrb[0].mxu0
      %v1924 = vadd.f32 %v1827, %v1923
      %v1925 = vpop.f32.mrb[0].mxu0
      %v1926 = vpop.f32.mrb[0].mxu0
      %v1927 = vadd.f32 %v1830, %v1926
      %v1928 = vpop.f32.mrb[0].mxu0
      %1929 = vmatprep.mubr.bf16.mxu0 0
      %1930 = vmatmul.mubr.bf16.gmra.mrb[0].mxu0 %v884
      %v1931 = vpop.f32.mrb[0].mxu0
      %v1932 = vadd.f32 %v1835, %v1931
      %v1933 = vpop.f32.mrb[0].mxu0
      %v1934 = vpop.f32.mrb[0].mxu0
      %v1935 = vadd.f32 %v1838, %v1934
      %v1936 = vpop.f32.mrb[0].mxu0
      %1937 = vmatprep.mubr.bf16.mxu0 0
      %1938 = vmatmul.mubr.bf16.gmra.mrb[0].mxu0 %v885
      %v1939 = vpop.f32.mrb[0].mxu0
      %v1940 = vadd.f32 %v1843, %v1939
      %v1941 = vpop.f32.mrb[0].mxu0
      %v1942 = vpop.f32.mrb[0].mxu0
      %v1943 = vadd.f32 %v1846, %v1942
      %v1944 = vpop.f32.mrb[0].mxu0
      %1945 = vmatprep.mubr.bf16.mxu0 0
      %1946 = vmatmul.mubr.bf16.gmra.mrb[0].mxu0 %v886
      %v1947 = vpop.f32.mrb[0].mxu0
      %v1948 = vadd.f32 %v1851, %v1947
      %v1949 = vpop.f32.mrb[0].mxu0
      %v1950 = vpop.f32.mrb[0].mxu0
      %v1951 = vadd.f32 %v1854, %v1950
      %v1952 = vpop.f32.mrb[0].mxu0
      %1953 = vmatprep.mubr.bf16.mxu0 0
      %1954 = vmatmul.mubr.bf16.gmra.mrb[0].mxu0 %v887
      %v1955 = vpop.f32.mrb[0].mxu0
      %v1956 = vadd.f32 %v1859, %v1955
      %v1957 = vpop.f32.mrb[0].mxu0
      %v1958 = vpop.f32.mrb[0].mxu0
      %v1959 = vadd.f32 %v1862, %v1958
      %v1960 = vpop.f32.mrb[0].mxu0
      %1961 = vmatprep.mubr.bf16.mxu0 0
      %1962 = vmatmul.mubr.bf16.gmra.mrb[0].mxu0 %v888
      %v1963 = vpop.f32.mrb[0].mxu0
      %v1964 = vadd.f32 %v1867, %v1963
      %v1965 = vpop.f32.mrb[0].mxu0
      %v1966 = vpop.f32.mrb[0].mxu0
      %v1967 = vadd.f32 %v1870, %v1966
      %v1968 = vpop.f32.mrb[0].mxu0
      %1969 = vmatprep.mubr.bf16.mxu0 0
      %1970 = vmatmul.mubr.bf16.gmra.mrb[0].mxu0 %v889
      %v1971 = vpop.f32.mrb[0].mxu0
      %v1972 = vadd.f32 %v1875, %v1971
      %v1973 = vpop.f32.mrb[0].mxu0
      %v1974 = vpop.f32.mrb[0].mxu0
      %v1975 = vadd.f32 %v1878, %v1974
      %v1976 = vpop.f32.mrb[0].mxu0
      %1977 = vdwg.mxu0
      %v2026 = vunpack.c.l.b16 %v606
      %v2027 = vunpack.c.l.b16 %v607
      %v2028 = vunpack.c.l.b16 %v608
      %v2029 = vunpack.c.l.b16 %v609
      %v2030 = vunpack.c.l.b16 %v610
      %v2031 = vunpack.c.l.b16 %v611
      %v2032 = vunpack.c.l.b16 %v612
      %v2033 = vunpack.c.l.b16 %v613
      %v2034 = vunpack.c.l.b16 %v614
      %v2035 = vunpack.c.l.b16 %v615
      %v2036 = vunpack.c.l.b16 %v616
      %v2037 = vunpack.c.l.b16 %v617
      %v2038 = vunpack.c.l.b16 %v618
      %v2039 = vunpack.c.l.b16 %v619
      %v2040 = vunpack.c.l.b16 %v620
      %v2041 = vunpack.c.l.b16 %v621
      %v2042 = vunpack.c.l.b16 %v622
      %v2043 = vunpack.c.l.b16 %v623
      %v2044 = vunpack.c.l.b16 %v624
      %v2045 = vunpack.c.l.b16 %v625
      %v2046 = vunpack.c.l.b16 %v626
      %v2047 = vunpack.c.l.b16 %v627
      %v2048 = vunpack.c.l.b16 %v628
      %v2049 = vunpack.c.l.b16 %v629
      %v2050 = vunpack.c.l.b16 %v630
      %v2051 = vunpack.c.l.b16 %v631
      %v2052 = vunpack.c.l.b16 %v632
      %v2053 = vunpack.c.l.b16 %v633
      %v2054 = vunpack.c.l.b16 %v634
      %v2055 = vunpack.c.l.b16 %v635
      %v2056 = vunpack.c.l.b16 %v636
      %v2057 = vunpack.c.l.b16 %v637
      %v2058 = vunpack.c.l.b16 %v638
      %v2059 = vunpack.c.l.b16 %v639
      %v2060 = vunpack.c.l.b16 %v640
      %v2061 = vunpack.c.l.b16 %v641
      %v2062 = vunpack.c.l.b16 %v642
      %v2063 = vunpack.c.l.b16 %v643
      %v2064 = vunpack.c.l.b16 %v644
      %v2065 = vunpack.c.l.b16 %v645
      %v2066 = vunpack.c.l.b16 %v646
      %v2067 = vunpack.c.l.b16 %v647
      %v2068 = vunpack.c.l.b16 %v648
      %v2069 = vunpack.c.l.b16 %v649
      %v2070 = vunpack.c.l.b16 %v650
      %v2071 = vunpack.c.l.b16 %v651
      %v2072 = vunpack.c.l.b16 %v652
      %v2073 = vunpack.c.l.b16 %v653
      %v2074 = vpack.c.b16 %v2027, %v2026
      %v2075 = vpack.c.b16 %v2029, %v2028
      %v2076 = vpack.c.b16 %v2031, %v2030
      %v2077 = vpack.c.b16 %v2033, %v2032
      %v2078 = vpack.c.b16 %v2035, %v2034
      %v2079 = vpack.c.b16 %v2037, %v2036
      %v2080 = vpack.c.b16 %v2039, %v2038
      %v2081 = vpack.c.b16 %v2041, %v2040
      %v2082 = vpack.c.b16 %v2043, %v2042
      %v2083 = vpack.c.b16 %v2045, %v2044
      %v2084 = vpack.c.b16 %v2047, %v2046
      %v2085 = vpack.c.b16 %v2049, %v2048
      %v2086 = vpack.c.b16 %v2051, %v2050
      %v2087 = vpack.c.b16 %v2053, %v2052
      %v2088 = vpack.c.b16 %v2055, %v2054
      %v2089 = vpack.c.b16 %v2057, %v2056
      %v2090 = vpack.c.b16 %v2059, %v2058
      %v2091 = vpack.c.b16 %v2061, %v2060
      %v2092 = vpack.c.b16 %v2063, %v2062
      %v2093 = vpack.c.b16 %v2065, %v2064
      %v2094 = vpack.c.b16 %v2067, %v2066
      %v2095 = vpack.c.b16 %v2069, %v2068
      %v2096 = vpack.c.b16 %v2071, %v2070
      %v2097 = vpack.c.b16 %v2073, %v2072
      %2122 = vmatprep.subr.bf16.mxu0 0
      %2123 = vmatpush1.bf16.msra.mxu0 %v2074
      %2124 = vmatprep.subr.bf16.mxu0 0
      %2125 = vmatpush1.bf16.msra.mxu0 %v2075
      %2126 = vmatprep.subr.bf16.mxu0 0
      %2127 = vmatpush1.bf16.msra.mxu0 %v2076
      %2128 = vmatprep.subr.bf16.mxu0 0
      %2129 = vmatpush1.bf16.msra.mxu0 %v2077
      %2130 = vmatprep.subr.bf16.mxu0 0
      %2131 = vmatpush1.bf16.msra.mxu0 %v2078
      %2132 = vmatprep.subr.bf16.mxu0 0
      %2133 = vmatpush1.bf16.msra.mxu0 %v2079
      %2134 = vmatprep.subr.bf16.mxu0 0
      %2135 = vmatpush1.bf16.msra.mxu0 %v2080
      %2136 = vmatprep.subr.bf16.mxu0 0
      %2137 = vmatpush1.bf16.msra.mxu0 %v2081
      %2138 = vmatprep.subr.bf16.mxu0 0
      %2139 = vmatpush1.bf16.msra.mxu0 %v2082
      %2140 = vmatprep.subr.bf16.mxu0 0
      %2141 = vmatpush1.bf16.msra.mxu0 %v2083
      %2142 = vmatprep.subr.bf16.mxu0 0
      %2143 = vmatpush1.bf16.msra.mxu0 %v2084
      %2144 = vmatprep.subr.bf16.mxu0 0
      %2145 = vmatpush1.bf16.msra.mxu0 %v2085
      %2146 = vmatprep.subr.bf16.mxu0 0
      %2147 = vmatpush1.bf16.msra.mxu0 %v2086
      %2148 = vmatprep.subr.bf16.mxu0 0
      %2149 = vmatpush1.bf16.msra.mxu0 %v2087
      %2150 = vmatprep.subr.bf16.mxu0 0
      %2151 = vmatpush1.bf16.msra.mxu0 %v2088
      %2152 = vmatprep.subr.bf16.mxu0 0
      %2153 = vmatpush1.bf16.msra.mxu0 %v2089
      %2154 = vmatprep.mubr.bf16.mxu0 %v493
      %2155 = vmatmul.mubr.bf16.gmra.mrb[0].mxu0 %v445
      %v2156 = vpop.f32.mrb[0].mxu0
      %v2157 = vadd.f32 %v1916, %v2156
      %v2158 = vpop.f32.mrb[0].mxu0
      %v2159 = vpop.f32.mrb[0].mxu0
      %v2160 = vadd.f32 %v1919, %v2159
      %v2161 = vpop.f32.mrb[0].mxu0
      %2162 = vmatprep.mubr.bf16.mxu0 %v494
      %2163 = vmatmul.mubr.bf16.gmra.mrb[0].mxu0 %v446
      %v2164 = vpop.f32.mrb[0].mxu0
      %v2165 = vadd.f32 %v1924, %v2164
      %v2166 = vpop.f32.mrb[0].mxu0
      %v2167 = vpop.f32.mrb[0].mxu0
      %v2168 = vadd.f32 %v1927, %v2167
      %v2169 = vpop.f32.mrb[0].mxu0
      %2170 = vmatprep.mubr.bf16.mxu0 %v495
      %2171 = vmatmul.mubr.bf16.gmra.mrb[0].mxu0 %v447
      %v2172 = vpop.f32.mrb[0].mxu0
      %v2173 = vadd.f32 %v1932, %v2172
      %v2174 = vpop.f32.mrb[0].mxu0
      %v2175 = vpop.f32.mrb[0].mxu0
      %v2176 = vadd.f32 %v1935, %v2175
      %v2177 = vpop.f32.mrb[0].mxu0
      %2178 = vmatprep.mubr.bf16.mxu0 %v496
      %2179 = vmatmul.mubr.bf16.gmra.mrb[0].mxu0 %v448
      %v2180 = vpop.f32.mrb[0].mxu0
      %v2181 = vadd.f32 %v1940, %v2180
      %v2182 = vpop.f32.mrb[0].mxu0
      %v2183 = vpop.f32.mrb[0].mxu0
      %v2184 = vadd.f32 %v1943, %v2183
      %v2185 = vpop.f32.mrb[0].mxu0
      %2186 = vmatprep.mubr.bf16.mxu0 %v497
      %2187 = vmatmul.mubr.bf16.gmra.mrb[0].mxu0 %v449
      %v2188 = vpop.f32.mrb[0].mxu0
      %v2189 = vadd.f32 %v1948, %v2188
      %v2190 = vpop.f32.mrb[0].mxu0
      %v2191 = vpop.f32.mrb[0].mxu0
      %v2192 = vadd.f32 %v1951, %v2191
      %v2193 = vpop.f32.mrb[0].mxu0
      %2194 = vmatprep.mubr.bf16.mxu0 %v498
      %2195 = vmatmul.mubr.bf16.gmra.mrb[0].mxu0 %v450
      %v2196 = vpop.f32.mrb[0].mxu0
      %v2197 = vadd.f32 %v1956, %v2196
      %v2198 = vpop.f32.mrb[0].mxu0
      %v2199 = vpop.f32.mrb[0].mxu0
      %v2200 = vadd.f32 %v1959, %v2199
      %v2201 = vpop.f32.mrb[0].mxu0
      %2202 = vmatprep.mubr.bf16.mxu0 %v499
      %2203 = vmatmul.mubr.bf16.gmra.mrb[0].mxu0 %v451
      %v2204 = vpop.f32.mrb[0].mxu0
      %v2205 = vadd.f32 %v1964, %v2204
      %v2206 = vpop.f32.mrb[0].mxu0
      %v2207 = vpop.f32.mrb[0].mxu0
      %v2208 = vadd.f32 %v1967, %v2207
      %v2209 = vpop.f32.mrb[0].mxu0
      %2210 = vmatprep.mubr.bf16.mxu0 %v500
      %2211 = vmatmul.mubr.bf16.gmra.mrb[0].mxu0 %v452
      %v2212 = vpop.f32.mrb[0].mxu0
      %v2213 = vadd.f32 %v1972, %v2212
      %v2214 = vpop.f32.mrb[0].mxu0
      %v2215 = vpop.f32.mrb[0].mxu0
      %v2216 = vadd.f32 %v1975, %v2215
      %v2217 = vpop.f32.mrb[0].mxu0
      %2218 = vdwg.mxu0
      %2219 = vmatprep.subr.bf16.mxu0 0
      %2220 = vmatpush1.bf16.msra.mxu0 %v2090
      %2221 = vmatprep.subr.bf16.mxu0 0
      %2222 = vmatpush1.bf16.msra.mxu0 %v2091
      %2223 = vmatprep.subr.bf16.mxu0 0
      %2224 = vmatpush1.bf16.msra.mxu0 %v2092
      %2225 = vmatprep.subr.bf16.mxu0 0
      %2226 = vmatpush1.bf16.msra.mxu0 %v2093
      %2227 = vmatprep.subr.bf16.mxu0 0
      %2228 = vmatpush1.bf16.msra.mxu0 %v2094
      %2229 = vmatprep.subr.bf16.mxu0 0
      %2230 = vmatpush1.bf16.msra.mxu0 %v2095
      %2231 = vmatprep.subr.bf16.mxu0 0
      %2232 = vmatpush1.bf16.msra.mxu0 %v2096
      %2233 = vmatprep.subr.bf16.mxu0 0
      %2234 = vmatpush1.bf16.msra.mxu0 %v2097
      %2235 = vmatprep.subr.bf16.mxu0 0
      %2236 = vmatpush1.bf16.msra.mxu0 0
      %2237 = vmatprep.subr.bf16.mxu0 0
      %2238 = vmatpush1.bf16.msra.mxu0 0
      %2239 = vmatprep.subr.bf16.mxu0 0
      %2240 = vmatpush1.bf16.msra.mxu0 0
      %2241 = vmatprep.subr.bf16.mxu0 0
      %2242 = vmatpush1.bf16.msra.mxu0 0
      %2243 = vmatprep.subr.bf16.mxu0 0
      %2244 = vmatpush1.bf16.msra.mxu0 0
      %2245 = vmatprep.subr.bf16.mxu0 0
      %2246 = vmatpush1.bf16.msra.mxu0 0
      %2247 = vmatprep.subr.bf16.mxu0 0
      %2248 = vmatpush1.bf16.msra.mxu0 0
      %2249 = vmatprep.subr.bf16.mxu0 0
      %2250 = vmatpush1.bf16.msra.mxu0 0
      %2251 = vmatprep.mubr.bf16.mxu0 0
      %2252 = vmatmul.mubr.bf16.gmra.mrb[0].mxu0 %v541
      %v2253 = vpop.f32.mrb[0].mxu0
      %v2254 = vadd.f32 %v2157, %v2253
      %v2255 = vpop.f32.mrb[0].mxu0
      %v2256 = vpop.f32.mrb[0].mxu0
      %v2257 = vadd.f32 %v2160, %v2256
      %v2258 = vpop.f32.mrb[0].mxu0
      %2259 = vmatprep.mubr.bf16.mxu0 0
      %2260 = vmatmul.mubr.bf16.gmra.mrb[0].mxu0 %v542
      %v2261 = vpop.f32.mrb[0].mxu0
      %v2262 = vadd.f32 %v2165, %v2261
      %v2263 = vpop.f32.mrb[0].mxu0
      %v2264 = vpop.f32.mrb[0].mxu0
      %v2265 = vadd.f32 %v2168, %v2264
      %v2266 = vpop.f32.mrb[0].mxu0
      %2267 = vmatprep.mubr.bf16.mxu0 0
      %2268 = vmatmul.mubr.bf16.gmra.mrb[0].mxu0 %v543
      %v2269 = vpop.f32.mrb[0].mxu0
      %v2270 = vadd.f32 %v2173, %v2269
      %v2271 = vpop.f32.mrb[0].mxu0
      %v2272 = vpop.f32.mrb[0].mxu0
      %v2273 = vadd.f32 %v2176, %v2272
      %v2274 = vpop.f32.mrb[0].mxu0
      %2275 = vmatprep.mubr.bf16.mxu0 0
      %2276 = vmatmul.mubr.bf16.gmra.mrb[0].mxu0 %v544
      %v2277 = vpop.f32.mrb[0].mxu0
      %v2278 = vadd.f32 %v2181, %v2277
      %v2279 = vpop.f32.mrb[0].mxu0
      %v2280 = vpop.f32.mrb[0].mxu0
      %v2281 = vadd.f32 %v2184, %v2280
      %v2282 = vpop.f32.mrb[0].mxu0
      %2283 = vmatprep.mubr.bf16.mxu0 0
      %2284 = vmatmul.mubr.bf16.gmra.mrb[0].mxu0 %v545
      %v2285 = vpop.f32.mrb[0].mxu0
      %v2286 = vadd.f32 %v2189, %v2285
      %v2287 = vpop.f32.mrb[0].mxu0
      %v2288 = vpop.f32.mrb[0].mxu0
      %v2289 = vadd.f32 %v2192, %v2288
      %v2290 = vpop.f32.mrb[0].mxu0
      %2291 = vmatprep.mubr.bf16.mxu0 0
      %2292 = vmatmul.mubr.bf16.gmra.mrb[0].mxu0 %v546
      %v2293 = vpop.f32.mrb[0].mxu0
      %v2294 = vadd.f32 %v2197, %v2293
      %v2295 = vpop.f32.mrb[0].mxu0
      %v2296 = vpop.f32.mrb[0].mxu0
      %v2297 = vadd.f32 %v2200, %v2296
      %v2298 = vpop.f32.mrb[0].mxu0
      %2299 = vmatprep.mubr.bf16.mxu0 0
      %2300 = vmatmul.mubr.bf16.gmra.mrb[0].mxu0 %v547
      %v2301 = vpop.f32.mrb[0].mxu0
      %v2302 = vadd.f32 %v2205, %v2301
      %v2303 = vpop.f32.mrb[0].mxu0
      %v2304 = vpop.f32.mrb[0].mxu0
      %v2305 = vadd.f32 %v2208, %v2304
      %v2306 = vpop.f32.mrb[0].mxu0
      %2307 = vmatprep.mubr.bf16.mxu0 0
      %2308 = vmatmul.mubr.bf16.gmra.mrb[0].mxu0 %v548
      %v2309 = vpop.f32.mrb[0].mxu0
      %v2310 = vadd.f32 %v2213, %v2309
      %v2311 = vpop.f32.mrb[0].mxu0
      %v2312 = vpop.f32.mrb[0].mxu0
      %v2313 = vadd.f32 %v2216, %v2312
      %v2314 = vpop.f32.mrb[0].mxu0
      %2315 = vdwg.mxu0
      %s2316 = scalar_lea.vmem %s3, 960
      %v2317 = vld [vmem:[%s2316] sm:$0xf]
      %v2318 = vld [vmem:[%s2316 + $0x4] sm:$0xf]
      %v2319 = vld [vmem:[%s2316 + $0x8] sm:$0xf]
      %v2320 = vld [vmem:[%s2316 + $0xc] sm:$0xf]
      %v2321 = vld [vmem:[%s2316 + $0x10] sm:$0xf]
      %v2322 = vld [vmem:[%s2316 + $0x14] sm:$0xf]
      %v2323 = vld [vmem:[%s2316 + $0x18] sm:$0xf]
      %v2324 = vld [vmem:[%s2316 + $0x1c] sm:$0xf]
      %v2325 = vld [vmem:[%s2316 + $0x20] sm:$0xf]
      %v2326 = vld [vmem:[%s2316 + $0x24] sm:$0xf]
      %v2327 = vld [vmem:[%s2316 + $0x28] sm:$0xf]
      %v2328 = vld [vmem:[%s2316 + $0x2c] sm:$0xf]
      %v2329 = vld [vmem:[%s2316 + $0x30] sm:$0xf]
      %v2330 = vld [vmem:[%s2316 + $0x34] sm:$0xf]
      %v2331 = vld [vmem:[%s2316 + $0x38] sm:$0xf]
      %v2332 = vld [vmem:[%s2316 + $0x3c] sm:$0xf]
      %v2333 = vld [vmem:[%s2316 + $0x40] sm:$0xf]
      %v2334 = vld [vmem:[%s2316 + $0x44] sm:$0xf]
      %v2335 = vld [vmem:[%s2316 + $0x48] sm:$0xf]
      %v2336 = vld [vmem:[%s2316 + $0x4c] sm:$0xf]
      %v2337 = vld [vmem:[%s2316 + $0x50] sm:$0xf]
      %v2338 = vld [vmem:[%s2316 + $0x54] sm:$0xf]
      %v2339 = vld [vmem:[%s2316 + $0x58] sm:$0xf]
      %v2340 = vld [vmem:[%s2316 + $0x5c] sm:$0xf]
      %v2341 = vld [vmem:[%s2316 + $0x60] sm:$0xf]
      %v2342 = vld [vmem:[%s2316 + $0x64] sm:$0xf]
      %v2343 = vld [vmem:[%s2316 + $0x68] sm:$0xf]
      %v2344 = vld [vmem:[%s2316 + $0x6c] sm:$0xf]
      %v2345 = vld [vmem:[%s2316 + $0x70] sm:$0xf]
      %v2346 = vld [vmem:[%s2316 + $0x74] sm:$0xf]
      %v2347 = vld [vmem:[%s2316 + $0x78] sm:$0xf]
      %v2348 = vld [vmem:[%s2316 + $0x7c] sm:$0xf]
      %v2349 = vld [vmem:[%s2316 + $0x80] sm:$0xf]
      %v2350 = vld [vmem:[%s2316 + $0x84] sm:$0xf]
      %v2351 = vld [vmem:[%s2316 + $0x88] sm:$0xf]
      %v2352 = vld [vmem:[%s2316 + $0x8c] sm:$0xf]
      %v2353 = vld [vmem:[%s2316 + $0x90] sm:$0xf]
      %v2354 = vld [vmem:[%s2316 + $0x94] sm:$0xf]
      %v2355 = vld [vmem:[%s2316 + $0x98] sm:$0xf]
      %v2356 = vld [vmem:[%s2316 + $0x9c] sm:$0xf]
      %v2357 = vld [vmem:[%s2316 + $0xa0] sm:$0xf]
      %v2358 = vld [vmem:[%s2316 + $0xa4] sm:$0xf]
      %v2359 = vld [vmem:[%s2316 + $0xa8] sm:$0xf]
      %v2360 = vld [vmem:[%s2316 + $0xac] sm:$0xf]
      %v2361 = vld [vmem:[%s2316 + $0xb0] sm:$0xf]
      %v2362 = vld [vmem:[%s2316 + $0xb4] sm:$0xf]
      %v2363 = vld [vmem:[%s2316 + $0xb8] sm:$0xf]
      %v2364 = vld [vmem:[%s2316 + $0xbc] sm:$0xf]
      %v2413 = vunpack.c.l.b16 %v2317
      %v2414 = vunpack.c.l.b16 %v2318
      %v2415 = vunpack.c.l.b16 %v2319
      %v2416 = vunpack.c.l.b16 %v2320
      %v2417 = vunpack.c.l.b16 %v2321
      %v2418 = vunpack.c.l.b16 %v2322
      %v2419 = vunpack.c.l.b16 %v2323
      %v2420 = vunpack.c.l.b16 %v2324
      %v2421 = vunpack.c.l.b16 %v2325
      %v2422 = vunpack.c.l.b16 %v2326
      %v2423 = vunpack.c.l.b16 %v2327
      %v2424 = vunpack.c.l.b16 %v2328
      %v2425 = vunpack.c.l.b16 %v2329
      %v2426 = vunpack.c.l.b16 %v2330
      %v2427 = vunpack.c.l.b16 %v2331
      %v2428 = vunpack.c.l.b16 %v2332
      %v2429 = vunpack.c.l.b16 %v2333
      %v2430 = vunpack.c.l.b16 %v2334
      %v2431 = vunpack.c.l.b16 %v2335
      %v2432 = vunpack.c.l.b16 %v2336
      %v2433 = vunpack.c.l.b16 %v2337
      %v2434 = vunpack.c.l.b16 %v2338
      %v2435 = vunpack.c.l.b16 %v2339
      %v2436 = vunpack.c.l.b16 %v2340
      %v2437 = vunpack.c.l.b16 %v2341
      %v2438 = vunpack.c.l.b16 %v2342
      %v2439 = vunpack.c.l.b16 %v2343
      %v2440 = vunpack.c.l.b16 %v2344
      %v2441 = vunpack.c.l.b16 %v2345
      %v2442 = vunpack.c.l.b16 %v2346
      %v2443 = vunpack.c.l.b16 %v2347
      %v2444 = vunpack.c.l.b16 %v2348
      %v2445 = vunpack.c.l.b16 %v2349
      %v2446 = vunpack.c.l.b16 %v2350
      %v2447 = vunpack.c.l.b16 %v2351
      %v2448 = vunpack.c.l.b16 %v2352
      %v2449 = vunpack.c.l.b16 %v2353
      %v2450 = vunpack.c.l.b16 %v2354
      %v2451 = vunpack.c.l.b16 %v2355
      %v2452 = vunpack.c.l.b16 %v2356
      %v2453 = vunpack.c.l.b16 %v2357
      %v2454 = vunpack.c.l.b16 %v2358
      %v2455 = vunpack.c.l.b16 %v2359
      %v2456 = vunpack.c.l.b16 %v2360
      %v2457 = vunpack.c.l.b16 %v2361
      %v2458 = vunpack.c.l.b16 %v2362
      %v2459 = vunpack.c.l.b16 %v2363
      %v2460 = vunpack.c.l.b16 %v2364
      %v2461 = vpack.c.b16 %v2414, %v2413
      %v2462 = vpack.c.b16 %v2416, %v2415
      %v2463 = vpack.c.b16 %v2418, %v2417
      %v2464 = vpack.c.b16 %v2420, %v2419
      %v2465 = vpack.c.b16 %v2422, %v2421
      %v2466 = vpack.c.b16 %v2424, %v2423
      %v2467 = vpack.c.b16 %v2426, %v2425
      %v2468 = vpack.c.b16 %v2428, %v2427
      %v2469 = vpack.c.b16 %v2430, %v2429
      %v2470 = vpack.c.b16 %v2432, %v2431
      %v2471 = vpack.c.b16 %v2434, %v2433
      %v2472 = vpack.c.b16 %v2436, %v2435
      %v2473 = vpack.c.b16 %v2438, %v2437
      %v2474 = vpack.c.b16 %v2440, %v2439
      %v2475 = vpack.c.b16 %v2442, %v2441
      %v2476 = vpack.c.b16 %v2444, %v2443
      %v2477 = vpack.c.b16 %v2446, %v2445
      %v2478 = vpack.c.b16 %v2448, %v2447
      %v2479 = vpack.c.b16 %v2450, %v2449
      %v2480 = vpack.c.b16 %v2452, %v2451
      %v2481 = vpack.c.b16 %v2454, %v2453
      %v2482 = vpack.c.b16 %v2456, %v2455
      %v2483 = vpack.c.b16 %v2458, %v2457
      %v2484 = vpack.c.b16 %v2460, %v2459
      %2509 = vmatprep.subr.bf16.mxu0 0
      %2510 = vmatpush1.bf16.msra.mxu0 %v2461
      %2511 = vmatprep.subr.bf16.mxu0 0
      %2512 = vmatpush1.bf16.msra.mxu0 %v2462
      %2513 = vmatprep.subr.bf16.mxu0 0
      %2514 = vmatpush1.bf16.msra.mxu0 %v2463
      %2515 = vmatprep.subr.bf16.mxu0 0
      %2516 = vmatpush1.bf16.msra.mxu0 %v2464
      %2517 = vmatprep.subr.bf16.mxu0 0
      %2518 = vmatpush1.bf16.msra.mxu0 %v2465
      %2519 = vmatprep.subr.bf16.mxu0 0
      %2520 = vmatpush1.bf16.msra.mxu0 %v2466
      %2521 = vmatprep.subr.bf16.mxu0 0
      %2522 = vmatpush1.bf16.msra.mxu0 %v2467
      %2523 = vmatprep.subr.bf16.mxu0 0
      %2524 = vmatpush1.bf16.msra.mxu0 %v2468
      %2525 = vmatprep.subr.bf16.mxu0 0
      %2526 = vmatpush1.bf16.msra.mxu0 %v2469
      %2527 = vmatprep.subr.bf16.mxu0 0
      %2528 = vmatpush1.bf16.msra.mxu0 %v2470
      %2529 = vmatprep.subr.bf16.mxu0 0
      %2530 = vmatpush1.bf16.msra.mxu0 %v2471
      %2531 = vmatprep.subr.bf16.mxu0 0
      %2532 = vmatpush1.bf16.msra.mxu0 %v2472
      %2533 = vmatprep.subr.bf16.mxu0 0
      %2534 = vmatpush1.bf16.msra.mxu0 %v2473
      %2535 = vmatprep.subr.bf16.mxu0 0
      %2536 = vmatpush1.bf16.msra.mxu0 %v2474
      %2537 = vmatprep.subr.bf16.mxu0 0
      %2538 = vmatpush1.bf16.msra.mxu0 %v2475
      %2539 = vmatprep.subr.bf16.mxu0 0
      %2540 = vmatpush1.bf16.msra.mxu0 %v2476
      %2541 = vmatprep.mubr.bf16.mxu0 %v834
      %2542 = vmatmul.mubr.bf16.gmra.mrb[0].mxu0 %v786
      %v2543 = vpop.f32.mrb[0].mxu0
      %v2544 = vadd.f32 0.0, %v2543
      %v2545 = vpop.f32.mrb[0].mxu0
      %v2546 = vpop.f32.mrb[0].mxu0
      %v2547 = vadd.f32 0.0, %v2546
      %v2548 = vpop.f32.mrb[0].mxu0
      %2549 = vmatprep.mubr.bf16.mxu0 %v835
      %2550 = vmatmul.mubr.bf16.gmra.mrb[0].mxu0 %v787
      %v2551 = vpop.f32.mrb[0].mxu0
      %v2552 = vadd.f32 0.0, %v2551
      %v2553 = vpop.f32.mrb[0].mxu0
      %v2554 = vpop.f32.mrb[0].mxu0
      %v2555 = vadd.f32 0.0, %v2554
      %v2556 = vpop.f32.mrb[0].mxu0
      %2557 = vmatprep.mubr.bf16.mxu0 %v836
      %2558 = vmatmul.mubr.bf16.gmra.mrb[0].mxu0 %v788
      %v2559 = vpop.f32.mrb[0].mxu0
      %v2560 = vadd.f32 0.0, %v2559
      %v2561 = vpop.f32.mrb[0].mxu0
      %v2562 = vpop.f32.mrb[0].mxu0
      %v2563 = vadd.f32 0.0, %v2562
      %v2564 = vpop.f32.mrb[0].mxu0
      %2565 = vmatprep.mubr.bf16.mxu0 %v837
      %2566 = vmatmul.mubr.bf16.gmra.mrb[0].mxu0 %v789
      %v2567 = vpop.f32.mrb[0].mxu0
      %v2568 = vadd.f32 0.0, %v2567
      %v2569 = vpop.f32.mrb[0].mxu0
      %v2570 = vpop.f32.mrb[0].mxu0
      %v2571 = vadd.f32 0.0, %v2570
      %v2572 = vpop.f32.mrb[0].mxu0
      %2573 = vmatprep.mubr.bf16.mxu0 %v838
      %2574 = vmatmul.mubr.bf16.gmra.mrb[0].mxu0 %v790
      %v2575 = vpop.f32.mrb[0].mxu0
      %v2576 = vadd.f32 0.0, %v2575
      %v2577 = vpop.f32.mrb[0].mxu0
      %v2578 = vpop.f32.mrb[0].mxu0
      %v2579 = vadd.f32 0.0, %v2578
      %v2580 = vpop.f32.mrb[0].mxu0
      %2581 = vmatprep.mubr.bf16.mxu0 %v839
      %2582 = vmatmul.mubr.bf16.gmra.mrb[0].mxu0 %v791
      %v2583 = vpop.f32.mrb[0].mxu0
      %v2584 = vadd.f32 0.0, %v2583
      %v2585 = vpop.f32.mrb[0].mxu0
      %v2586 = vpop.f32.mrb[0].mxu0
      %v2587 = vadd.f32 0.0, %v2586
      %v2588 = vpop.f32.mrb[0].mxu0
      %2589 = vmatprep.mubr.bf16.mxu0 %v840
      %2590 = vmatmul.mubr.bf16.gmra.mrb[0].mxu0 %v792
      %v2591 = vpop.f32.mrb[0].mxu0
      %v2592 = vadd.f32 0.0, %v2591
      %v2593 = vpop.f32.mrb[0].mxu0
      %v2594 = vpop.f32.mrb[0].mxu0
      %v2595 = vadd.f32 0.0, %v2594
      %v2596 = vpop.f32.mrb[0].mxu0
      %2597 = vmatprep.mubr.bf16.mxu0 %v841
      %2598 = vmatmul.mubr.bf16.gmra.mrb[0].mxu0 %v793
      %v2599 = vpop.f32.mrb[0].mxu0
      %v2600 = vadd.f32 0.0, %v2599
      %v2601 = vpop.f32.mrb[0].mxu0
      %v2602 = vpop.f32.mrb[0].mxu0
      %v2603 = vadd.f32 0.0, %v2602
      %v2604 = vpop.f32.mrb[0].mxu0
      %2605 = vdwg.mxu0
      %2606 = vmatprep.subr.bf16.mxu0 0
      %2607 = vmatpush1.bf16.msra.mxu0 %v2477
      %2608 = vmatprep.subr.bf16.mxu0 0
      %2609 = vmatpush1.bf16.msra.mxu0 %v2478
      %2610 = vmatprep.subr.bf16.mxu0 0
      %2611 = vmatpush1.bf16.msra.mxu0 %v2479
      %2612 = vmatprep.subr.bf16.mxu0 0
      %2613 = vmatpush1.bf16.msra.mxu0 %v2480
      %2614 = vmatprep.subr.bf16.mxu0 0
      %2615 = vmatpush1.bf16.msra.mxu0 %v2481
      %2616 = vmatprep.subr.bf16.mxu0 0
      %2617 = vmatpush1.bf16.msra.mxu0 %v2482
      %2618 = vmatprep.subr.bf16.mxu0 0
      %2619 = vmatpush1.bf16.msra.mxu0 %v2483
      %2620 = vmatprep.subr.bf16.mxu0 0
      %2621 = vmatpush1.bf16.msra.mxu0 %v2484
      %2622 = vmatprep.subr.bf16.mxu0 0
      %2623 = vmatpush1.bf16.msra.mxu0 0
      %2624 = vmatprep.subr.bf16.mxu0 0
      %2625 = vmatpush1.bf16.msra.mxu0 0
      %2626 = vmatprep.subr.bf16.mxu0 0
      %2627 = vmatpush1.bf16.msra.mxu0 0
      %2628 = vmatprep.subr.bf16.mxu0 0
      %2629 = vmatpush1.bf16.msra.mxu0 0
      %2630 = vmatprep.subr.bf16.mxu0 0
      %2631 = vmatpush1.bf16.msra.mxu0 0
      %2632 = vmatprep.subr.bf16.mxu0 0
      %2633 = vmatpush1.bf16.msra.mxu0 0
      %2634 = vmatprep.subr.bf16.mxu0 0
      %2635 = vmatpush1.bf16.msra.mxu0 0
      %2636 = vmatprep.subr.bf16.mxu0 0
      %2637 = vmatpush1.bf16.msra.mxu0 0
      %2638 = vmatprep.mubr.bf16.mxu0 0
      %2639 = vmatmul.mubr.bf16.gmra.mrb[0].mxu0 %v882
      %v2640 = vpop.f32.mrb[0].mxu0
      %v2641 = vadd.f32 %v2544, %v2640
      %v2642 = vpop.f32.mrb[0].mxu0
      %v2643 = vpop.f32.mrb[0].mxu0
      %v2644 = vadd.f32 %v2547, %v2643
      %v2645 = vpop.f32.mrb[0].mxu0
      %2646 = vmatprep.mubr.bf16.mxu0 0
      %2647 = vmatmul.mubr.bf16.gmra.mrb[0].mxu0 %v883
      %v2648 = vpop.f32.mrb[0].mxu0
      %v2649 = vadd.f32 %v2552, %v2648
      %v2650 = vpop.f32.mrb[0].mxu0
      %v2651 = vpop.f32.mrb[0].mxu0
      %v2652 = vadd.f32 %v2555, %v2651
      %v2653 = vpop.f32.mrb[0].mxu0
      %2654 = vmatprep.mubr.bf16.mxu0 0
      %2655 = vmatmul.mubr.bf16.gmra.mrb[0].mxu0 %v884
      %v2656 = vpop.f32.mrb[0].mxu0
      %v2657 = vadd.f32 %v2560, %v2656
      %v2658 = vpop.f32.mrb[0].mxu0
      %v2659 = vpop.f32.mrb[0].mxu0
      %v2660 = vadd.f32 %v2563, %v2659
      %v2661 = vpop.f32.mrb[0].mxu0
      %2662 = vmatprep.mubr.bf16.mxu0 0
      %2663 = vmatmul.mubr.bf16.gmra.mrb[0].mxu0 %v885
      %v2664 = vpop.f32.mrb[0].mxu0
      %v2665 = vadd.f32 %v2568, %v2664
      %v2666 = vpop.f32.mrb[0].mxu0
      %v2667 = vpop.f32.mrb[0].mxu0
      %v2668 = vadd.f32 %v2571, %v2667
      %v2669 = vpop.f32.mrb[0].mxu0
      %2670 = vmatprep.mubr.bf16.mxu0 0
      %2671 = vmatmul.mubr.bf16.gmra.mrb[0].mxu0 %v886
      %v2672 = vpop.f32.mrb[0].mxu0
      %v2673 = vadd.f32 %v2576, %v2672
      %v2674 = vpop.f32.mrb[0].mxu0
      %v2675 = vpop.f32.mrb[0].mxu0
      %v2676 = vadd.f32 %v2579, %v2675
      %v2677 = vpop.f32.mrb[0].mxu0
      %2678 = vmatprep.mubr.bf16.mxu0 0
      %2679 = vmatmul.mubr.bf16.gmra.mrb[0].mxu0 %v887
      %v2680 = vpop.f32.mrb[0].mxu0
      %v2681 = vadd.f32 %v2584, %v2680
      %v2682 = vpop.f32.mrb[0].mxu0
      %v2683 = vpop.f32.mrb[0].mxu0
      %v2684 = vadd.f32 %v2587, %v2683
      %v2685 = vpop.f32.mrb[0].mxu0
      %2686 = vmatprep.mubr.bf16.mxu0 0
      %2687 = vmatmul.mubr.bf16.gmra.mrb[0].mxu0 %v888
      %v2688 = vpop.f32.mrb[0].mxu0
      %v2689 = vadd.f32 %v2592, %v2688
      %v2690 = vpop.f32.mrb[0].mxu0
      %v2691 = vpop.f32.mrb[0].mxu0
      %v2692 = vadd.f32 %v2595, %v2691
      %v2693 = vpop.f32.mrb[0].mxu0
      %2694 = vmatprep.mubr.bf16.mxu0 0
      %2695 = vmatmul.mubr.bf16.gmra.mrb[0].mxu0 %v889
      %v2696 = vpop.f32.mrb[0].mxu0
      %v2697 = vadd.f32 %v2600, %v2696
      %v2698 = vpop.f32.mrb[0].mxu0
      %v2699 = vpop.f32.mrb[0].mxu0
      %v2700 = vadd.f32 %v2603, %v2699
      %v2701 = vpop.f32.mrb[0].mxu0
      %2702 = vdwg.mxu0
      %v2751 = vunpack.c.l.b16 %v655
      %v2752 = vunpack.c.l.b16 %v656
      %v2753 = vunpack.c.l.b16 %v657
      %v2754 = vunpack.c.l.b16 %v658
      %v2755 = vunpack.c.l.b16 %v659
      %v2756 = vunpack.c.l.b16 %v660
      %v2757 = vunpack.c.l.b16 %v661
      %v2758 = vunpack.c.l.b16 %v662
      %v2759 = vunpack.c.l.b16 %v663
      %v2760 = vunpack.c.l.b16 %v664
      %v2761 = vunpack.c.l.b16 %v665
      %v2762 = vunpack.c.l.b16 %v666
      %v2763 = vunpack.c.l.b16 %v667
      %v2764 = vunpack.c.l.b16 %v668
      %v2765 = vunpack.c.l.b16 %v669
      %v2766 = vunpack.c.l.b16 %v670
      %v2767 = vunpack.c.l.b16 %v671
      %v2768 = vunpack.c.l.b16 %v672
      %v2769 = vunpack.c.l.b16 %v673
      %v2770 = vunpack.c.l.b16 %v674
      %v2771 = vunpack.c.l.b16 %v675
      %v2772 = vunpack.c.l.b16 %v676
      %v2773 = vunpack.c.l.b16 %v677
      %v2774 = vunpack.c.l.b16 %v678
      %v2775 = vunpack.c.l.b16 %v679
      %v2776 = vunpack.c.l.b16 %v680
      %v2777 = vunpack.c.l.b16 %v681
      %v2778 = vunpack.c.l.b16 %v682
      %v2779 = vunpack.c.l.b16 %v683
      %v2780 = vunpack.c.l.b16 %v684
      %v2781 = vunpack.c.l.b16 %v685
      %v2782 = vunpack.c.l.b16 %v686
      %v2783 = vunpack.c.l.b16 %v687
      %v2784 = vunpack.c.l.b16 %v688
      %v2785 = vunpack.c.l.b16 %v689
      %v2786 = vunpack.c.l.b16 %v690
      %v2787 = vunpack.c.l.b16 %v691
      %v2788 = vunpack.c.l.b16 %v692
      %v2789 = vunpack.c.l.b16 %v693
      %v2790 = vunpack.c.l.b16 %v694
      %v2791 = vunpack.c.l.b16 %v695
      %v2792 = vunpack.c.l.b16 %v696
      %v2793 = vunpack.c.l.b16 %v697
      %v2794 = vunpack.c.l.b16 %v698
      %v2795 = vunpack.c.l.b16 %v699
      %v2796 = vunpack.c.l.b16 %v700
      %v2797 = vunpack.c.l.b16 %v701
      %v2798 = vunpack.c.l.b16 %v702
      %v2799 = vpack.c.b16 %v2752, %v2751
      %v2800 = vpack.c.b16 %v2754, %v2753
      %v2801 = vpack.c.b16 %v2756, %v2755
      %v2802 = vpack.c.b16 %v2758, %v2757
      %v2803 = vpack.c.b16 %v2760, %v2759
      %v2804 = vpack.c.b16 %v2762, %v2761
      %v2805 = vpack.c.b16 %v2764, %v2763
      %v2806 = vpack.c.b16 %v2766, %v2765
      %v2807 = vpack.c.b16 %v2768, %v2767
      %v2808 = vpack.c.b16 %v2770, %v2769
      %v2809 = vpack.c.b16 %v2772, %v2771
      %v2810 = vpack.c.b16 %v2774, %v2773
      %v2811 = vpack.c.b16 %v2776, %v2775
      %v2812 = vpack.c.b16 %v2778, %v2777
      %v2813 = vpack.c.b16 %v2780, %v2779
      %v2814 = vpack.c.b16 %v2782, %v2781
      %v2815 = vpack.c.b16 %v2784, %v2783
      %v2816 = vpack.c.b16 %v2786, %v2785
      %v2817 = vpack.c.b16 %v2788, %v2787
      %v2818 = vpack.c.b16 %v2790, %v2789
      %v2819 = vpack.c.b16 %v2792, %v2791
      %v2820 = vpack.c.b16 %v2794, %v2793
      %v2821 = vpack.c.b16 %v2796, %v2795
      %v2822 = vpack.c.b16 %v2798, %v2797
      %2847 = vmatprep.subr.bf16.mxu0 0
      %2848 = vmatpush1.bf16.msra.mxu0 %v2799
      %2849 = vmatprep.subr.bf16.mxu0 0
      %2850 = vmatpush1.bf16.msra.mxu0 %v2800
      %2851 = vmatprep.subr.bf16.mxu0 0
      %2852 = vmatpush1.bf16.msra.mxu0 %v2801
      %2853 = vmatprep.subr.bf16.mxu0 0
      %2854 = vmatpush1.bf16.msra.mxu0 %v2802
      %2855 = vmatprep.subr.bf16.mxu0 0
      %2856 = vmatpush1.bf16.msra.mxu0 %v2803
      %2857 = vmatprep.subr.bf16.mxu0 0
      %2858 = vmatpush1.bf16.msra.mxu0 %v2804
      %2859 = vmatprep.subr.bf16.mxu0 0
      %2860 = vmatpush1.bf16.msra.mxu0 %v2805
      %2861 = vmatprep.subr.bf16.mxu0 0
      %2862 = vmatpush1.bf16.msra.mxu0 %v2806
      %2863 = vmatprep.subr.bf16.mxu0 0
      %2864 = vmatpush1.bf16.msra.mxu0 %v2807
      %2865 = vmatprep.subr.bf16.mxu0 0
      %2866 = vmatpush1.bf16.msra.mxu0 %v2808
      %2867 = vmatprep.subr.bf16.mxu0 0
      %2868 = vmatpush1.bf16.msra.mxu0 %v2809
      %2869 = vmatprep.subr.bf16.mxu0 0
      %2870 = vmatpush1.bf16.msra.mxu0 %v2810
      %2871 = vmatprep.subr.bf16.mxu0 0
      %2872 = vmatpush1.bf16.msra.mxu0 %v2811
      %2873 = vmatprep.subr.bf16.mxu0 0
      %2874 = vmatpush1.bf16.msra.mxu0 %v2812
      %2875 = vmatprep.subr.bf16.mxu0 0
      %2876 = vmatpush1.bf16.msra.mxu0 %v2813
      %2877 = vmatprep.subr.bf16.mxu0 0
      %2878 = vmatpush1.bf16.msra.mxu0 %v2814
      %2879 = vmatprep.mubr.bf16.mxu0 %v493
      %2880 = vmatmul.mubr.bf16.gmra.mrb[0].mxu0 %v445
      %v2881 = vpop.f32.mrb[0].mxu0
      %v2882 = vadd.f32 %v2641, %v2881
      %v2883 = vpop.f32.mrb[0].mxu0
      %v2884 = vpop.f32.mrb[0].mxu0
      %v2885 = vadd.f32 %v2644, %v2884
      %v2886 = vpop.f32.mrb[0].mxu0
      %2887 = vmatprep.mubr.bf16.mxu0 %v494
      %2888 = vmatmul.mubr.bf16.gmra.mrb[0].mxu0 %v446
      %v2889 = vpop.f32.mrb[0].mxu0
      %v2890 = vadd.f32 %v2649, %v2889
      %v2891 = vpop.f32.mrb[0].mxu0
      %v2892 = vpop.f32.mrb[0].mxu0
      %v2893 = vadd.f32 %v2652, %v2892
      %v2894 = vpop.f32.mrb[0].mxu0
      %2895 = vmatprep.mubr.bf16.mxu0 %v495
      %2896 = vmatmul.mubr.bf16.gmra.mrb[0].mxu0 %v447
      %v2897 = vpop.f32.mrb[0].mxu0
      %v2898 = vadd.f32 %v2657, %v2897
      %v2899 = vpop.f32.mrb[0].mxu0
      %v2900 = vpop.f32.mrb[0].mxu0
      %v2901 = vadd.f32 %v2660, %v2900
      %v2902 = vpop.f32.mrb[0].mxu0
      %2903 = vmatprep.mubr.bf16.mxu0 %v496
      %2904 = vmatmul.mubr.bf16.gmra.mrb[0].mxu0 %v448
      %v2905 = vpop.f32.mrb[0].mxu0
      %v2906 = vadd.f32 %v2665, %v2905
      %v2907 = vpop.f32.mrb[0].mxu0
      %v2908 = vpop.f32.mrb[0].mxu0
      %v2909 = vadd.f32 %v2668, %v2908
      %v2910 = vpop.f32.mrb[0].mxu0
      %2911 = vmatprep.mubr.bf16.mxu0 %v497
      %2912 = vmatmul.mubr.bf16.gmra.mrb[0].mxu0 %v449
      %v2913 = vpop.f32.mrb[0].mxu0
      %v2914 = vadd.f32 %v2673, %v2913
      %v2915 = vpop.f32.mrb[0].mxu0
      %v2916 = vpop.f32.mrb[0].mxu0
      %v2917 = vadd.f32 %v2676, %v2916
      %v2918 = vpop.f32.mrb[0].mxu0
      %2919 = vmatprep.mubr.bf16.mxu0 %v498
      %2920 = vmatmul.mubr.bf16.gmra.mrb[0].mxu0 %v450
      %v2921 = vpop.f32.mrb[0].mxu0
      %v2922 = vadd.f32 %v2681, %v2921
      %v2923 = vpop.f32.mrb[0].mxu0
      %v2924 = vpop.f32.mrb[0].mxu0
      %v2925 = vadd.f32 %v2684, %v2924
      %v2926 = vpop.f32.mrb[0].mxu0
      %2927 = vmatprep.mubr.bf16.mxu0 %v499
      %2928 = vmatmul.mubr.bf16.gmra.mrb[0].mxu0 %v451
      %v2929 = vpop.f32.mrb[0].mxu0
      %v2930 = vadd.f32 %v2689, %v2929
      %v2931 = vpop.f32.mrb[0].mxu0
      %v2932 = vpop.f32.mrb[0].mxu0
      %v2933 = vadd.f32 %v2692, %v2932
      %v2934 = vpop.f32.mrb[0].mxu0
      %2935 = vmatprep.mubr.bf16.mxu0 %v500
      %2936 = vmatmul.mubr.bf16.gmra.mrb[0].mxu0 %v452
      %v2937 = vpop.f32.mrb[0].mxu0
      %v2938 = vadd.f32 %v2697, %v2937
      %v2939 = vpop.f32.mrb[0].mxu0
      %v2940 = vpop.f32.mrb[0].mxu0
      %v2941 = vadd.f32 %v2700, %v2940
      %v2942 = vpop.f32.mrb[0].mxu0
      %2943 = vdwg.mxu0
      %2944 = vmatprep.subr.bf16.mxu0 0
      %2945 = vmatpush1.bf16.msra.mxu0 %v2815
      %2946 = vmatprep.subr.bf16.mxu0 0
      %2947 = vmatpush1.bf16.msra.mxu0 %v2816
      %2948 = vmatprep.subr.bf16.mxu0 0
      %2949 = vmatpush1.bf16.msra.mxu0 %v2817
      %2950 = vmatprep.subr.bf16.mxu0 0
      %2951 = vmatpush1.bf16.msra.mxu0 %v2818
      %2952 = vmatprep.subr.bf16.mxu0 0
      %2953 = vmatpush1.bf16.msra.mxu0 %v2819
      %2954 = vmatprep.subr.bf16.mxu0 0
      %2955 = vmatpush1.bf16.msra.mxu0 %v2820
      %2956 = vmatprep.subr.bf16.mxu0 0
      %2957 = vmatpush1.bf16.msra.mxu0 %v2821
      %2958 = vmatprep.subr.bf16.mxu0 0
      %2959 = vmatpush1.bf16.msra.mxu0 %v2822
      %2960 = vmatprep.subr.bf16.mxu0 0
      %2961 = vmatpush1.bf16.msra.mxu0 0
      %2962 = vmatprep.subr.bf16.mxu0 0
      %2963 = vmatpush1.bf16.msra.mxu0 0
      %2964 = vmatprep.subr.bf16.mxu0 0
      %2965 = vmatpush1.bf16.msra.mxu0 0
      %2966 = vmatprep.subr.bf16.mxu0 0
      %2967 = vmatpush1.bf16.msra.mxu0 0
      %2968 = vmatprep.subr.bf16.mxu0 0
      %2969 = vmatpush1.bf16.msra.mxu0 0
      %2970 = vmatprep.subr.bf16.mxu0 0
      %2971 = vmatpush1.bf16.msra.mxu0 0
      %2972 = vmatprep.subr.bf16.mxu0 0
      %2973 = vmatpush1.bf16.msra.mxu0 0
      %2974 = vmatprep.subr.bf16.mxu0 0
      %2975 = vmatpush1.bf16.msra.mxu0 0
      %2976 = vmatprep.mubr.bf16.mxu0 0
      %2977 = vmatmul.mubr.bf16.gmra.mrb[0].mxu0 %v541
      %v2978 = vpop.f32.mrb[0].mxu0
      %v2979 = vadd.f32 %v2882, %v2978
      %v2980 = vpop.f32.mrb[0].mxu0
      %v2981 = vpop.f32.mrb[0].mxu0
      %v2982 = vadd.f32 %v2885, %v2981
      %v2983 = vpop.f32.mrb[0].mxu0
      %2984 = vmatprep.mubr.bf16.mxu0 0
      %2985 = vmatmul.mubr.bf16.gmra.mrb[0].mxu0 %v542
      %v2986 = vpop.f32.mrb[0].mxu0
      %v2987 = vadd.f32 %v2890, %v2986
      %v2988 = vpop.f32.mrb[0].mxu0
      %v2989 = vpop.f32.mrb[0].mxu0
      %v2990 = vadd.f32 %v2893, %v2989
      %v2991 = vpop.f32.mrb[0].mxu0
      %2992 = vmatprep.mubr.bf16.mxu0 0
      %2993 = vmatmul.mubr.bf16.gmra.mrb[0].mxu0 %v543
      %v2994 = vpop.f32.mrb[0].mxu0
      %v2995 = vadd.f32 %v2898, %v2994
      %v2996 = vpop.f32.mrb[0].mxu0
      %v2997 = vpop.f32.mrb[0].mxu0
      %v2998 = vadd.f32 %v2901, %v2997
      %v2999 = vpop.f32.mrb[0].mxu0
      %3000 = vmatprep.mubr.bf16.mxu0 0
      %3001 = vmatmul.mubr.bf16.gmra.mrb[0].mxu0 %v544
      %v3002 = vpop.f32.mrb[0].mxu0
      %v3003 = vadd.f32 %v2906, %v3002
      %v3004 = vpop.f32.mrb[0].mxu0
      %v3005 = vpop.f32.mrb[0].mxu0
      %v3006 = vadd.f32 %v2909, %v3005
      %v3007 = vpop.f32.mrb[0].mxu0
      %3008 = vmatprep.mubr.bf16.mxu0 0
      %3009 = vmatmul.mubr.bf16.gmra.mrb[0].mxu0 %v545
      %v3010 = vpop.f32.mrb[0].mxu0
      %v3011 = vadd.f32 %v2914, %v3010
      %v3012 = vpop.f32.mrb[0].mxu0
      %v3013 = vpop.f32.mrb[0].mxu0
      %v3014 = vadd.f32 %v2917, %v3013
      %v3015 = vpop.f32.mrb[0].mxu0
      %3016 = vmatprep.mubr.bf16.mxu0 0
      %3017 = vmatmul.mubr.bf16.gmra.mrb[0].mxu0 %v546
      %v3018 = vpop.f32.mrb[0].mxu0
      %v3019 = vadd.f32 %v2922, %v3018
      %v3020 = vpop.f32.mrb[0].mxu0
      %v3021 = vpop.f32.mrb[0].mxu0
      %v3022 = vadd.f32 %v2925, %v3021
      %v3023 = vpop.f32.mrb[0].mxu0
      %3024 = vmatprep.mubr.bf16.mxu0 0
      %3025 = vmatmul.mubr.bf16.gmra.mrb[0].mxu0 %v547
      %v3026 = vpop.f32.mrb[0].mxu0
      %v3027 = vadd.f32 %v2930, %v3026
      %v3028 = vpop.f32.mrb[0].mxu0
      %v3029 = vpop.f32.mrb[0].mxu0
      %v3030 = vadd.f32 %v2933, %v3029
      %v3031 = vpop.f32.mrb[0].mxu0
      %3032 = vmatprep.mubr.bf16.mxu0 0
      %3033 = vmatmul.mubr.bf16.gmra.mrb[0].mxu0 %v548
      %v3034 = vpop.f32.mrb[0].mxu0
      %v3035 = vadd.f32 %v2938, %v3034
      %v3036 = vpop.f32.mrb[0].mxu0
      %v3037 = vpop.f32.mrb[0].mxu0
      %v3038 = vadd.f32 %v2941, %v3037
      %v3039 = vpop.f32.mrb[0].mxu0
      %3040 = vdwg.mxu0
      %s3041 = scalar_lea.vmem %s324, 16
      %v3042 = vld [vmem:[%s3041] sm:$0xf]
      %v3043 = vld [vmem:[%s3041 + $0x4] sm:$0xf]
      %v3044 = vld [vmem:[%s3041 + $0x8] sm:$0xf]
      %v3045 = vld [vmem:[%s3041 + $0xc] sm:$0xf]
      %v3046 = vld [vmem:[%s3041 + $0x10] sm:$0xf]
      %v3047 = vld [vmem:[%s3041 + $0x14] sm:$0xf]
      %v3048 = vld [vmem:[%s3041 + $0x18] sm:$0xf]
      %v3049 = vld [vmem:[%s3041 + $0x1c] sm:$0xf]
      %v3050 = vld [vmem:[%s3041 + $0x20] sm:$0xf]
      %v3051 = vld [vmem:[%s3041 + $0x24] sm:$0xf]
      %v3052 = vld [vmem:[%s3041 + $0x28] sm:$0xf]
      %v3053 = vld [vmem:[%s3041 + $0x2c] sm:$0xf]
      %v3054 = vld [vmem:[%s3041 + $0x30] sm:$0xf]
      %v3055 = vld [vmem:[%s3041 + $0x34] sm:$0xf]
      %v3056 = vld [vmem:[%s3041 + $0x38] sm:$0xf]
      %v3057 = vld [vmem:[%s3041 + $0x3c] sm:$0xf]
      %s3058 = scalar_lea.vmem %s334, 16
      %v3059 = vld [vmem:[%s3058] sm:$0xf]
      %v3060 = vld [vmem:[%s3058 + $0x4] sm:$0xf]
      %v3061 = vld [vmem:[%s3058 + $0x8] sm:$0xf]
      %v3062 = vld [vmem:[%s3058 + $0xc] sm:$0xf]
      %v3063 = vld [vmem:[%s3058 + $0x10] sm:$0xf]
      %v3064 = vld [vmem:[%s3058 + $0x14] sm:$0xf]
      %v3065 = vld [vmem:[%s3058 + $0x18] sm:$0xf]
      %v3066 = vld [vmem:[%s3058 + $0x1c] sm:$0xf]
      %v3067 = vld [vmem:[%s3058 + $0x20] sm:$0xf]
      %v3068 = vld [vmem:[%s3058 + $0x24] sm:$0xf]
      %v3069 = vld [vmem:[%s3058 + $0x28] sm:$0xf]
      %v3070 = vld [vmem:[%s3058 + $0x2c] sm:$0xf]
      %v3071 = vld [vmem:[%s3058 + $0x30] sm:$0xf]
      %v3072 = vld [vmem:[%s3058 + $0x34] sm:$0xf]
      %v3073 = vld [vmem:[%s3058 + $0x38] sm:$0xf]
      %v3074 = vld [vmem:[%s3058 + $0x3c] sm:$0xf]
      %s3075 = scalar_lea.vmem %s345, 16
      %v3076 = vld [vmem:[%s3075] sm:$0xf]
      %v3077 = vld [vmem:[%s3075 + $0x4] sm:$0xf]
      %v3078 = vld [vmem:[%s3075 + $0x8] sm:$0xf]
      %v3079 = vld [vmem:[%s3075 + $0xc] sm:$0xf]
      %v3080 = vld [vmem:[%s3075 + $0x10] sm:$0xf]
      %v3081 = vld [vmem:[%s3075 + $0x14] sm:$0xf]
      %v3082 = vld [vmem:[%s3075 + $0x18] sm:$0xf]
      %v3083 = vld [vmem:[%s3075 + $0x1c] sm:$0xf]
      %v3084 = vld [vmem:[%s3075 + $0x20] sm:$0xf]
      %v3085 = vld [vmem:[%s3075 + $0x24] sm:$0xf]
      %v3086 = vld [vmem:[%s3075 + $0x28] sm:$0xf]
      %v3087 = vld [vmem:[%s3075 + $0x2c] sm:$0xf]
      %v3088 = vld [vmem:[%s3075 + $0x30] sm:$0xf]
      %v3089 = vld [vmem:[%s3075 + $0x34] sm:$0xf]
      %v3090 = vld [vmem:[%s3075 + $0x38] sm:$0xf]
      %v3091 = vld [vmem:[%s3075 + $0x3c] sm:$0xf]
      %v3108 = vunpack.c.l.b16 %v3042
      %v3109 = vunpack.c.l.b16 %v3043
      %v3110 = vunpack.c.l.b16 %v3044
      %v3111 = vunpack.c.l.b16 %v3045
      %v3112 = vunpack.c.l.b16 %v3046
      %v3113 = vunpack.c.l.b16 %v3047
      %v3114 = vunpack.c.l.b16 %v3048
      %v3115 = vunpack.c.l.b16 %v3049
      %v3116 = vunpack.c.l.b16 %v3050
      %v3117 = vunpack.c.l.b16 %v3051
      %v3118 = vunpack.c.l.b16 %v3052
      %v3119 = vunpack.c.l.b16 %v3053
      %v3120 = vunpack.c.l.b16 %v3054
      %v3121 = vunpack.c.l.b16 %v3055
      %v3122 = vunpack.c.l.b16 %v3056
      %v3123 = vunpack.c.l.b16 %v3057
      %v3124 = vpack.c.b16 %v3109, %v3108
      %v3125 = vpack.c.b16 %v3111, %v3110
      %v3126 = vpack.c.b16 %v3113, %v3112
      %v3127 = vpack.c.b16 %v3115, %v3114
      %v3128 = vpack.c.b16 %v3117, %v3116
      %v3129 = vpack.c.b16 %v3119, %v3118
      %v3130 = vpack.c.b16 %v3121, %v3120
      %v3131 = vpack.c.b16 %v3123, %v3122
      %v3156 = vunpack.c.l.b16 %v3059
      %v3157 = vunpack.c.l.b16 %v3060
      %v3158 = vunpack.c.l.b16 %v3061
      %v3159 = vunpack.c.l.b16 %v3062
      %v3160 = vunpack.c.l.b16 %v3063
      %v3161 = vunpack.c.l.b16 %v3064
      %v3162 = vunpack.c.l.b16 %v3065
      %v3163 = vunpack.c.l.b16 %v3066
      %v3164 = vunpack.c.l.b16 %v3067
      %v3165 = vunpack.c.l.b16 %v3068
      %v3166 = vunpack.c.l.b16 %v3069
      %v3167 = vunpack.c.l.b16 %v3070
      %v3168 = vunpack.c.l.b16 %v3071
      %v3169 = vunpack.c.l.b16 %v3072
      %v3170 = vunpack.c.l.b16 %v3073
      %v3171 = vunpack.c.l.b16 %v3074
      %v3172 = vpack.c.b16 %v3157, %v3156
      %v3173 = vpack.c.b16 %v3159, %v3158
      %v3174 = vpack.c.b16 %v3161, %v3160
      %v3175 = vpack.c.b16 %v3163, %v3162
      %v3176 = vpack.c.b16 %v3165, %v3164
      %v3177 = vpack.c.b16 %v3167, %v3166
      %v3178 = vpack.c.b16 %v3169, %v3168
      %v3179 = vpack.c.b16 %v3171, %v3170
      %v3204 = vunpack.c.l.b16 %v3076
      %v3205 = vunpack.c.l.b16 %v3077
      %v3206 = vunpack.c.l.b16 %v3078
      %v3207 = vunpack.c.l.b16 %v3079
      %v3208 = vunpack.c.l.b16 %v3080
      %v3209 = vunpack.c.l.b16 %v3081
      %v3210 = vunpack.c.l.b16 %v3082
      %v3211 = vunpack.c.l.b16 %v3083
      %v3212 = vunpack.c.l.b16 %v3084
      %v3213 = vunpack.c.l.b16 %v3085
      %v3214 = vunpack.c.l.b16 %v3086
      %v3215 = vunpack.c.l.b16 %v3087
      %v3216 = vunpack.c.l.b16 %v3088
      %v3217 = vunpack.c.l.b16 %v3089
      %v3218 = vunpack.c.l.b16 %v3090
      %v3219 = vunpack.c.l.b16 %v3091
      %v3220 = vpack.c.b16 %v3205, %v3204
      %v3221 = vpack.c.b16 %v3207, %v3206
      %v3222 = vpack.c.b16 %v3209, %v3208
      %v3223 = vpack.c.b16 %v3211, %v3210
      %v3224 = vpack.c.b16 %v3213, %v3212
      %v3225 = vpack.c.b16 %v3215, %v3214
      %v3226 = vpack.c.b16 %v3217, %v3216
      %v3227 = vpack.c.b16 %v3219, %v3218
      %s3236 = scalar_lea.vmem %s3, 1152
      %v3237 = vld [vmem:[%s3236] sm:$0xf]
      %v3238 = vld [vmem:[%s3236 + $0x4] sm:$0xf]
      %v3239 = vld [vmem:[%s3236 + $0x8] sm:$0xf]
      %v3240 = vld [vmem:[%s3236 + $0xc] sm:$0xf]
      %v3241 = vld [vmem:[%s3236 + $0x10] sm:$0xf]
      %v3242 = vld [vmem:[%s3236 + $0x14] sm:$0xf]
      %v3243 = vld [vmem:[%s3236 + $0x18] sm:$0xf]
      %v3244 = vld [vmem:[%s3236 + $0x1c] sm:$0xf]
      %v3245 = vld [vmem:[%s3236 + $0x20] sm:$0xf]
      %v3246 = vld [vmem:[%s3236 + $0x24] sm:$0xf]
      %v3247 = vld [vmem:[%s3236 + $0x28] sm:$0xf]
      %v3248 = vld [vmem:[%s3236 + $0x2c] sm:$0xf]
      %v3249 = vld [vmem:[%s3236 + $0x30] sm:$0xf]
      %v3250 = vld [vmem:[%s3236 + $0x34] sm:$0xf]
      %v3251 = vld [vmem:[%s3236 + $0x38] sm:$0xf]
      %v3252 = vld [vmem:[%s3236 + $0x3c] sm:$0xf]
      %v3253 = vld [vmem:[%s3236 + $0x40] sm:$0xf]
      %v3254 = vld [vmem:[%s3236 + $0x44] sm:$0xf]
      %v3255 = vld [vmem:[%s3236 + $0x48] sm:$0xf]
      %v3256 = vld [vmem:[%s3236 + $0x4c] sm:$0xf]
      %v3257 = vld [vmem:[%s3236 + $0x50] sm:$0xf]
      %v3258 = vld [vmem:[%s3236 + $0x54] sm:$0xf]
      %v3259 = vld [vmem:[%s3236 + $0x58] sm:$0xf]
      %v3260 = vld [vmem:[%s3236 + $0x5c] sm:$0xf]
      %v3261 = vld [vmem:[%s3236 + $0x60] sm:$0xf]
      %v3262 = vld [vmem:[%s3236 + $0x64] sm:$0xf]
      %v3263 = vld [vmem:[%s3236 + $0x68] sm:$0xf]
      %v3264 = vld [vmem:[%s3236 + $0x6c] sm:$0xf]
      %v3265 = vld [vmem:[%s3236 + $0x70] sm:$0xf]
      %v3266 = vld [vmem:[%s3236 + $0x74] sm:$0xf]
      %v3267 = vld [vmem:[%s3236 + $0x78] sm:$0xf]
      %v3268 = vld [vmem:[%s3236 + $0x7c] sm:$0xf]
      %v3269 = vld [vmem:[%s3236 + $0x80] sm:$0xf]
      %v3270 = vld [vmem:[%s3236 + $0x84] sm:$0xf]
      %v3271 = vld [vmem:[%s3236 + $0x88] sm:$0xf]
      %v3272 = vld [vmem:[%s3236 + $0x8c] sm:$0xf]
      %v3273 = vld [vmem:[%s3236 + $0x90] sm:$0xf]
      %v3274 = vld [vmem:[%s3236 + $0x94] sm:$0xf]
      %v3275 = vld [vmem:[%s3236 + $0x98] sm:$0xf]
      %v3276 = vld [vmem:[%s3236 + $0x9c] sm:$0xf]
      %v3277 = vld [vmem:[%s3236 + $0xa0] sm:$0xf]
      %v3278 = vld [vmem:[%s3236 + $0xa4] sm:$0xf]
      %v3279 = vld [vmem:[%s3236 + $0xa8] sm:$0xf]
      %v3280 = vld [vmem:[%s3236 + $0xac] sm:$0xf]
      %v3281 = vld [vmem:[%s3236 + $0xb0] sm:$0xf]
      %v3282 = vld [vmem:[%s3236 + $0xb4] sm:$0xf]
      %v3283 = vld [vmem:[%s3236 + $0xb8] sm:$0xf]
      %v3284 = vld [vmem:[%s3236 + $0xbc] sm:$0xf]
      %v3333 = vunpack.c.l.b16 %v3237
      %v3334 = vunpack.c.l.b16 %v3238
      %v3335 = vunpack.c.l.b16 %v3239
      %v3336 = vunpack.c.l.b16 %v3240
      %v3337 = vunpack.c.l.b16 %v3241
      %v3338 = vunpack.c.l.b16 %v3242
      %v3339 = vunpack.c.l.b16 %v3243
      %v3340 = vunpack.c.l.b16 %v3244
      %v3341 = vunpack.c.l.b16 %v3245
      %v3342 = vunpack.c.l.b16 %v3246
      %v3343 = vunpack.c.l.b16 %v3247
      %v3344 = vunpack.c.l.b16 %v3248
      %v3345 = vunpack.c.l.b16 %v3249
      %v3346 = vunpack.c.l.b16 %v3250
      %v3347 = vunpack.c.l.b16 %v3251
      %v3348 = vunpack.c.l.b16 %v3252
      %v3349 = vunpack.c.l.b16 %v3253
      %v3350 = vunpack.c.l.b16 %v3254
      %v3351 = vunpack.c.l.b16 %v3255
      %v3352 = vunpack.c.l.b16 %v3256
      %v3353 = vunpack.c.l.b16 %v3257
      %v3354 = vunpack.c.l.b16 %v3258
      %v3355 = vunpack.c.l.b16 %v3259
      %v3356 = vunpack.c.l.b16 %v3260
      %v3357 = vunpack.c.l.b16 %v3261
      %v3358 = vunpack.c.l.b16 %v3262
      %v3359 = vunpack.c.l.b16 %v3263
      %v3360 = vunpack.c.l.b16 %v3264
      %v3361 = vunpack.c.l.b16 %v3265
      %v3362 = vunpack.c.l.b16 %v3266
      %v3363 = vunpack.c.l.b16 %v3267
      %v3364 = vunpack.c.l.b16 %v3268
      %v3365 = vunpack.c.l.b16 %v3269
      %v3366 = vunpack.c.l.b16 %v3270
      %v3367 = vunpack.c.l.b16 %v3271
      %v3368 = vunpack.c.l.b16 %v3272
      %v3369 = vunpack.c.l.b16 %v3273
      %v3370 = vunpack.c.l.b16 %v3274
      %v3371 = vunpack.c.l.b16 %v3275
      %v3372 = vunpack.c.l.b16 %v3276
      %v3373 = vunpack.c.l.b16 %v3277
      %v3374 = vunpack.c.l.b16 %v3278
      %v3375 = vunpack.c.l.b16 %v3279
      %v3376 = vunpack.c.l.b16 %v3280
      %v3377 = vunpack.c.l.b16 %v3281
      %v3378 = vunpack.c.l.b16 %v3282
      %v3379 = vunpack.c.l.b16 %v3283
      %v3380 = vunpack.c.l.b16 %v3284
      %v3381 = vpack.c.b16 %v3334, %v3333
      %v3382 = vpack.c.b16 %v3336, %v3335
      %v3383 = vpack.c.b16 %v3338, %v3337
      %v3384 = vpack.c.b16 %v3340, %v3339
      %v3385 = vpack.c.b16 %v3342, %v3341
      %v3386 = vpack.c.b16 %v3344, %v3343
      %v3387 = vpack.c.b16 %v3346, %v3345
      %v3388 = vpack.c.b16 %v3348, %v3347
      %v3389 = vpack.c.b16 %v3350, %v3349
      %v3390 = vpack.c.b16 %v3352, %v3351
      %v3391 = vpack.c.b16 %v3354, %v3353
      %v3392 = vpack.c.b16 %v3356, %v3355
      %v3393 = vpack.c.b16 %v3358, %v3357
      %v3394 = vpack.c.b16 %v3360, %v3359
      %v3395 = vpack.c.b16 %v3362, %v3361
      %v3396 = vpack.c.b16 %v3364, %v3363
      %v3397 = vpack.c.b16 %v3366, %v3365
      %v3398 = vpack.c.b16 %v3368, %v3367
      %v3399 = vpack.c.b16 %v3370, %v3369
      %v3400 = vpack.c.b16 %v3372, %v3371
      %v3401 = vpack.c.b16 %v3374, %v3373
      %v3402 = vpack.c.b16 %v3376, %v3375
      %v3403 = vpack.c.b16 %v3378, %v3377
      %v3404 = vpack.c.b16 %v3380, %v3379
      %3429 = vmatprep.subr.bf16.mxu0 0
      %3430 = vmatpush1.bf16.msra.mxu0 %v3381
      %3431 = vmatprep.subr.bf16.mxu0 0
      %3432 = vmatpush1.bf16.msra.mxu0 %v3382
      %3433 = vmatprep.subr.bf16.mxu0 0
      %3434 = vmatpush1.bf16.msra.mxu0 %v3383
      %3435 = vmatprep.subr.bf16.mxu0 0
      %3436 = vmatpush1.bf16.msra.mxu0 %v3384
      %3437 = vmatprep.subr.bf16.mxu0 0
      %3438 = vmatpush1.bf16.msra.mxu0 %v3385
      %3439 = vmatprep.subr.bf16.mxu0 0
      %3440 = vmatpush1.bf16.msra.mxu0 %v3386
      %3441 = vmatprep.subr.bf16.mxu0 0
      %3442 = vmatpush1.bf16.msra.mxu0 %v3387
      %3443 = vmatprep.subr.bf16.mxu0 0
      %3444 = vmatpush1.bf16.msra.mxu0 %v3388
      %3445 = vmatprep.subr.bf16.mxu0 0
      %3446 = vmatpush1.bf16.msra.mxu0 %v3389
      %3447 = vmatprep.subr.bf16.mxu0 0
      %3448 = vmatpush1.bf16.msra.mxu0 %v3390
      %3449 = vmatprep.subr.bf16.mxu0 0
      %3450 = vmatpush1.bf16.msra.mxu0 %v3391
      %3451 = vmatprep.subr.bf16.mxu0 0
      %3452 = vmatpush1.bf16.msra.mxu0 %v3392
      %3453 = vmatprep.subr.bf16.mxu0 0
      %3454 = vmatpush1.bf16.msra.mxu0 %v3393
      %3455 = vmatprep.subr.bf16.mxu0 0
      %3456 = vmatpush1.bf16.msra.mxu0 %v3394
      %3457 = vmatprep.subr.bf16.mxu0 0
      %3458 = vmatpush1.bf16.msra.mxu0 %v3395
      %3459 = vmatprep.subr.bf16.mxu0 0
      %3460 = vmatpush1.bf16.msra.mxu0 %v3396
      %3461 = vmatprep.mubr.bf16.mxu0 %v3172
      %3462 = vmatmul.mubr.bf16.gmra.mrb[0].mxu0 %v3124
      %v3463 = vpop.f32.mrb[0].mxu0
      %v3464 = vadd.f32 0.0, %v3463
      %v3465 = vpop.f32.mrb[0].mxu0
      %v3466 = vpop.f32.mrb[0].mxu0
      %v3467 = vpop.f32.mrb[0].mxu0
      %3468 = vmatprep.mubr.bf16.mxu0 %v3173
      %3469 = vmatmul.mubr.bf16.gmra.mrb[0].mxu0 %v3125
      %v3470 = vpop.f32.mrb[0].mxu0
      %v3471 = vadd.f32 0.0, %v3470
      %v3472 = vpop.f32.mrb[0].mxu0
      %v3473 = vpop.f32.mrb[0].mxu0
      %v3474 = vpop.f32.mrb[0].mxu0
      %3475 = vmatprep.mubr.bf16.mxu0 %v3174
      %3476 = vmatmul.mubr.bf16.gmra.mrb[0].mxu0 %v3126
      %v3477 = vpop.f32.mrb[0].mxu0
      %v3478 = vadd.f32 0.0, %v3477
      %v3479 = vpop.f32.mrb[0].mxu0
      %v3480 = vpop.f32.mrb[0].mxu0
      %v3481 = vpop.f32.mrb[0].mxu0
      %3482 = vmatprep.mubr.bf16.mxu0 %v3175
      %3483 = vmatmul.mubr.bf16.gmra.mrb[0].mxu0 %v3127
      %v3484 = vpop.f32.mrb[0].mxu0
      %v3485 = vadd.f32 0.0, %v3484
      %v3486 = vpop.f32.mrb[0].mxu0
      %v3487 = vpop.f32.mrb[0].mxu0
      %v3488 = vpop.f32.mrb[0].mxu0
      %3489 = vmatprep.mubr.bf16.mxu0 %v3176
      %3490 = vmatmul.mubr.bf16.gmra.mrb[0].mxu0 %v3128
      %v3491 = vpop.f32.mrb[0].mxu0
      %v3492 = vadd.f32 0.0, %v3491
      %v3493 = vpop.f32.mrb[0].mxu0
      %v3494 = vpop.f32.mrb[0].mxu0
      %v3495 = vpop.f32.mrb[0].mxu0
      %3496 = vmatprep.mubr.bf16.mxu0 %v3177
      %3497 = vmatmul.mubr.bf16.gmra.mrb[0].mxu0 %v3129
      %v3498 = vpop.f32.mrb[0].mxu0
      %v3499 = vadd.f32 0.0, %v3498
      %v3500 = vpop.f32.mrb[0].mxu0
      %v3501 = vpop.f32.mrb[0].mxu0
      %v3502 = vpop.f32.mrb[0].mxu0
      %3503 = vmatprep.mubr.bf16.mxu0 %v3178
      %3504 = vmatmul.mubr.bf16.gmra.mrb[0].mxu0 %v3130
      %v3505 = vpop.f32.mrb[0].mxu0
      %v3506 = vadd.f32 0.0, %v3505
      %v3507 = vpop.f32.mrb[0].mxu0
      %v3508 = vpop.f32.mrb[0].mxu0
      %v3509 = vpop.f32.mrb[0].mxu0
      %3510 = vmatprep.mubr.bf16.mxu0 %v3179
      %3511 = vmatmul.mubr.bf16.gmra.mrb[0].mxu0 %v3131
      %v3512 = vpop.f32.mrb[0].mxu0
      %v3513 = vadd.f32 0.0, %v3512
      %v3514 = vpop.f32.mrb[0].mxu0
      %v3515 = vpop.f32.mrb[0].mxu0
      %v3516 = vpop.f32.mrb[0].mxu0
      %3517 = vdwg.mxu0
      %3518 = vmatprep.subr.bf16.mxu0 0
      %3519 = vmatpush1.bf16.msra.mxu0 %v3397
      %3520 = vmatprep.subr.bf16.mxu0 0
      %3521 = vmatpush1.bf16.msra.mxu0 %v3398
      %3522 = vmatprep.subr.bf16.mxu0 0
      %3523 = vmatpush1.bf16.msra.mxu0 %v3399
      %3524 = vmatprep.subr.bf16.mxu0 0
      %3525 = vmatpush1.bf16.msra.mxu0 %v3400
      %3526 = vmatprep.subr.bf16.mxu0 0
      %3527 = vmatpush1.bf16.msra.mxu0 %v3401
      %3528 = vmatprep.subr.bf16.mxu0 0
      %3529 = vmatpush1.bf16.msra.mxu0 %v3402
      %3530 = vmatprep.subr.bf16.mxu0 0
      %3531 = vmatpush1.bf16.msra.mxu0 %v3403
      %3532 = vmatprep.subr.bf16.mxu0 0
      %3533 = vmatpush1.bf16.msra.mxu0 %v3404
      %3534 = vmatprep.subr.bf16.mxu0 0
      %3535 = vmatpush1.bf16.msra.mxu0 0
      %3536 = vmatprep.subr.bf16.mxu0 0
      %3537 = vmatpush1.bf16.msra.mxu0 0
      %3538 = vmatprep.subr.bf16.mxu0 0
      %3539 = vmatpush1.bf16.msra.mxu0 0
      %3540 = vmatprep.subr.bf16.mxu0 0
      %3541 = vmatpush1.bf16.msra.mxu0 0
      %3542 = vmatprep.subr.bf16.mxu0 0
      %3543 = vmatpush1.bf16.msra.mxu0 0
      %3544 = vmatprep.subr.bf16.mxu0 0
      %3545 = vmatpush1.bf16.msra.mxu0 0
      %3546 = vmatprep.subr.bf16.mxu0 0
      %3547 = vmatpush1.bf16.msra.mxu0 0
      %3548 = vmatprep.subr.bf16.mxu0 0
      %3549 = vmatpush1.bf16.msra.mxu0 0
      %3550 = vmatprep.mubr.bf16.mxu0 0
      %3551 = vmatmul.mubr.bf16.gmra.mrb[0].mxu0 %v3220
      %v3552 = vpop.f32.mrb[0].mxu0
      %v3553 = vadd.f32 %v3464, %v3552
      %v3554 = vpop.f32.mrb[0].mxu0
      %v3555 = vpop.f32.mrb[0].mxu0
      %v3556 = vpop.f32.mrb[0].mxu0
      %3557 = vmatprep.mubr.bf16.mxu0 0
      %3558 = vmatmul.mubr.bf16.gmra.mrb[0].mxu0 %v3221
      %v3559 = vpop.f32.mrb[0].mxu0
      %v3560 = vadd.f32 %v3471, %v3559
      %v3561 = vpop.f32.mrb[0].mxu0
      %v3562 = vpop.f32.mrb[0].mxu0
      %v3563 = vpop.f32.mrb[0].mxu0
      %3564 = vmatprep.mubr.bf16.mxu0 0
      %3565 = vmatmul.mubr.bf16.gmra.mrb[0].mxu0 %v3222
      %v3566 = vpop.f32.mrb[0].mxu0
      %v3567 = vadd.f32 %v3478, %v3566
      %v3568 = vpop.f32.mrb[0].mxu0
      %v3569 = vpop.f32.mrb[0].mxu0
      %v3570 = vpop.f32.mrb[0].mxu0
      %3571 = vmatprep.mubr.bf16.mxu0 0
      %3572 = vmatmul.mubr.bf16.gmra.mrb[0].mxu0 %v3223
      %v3573 = vpop.f32.mrb[0].mxu0
      %v3574 = vadd.f32 %v3485, %v3573
      %v3575 = vpop.f32.mrb[0].mxu0
      %v3576 = vpop.f32.mrb[0].mxu0
      %v3577 = vpop.f32.mrb[0].mxu0
      %3578 = vmatprep.mubr.bf16.mxu0 0
      %3579 = vmatmul.mubr.bf16.gmra.mrb[0].mxu0 %v3224
      %v3580 = vpop.f32.mrb[0].mxu0
      %v3581 = vadd.f32 %v3492, %v3580
      %v3582 = vpop.f32.mrb[0].mxu0
      %v3583 = vpop.f32.mrb[0].mxu0
      %v3584 = vpop.f32.mrb[0].mxu0
      %3585 = vmatprep.mubr.bf16.mxu0 0
      %3586 = vmatmul.mubr.bf16.gmra.mrb[0].mxu0 %v3225
      %v3587 = vpop.f32.mrb[0].mxu0
      %v3588 = vadd.f32 %v3499, %v3587
      %v3589 = vpop.f32.mrb[0].mxu0
      %v3590 = vpop.f32.mrb[0].mxu0
      %v3591 = vpop.f32.mrb[0].mxu0
      %3592 = vmatprep.mubr.bf16.mxu0 0
      %3593 = vmatmul.mubr.bf16.gmra.mrb[0].mxu0 %v3226
      %v3594 = vpop.f32.mrb[0].mxu0
      %v3595 = vadd.f32 %v3506, %v3594
      %v3596 = vpop.f32.mrb[0].mxu0
      %v3597 = vpop.f32.mrb[0].mxu0
      %v3598 = vpop.f32.mrb[0].mxu0
      %3599 = vmatprep.mubr.bf16.mxu0 0
      %3600 = vmatmul.mubr.bf16.gmra.mrb[0].mxu0 %v3227
      %v3601 = vpop.f32.mrb[0].mxu0
      %v3602 = vadd.f32 %v3513, %v3601
      %v3603 = vpop.f32.mrb[0].mxu0
      %v3604 = vpop.f32.mrb[0].mxu0
      %v3605 = vpop.f32.mrb[0].mxu0
      %3606 = vdwg.mxu0
      %v3607 = vadd.f32 %v1537, %v3553
      %v3608 = vadd.f32 %v1544, %v3560
      %v3609 = vadd.f32 %v1551, %v3567
      %v3610 = vadd.f32 %v1558, %v3574
      %v3611 = vadd.f32 %v1565, %v3581
      %v3612 = vadd.f32 %v1572, %v3588
      %v3613 = vadd.f32 %v1579, %v3595
      %v3614 = vadd.f32 %v1586, %v3602
      %s3615 = scalar_lea.vmem %s3, 1344
      %v3616 = vld [vmem:[%s3615] sm:$0xf]
      %v3617 = vld [vmem:[%s3615 + $0x4] sm:$0xf]
      %v3618 = vld [vmem:[%s3615 + $0x8] sm:$0xf]
      %v3619 = vld [vmem:[%s3615 + $0xc] sm:$0xf]
      %v3620 = vld [vmem:[%s3615 + $0x10] sm:$0xf]
      %v3621 = vld [vmem:[%s3615 + $0x14] sm:$0xf]
      %v3622 = vld [vmem:[%s3615 + $0x18] sm:$0xf]
      %v3623 = vld [vmem:[%s3615 + $0x1c] sm:$0xf]
      %v3624 = vld [vmem:[%s3615 + $0x20] sm:$0xf]
      %v3625 = vld [vmem:[%s3615 + $0x24] sm:$0xf]
      %v3626 = vld [vmem:[%s3615 + $0x28] sm:$0xf]
      %v3627 = vld [vmem:[%s3615 + $0x2c] sm:$0xf]
      %v3628 = vld [vmem:[%s3615 + $0x30] sm:$0xf]
      %v3629 = vld [vmem:[%s3615 + $0x34] sm:$0xf]
      %v3630 = vld [vmem:[%s3615 + $0x38] sm:$0xf]
      %v3631 = vld [vmem:[%s3615 + $0x3c] sm:$0xf]
      %v3632 = vld [vmem:[%s3615 + $0x40] sm:$0xf]
      %v3633 = vld [vmem:[%s3615 + $0x44] sm:$0xf]
      %v3634 = vld [vmem:[%s3615 + $0x48] sm:$0xf]
      %v3635 = vld [vmem:[%s3615 + $0x4c] sm:$0xf]
      %v3636 = vld [vmem:[%s3615 + $0x50] sm:$0xf]
      %v3637 = vld [vmem:[%s3615 + $0x54] sm:$0xf]
      %v3638 = vld [vmem:[%s3615 + $0x58] sm:$0xf]
      %v3639 = vld [vmem:[%s3615 + $0x5c] sm:$0xf]
      %v3640 = vld [vmem:[%s3615 + $0x60] sm:$0xf]
      %v3641 = vld [vmem:[%s3615 + $0x64] sm:$0xf]
      %v3642 = vld [vmem:[%s3615 + $0x68] sm:$0xf]
      %v3643 = vld [vmem:[%s3615 + $0x6c] sm:$0xf]
      %v3644 = vld [vmem:[%s3615 + $0x70] sm:$0xf]
      %v3645 = vld [vmem:[%s3615 + $0x74] sm:$0xf]
      %v3646 = vld [vmem:[%s3615 + $0x78] sm:$0xf]
      %v3647 = vld [vmem:[%s3615 + $0x7c] sm:$0xf]
      %v3648 = vld [vmem:[%s3615 + $0x80] sm:$0xf]
      %v3649 = vld [vmem:[%s3615 + $0x84] sm:$0xf]
      %v3650 = vld [vmem:[%s3615 + $0x88] sm:$0xf]
      %v3651 = vld [vmem:[%s3615 + $0x8c] sm:$0xf]
      %v3652 = vld [vmem:[%s3615 + $0x90] sm:$0xf]
      %v3653 = vld [vmem:[%s3615 + $0x94] sm:$0xf]
      %v3654 = vld [vmem:[%s3615 + $0x98] sm:$0xf]
      %v3655 = vld [vmem:[%s3615 + $0x9c] sm:$0xf]
      %v3656 = vld [vmem:[%s3615 + $0xa0] sm:$0xf]
      %v3657 = vld [vmem:[%s3615 + $0xa4] sm:$0xf]
      %v3658 = vld [vmem:[%s3615 + $0xa8] sm:$0xf]
      %v3659 = vld [vmem:[%s3615 + $0xac] sm:$0xf]
      %v3660 = vld [vmem:[%s3615 + $0xb0] sm:$0xf]
      %v3661 = vld [vmem:[%s3615 + $0xb4] sm:$0xf]
      %v3662 = vld [vmem:[%s3615 + $0xb8] sm:$0xf]
      %v3663 = vld [vmem:[%s3615 + $0xbc] sm:$0xf]
      %v3712 = vunpack.c.l.b16 %v3616
      %v3713 = vunpack.c.l.b16 %v3617
      %v3714 = vunpack.c.l.b16 %v3618
      %v3715 = vunpack.c.l.b16 %v3619
      %v3716 = vunpack.c.l.b16 %v3620
      %v3717 = vunpack.c.l.b16 %v3621
      %v3718 = vunpack.c.l.b16 %v3622
      %v3719 = vunpack.c.l.b16 %v3623
      %v3720 = vunpack.c.l.b16 %v3624
      %v3721 = vunpack.c.l.b16 %v3625
      %v3722 = vunpack.c.l.b16 %v3626
      %v3723 = vunpack.c.l.b16 %v3627
      %v3724 = vunpack.c.l.b16 %v3628
      %v3725 = vunpack.c.l.b16 %v3629
      %v3726 = vunpack.c.l.b16 %v3630
      %v3727 = vunpack.c.l.b16 %v3631
      %v3728 = vunpack.c.l.b16 %v3632
      %v3729 = vunpack.c.l.b16 %v3633
      %v3730 = vunpack.c.l.b16 %v3634
      %v3731 = vunpack.c.l.b16 %v3635
      %v3732 = vunpack.c.l.b16 %v3636
      %v3733 = vunpack.c.l.b16 %v3637
      %v3734 = vunpack.c.l.b16 %v3638
      %v3735 = vunpack.c.l.b16 %v3639
      %v3736 = vunpack.c.l.b16 %v3640
      %v3737 = vunpack.c.l.b16 %v3641
      %v3738 = vunpack.c.l.b16 %v3642
      %v3739 = vunpack.c.l.b16 %v3643
      %v3740 = vunpack.c.l.b16 %v3644
      %v3741 = vunpack.c.l.b16 %v3645
      %v3742 = vunpack.c.l.b16 %v3646
      %v3743 = vunpack.c.l.b16 %v3647
      %v3744 = vunpack.c.l.b16 %v3648
      %v3745 = vunpack.c.l.b16 %v3649
      %v3746 = vunpack.c.l.b16 %v3650
      %v3747 = vunpack.c.l.b16 %v3651
      %v3748 = vunpack.c.l.b16 %v3652
      %v3749 = vunpack.c.l.b16 %v3653
      %v3750 = vunpack.c.l.b16 %v3654
      %v3751 = vunpack.c.l.b16 %v3655
      %v3752 = vunpack.c.l.b16 %v3656
      %v3753 = vunpack.c.l.b16 %v3657
      %v3754 = vunpack.c.l.b16 %v3658
      %v3755 = vunpack.c.l.b16 %v3659
      %v3756 = vunpack.c.l.b16 %v3660
      %v3757 = vunpack.c.l.b16 %v3661
      %v3758 = vunpack.c.l.b16 %v3662
      %v3759 = vunpack.c.l.b16 %v3663
      %v3760 = vpack.c.b16 %v3713, %v3712
      %v3761 = vpack.c.b16 %v3715, %v3714
      %v3762 = vpack.c.b16 %v3717, %v3716
      %v3763 = vpack.c.b16 %v3719, %v3718
      %v3764 = vpack.c.b16 %v3721, %v3720
      %v3765 = vpack.c.b16 %v3723, %v3722
      %v3766 = vpack.c.b16 %v3725, %v3724
      %v3767 = vpack.c.b16 %v3727, %v3726
      %v3768 = vpack.c.b16 %v3729, %v3728
      %v3769 = vpack.c.b16 %v3731, %v3730
      %v3770 = vpack.c.b16 %v3733, %v3732
      %v3771 = vpack.c.b16 %v3735, %v3734
      %v3772 = vpack.c.b16 %v3737, %v3736
      %v3773 = vpack.c.b16 %v3739, %v3738
      %v3774 = vpack.c.b16 %v3741, %v3740
      %v3775 = vpack.c.b16 %v3743, %v3742
      %v3776 = vpack.c.b16 %v3745, %v3744
      %v3777 = vpack.c.b16 %v3747, %v3746
      %v3778 = vpack.c.b16 %v3749, %v3748
      %v3779 = vpack.c.b16 %v3751, %v3750
      %v3780 = vpack.c.b16 %v3753, %v3752
      %v3781 = vpack.c.b16 %v3755, %v3754
      %v3782 = vpack.c.b16 %v3757, %v3756
      %v3783 = vpack.c.b16 %v3759, %v3758
      %3808 = vmatprep.subr.bf16.mxu0 0
      %3809 = vmatpush1.bf16.msra.mxu0 %v3760
      %3810 = vmatprep.subr.bf16.mxu0 0
      %3811 = vmatpush1.bf16.msra.mxu0 %v3761
      %3812 = vmatprep.subr.bf16.mxu0 0
      %3813 = vmatpush1.bf16.msra.mxu0 %v3762
      %3814 = vmatprep.subr.bf16.mxu0 0
      %3815 = vmatpush1.bf16.msra.mxu0 %v3763
      %3816 = vmatprep.subr.bf16.mxu0 0
      %3817 = vmatpush1.bf16.msra.mxu0 %v3764
      %3818 = vmatprep.subr.bf16.mxu0 0
      %3819 = vmatpush1.bf16.msra.mxu0 %v3765
      %3820 = vmatprep.subr.bf16.mxu0 0
      %3821 = vmatpush1.bf16.msra.mxu0 %v3766
      %3822 = vmatprep.subr.bf16.mxu0 0
      %3823 = vmatpush1.bf16.msra.mxu0 %v3767
      %3824 = vmatprep.subr.bf16.mxu0 0
      %3825 = vmatpush1.bf16.msra.mxu0 %v3768
      %3826 = vmatprep.subr.bf16.mxu0 0
      %3827 = vmatpush1.bf16.msra.mxu0 %v3769
      %3828 = vmatprep.subr.bf16.mxu0 0
      %3829 = vmatpush1.bf16.msra.mxu0 %v3770
      %3830 = vmatprep.subr.bf16.mxu0 0
      %3831 = vmatpush1.bf16.msra.mxu0 %v3771
      %3832 = vmatprep.subr.bf16.mxu0 0
      %3833 = vmatpush1.bf16.msra.mxu0 %v3772
      %3834 = vmatprep.subr.bf16.mxu0 0
      %3835 = vmatpush1.bf16.msra.mxu0 %v3773
      %3836 = vmatprep.subr.bf16.mxu0 0
      %3837 = vmatpush1.bf16.msra.mxu0 %v3774
      %3838 = vmatprep.subr.bf16.mxu0 0
      %3839 = vmatpush1.bf16.msra.mxu0 %v3775
      %3840 = vmatprep.mubr.bf16.mxu0 %v3172
      %3841 = vmatmul.mubr.bf16.gmra.mrb[0].mxu0 %v3124
      %v3842 = vpop.f32.mrb[0].mxu0
      %v3843 = vadd.f32 0.0, %v3842
      %v3844 = vpop.f32.mrb[0].mxu0
      %v3845 = vpop.f32.mrb[0].mxu0
      %v3846 = vadd.f32 0.0, %v3845
      %v3847 = vpop.f32.mrb[0].mxu0
      %3848 = vmatprep.mubr.bf16.mxu0 %v3173
      %3849 = vmatmul.mubr.bf16.gmra.mrb[0].mxu0 %v3125
      %v3850 = vpop.f32.mrb[0].mxu0
      %v3851 = vadd.f32 0.0, %v3850
      %v3852 = vpop.f32.mrb[0].mxu0
      %v3853 = vpop.f32.mrb[0].mxu0
      %v3854 = vadd.f32 0.0, %v3853
      %v3855 = vpop.f32.mrb[0].mxu0
      %3856 = vmatprep.mubr.bf16.mxu0 %v3174
      %3857 = vmatmul.mubr.bf16.gmra.mrb[0].mxu0 %v3126
      %v3858 = vpop.f32.mrb[0].mxu0
      %v3859 = vadd.f32 0.0, %v3858
      %v3860 = vpop.f32.mrb[0].mxu0
      %v3861 = vpop.f32.mrb[0].mxu0
      %v3862 = vadd.f32 0.0, %v3861
      %v3863 = vpop.f32.mrb[0].mxu0
      %3864 = vmatprep.mubr.bf16.mxu0 %v3175
      %3865 = vmatmul.mubr.bf16.gmra.mrb[0].mxu0 %v3127
      %v3866 = vpop.f32.mrb[0].mxu0
      %v3867 = vadd.f32 0.0, %v3866
      %v3868 = vpop.f32.mrb[0].mxu0
      %v3869 = vpop.f32.mrb[0].mxu0
      %v3870 = vadd.f32 0.0, %v3869
      %v3871 = vpop.f32.mrb[0].mxu0
      %3872 = vmatprep.mubr.bf16.mxu0 %v3176
      %3873 = vmatmul.mubr.bf16.gmra.mrb[0].mxu0 %v3128
      %v3874 = vpop.f32.mrb[0].mxu0
      %v3875 = vadd.f32 0.0, %v3874
      %v3876 = vpop.f32.mrb[0].mxu0
      %v3877 = vpop.f32.mrb[0].mxu0
      %v3878 = vadd.f32 0.0, %v3877
      %v3879 = vpop.f32.mrb[0].mxu0
      %3880 = vmatprep.mubr.bf16.mxu0 %v3177
      %3881 = vmatmul.mubr.bf16.gmra.mrb[0].mxu0 %v3129
      %v3882 = vpop.f32.mrb[0].mxu0
      %v3883 = vadd.f32 0.0, %v3882
      %v3884 = vpop.f32.mrb[0].mxu0
      %v3885 = vpop.f32.mrb[0].mxu0
      %v3886 = vadd.f32 0.0, %v3885
      %v3887 = vpop.f32.mrb[0].mxu0
      %3888 = vmatprep.mubr.bf16.mxu0 %v3178
      %3889 = vmatmul.mubr.bf16.gmra.mrb[0].mxu0 %v3130
      %v3890 = vpop.f32.mrb[0].mxu0
      %v3891 = vadd.f32 0.0, %v3890
      %v3892 = vpop.f32.mrb[0].mxu0
      %v3893 = vpop.f32.mrb[0].mxu0
      %v3894 = vadd.f32 0.0, %v3893
      %v3895 = vpop.f32.mrb[0].mxu0
      %3896 = vmatprep.mubr.bf16.mxu0 %v3179
      %3897 = vmatmul.mubr.bf16.gmra.mrb[0].mxu0 %v3131
      %v3898 = vpop.f32.mrb[0].mxu0
      %v3899 = vadd.f32 0.0, %v3898
      %v3900 = vpop.f32.mrb[0].mxu0
      %v3901 = vpop.f32.mrb[0].mxu0
      %v3902 = vadd.f32 0.0, %v3901
      %v3903 = vpop.f32.mrb[0].mxu0
      %3904 = vdwg.mxu0
      %3905 = vmatprep.subr.bf16.mxu0 0
      %3906 = vmatpush1.bf16.msra.mxu0 %v3776
      %3907 = vmatprep.subr.bf16.mxu0 0
      %3908 = vmatpush1.bf16.msra.mxu0 %v3777
      %3909 = vmatprep.subr.bf16.mxu0 0
      %3910 = vmatpush1.bf16.msra.mxu0 %v3778
      %3911 = vmatprep.subr.bf16.mxu0 0
      %3912 = vmatpush1.bf16.msra.mxu0 %v3779
      %3913 = vmatprep.subr.bf16.mxu0 0
      %3914 = vmatpush1.bf16.msra.mxu0 %v3780
      %3915 = vmatprep.subr.bf16.mxu0 0
      %3916 = vmatpush1.bf16.msra.mxu0 %v3781
      %3917 = vmatprep.subr.bf16.mxu0 0
      %3918 = vmatpush1.bf16.msra.mxu0 %v3782
      %3919 = vmatprep.subr.bf16.mxu0 0
      %3920 = vmatpush1.bf16.msra.mxu0 %v3783
      %3921 = vmatprep.subr.bf16.mxu0 0
      %3922 = vmatpush1.bf16.msra.mxu0 0
      %3923 = vmatprep.subr.bf16.mxu0 0
      %3924 = vmatpush1.bf16.msra.mxu0 0
      %3925 = vmatprep.subr.bf16.mxu0 0
      %3926 = vmatpush1.bf16.msra.mxu0 0
      %3927 = vmatprep.subr.bf16.mxu0 0
      %3928 = vmatpush1.bf16.msra.mxu0 0
      %3929 = vmatprep.subr.bf16.mxu0 0
      %3930 = vmatpush1.bf16.msra.mxu0 0
      %3931 = vmatprep.subr.bf16.mxu0 0
      %3932 = vmatpush1.bf16.msra.mxu0 0
      %3933 = vmatprep.subr.bf16.mxu0 0
      %3934 = vmatpush1.bf16.msra.mxu0 0
      %3935 = vmatprep.subr.bf16.mxu0 0
      %3936 = vmatpush1.bf16.msra.mxu0 0
      %3937 = vmatprep.mubr.bf16.mxu0 0
      %3938 = vmatmul.mubr.bf16.gmra.mrb[0].mxu0 %v3220
      %v3939 = vpop.f32.mrb[0].mxu0
      %v3940 = vadd.f32 %v3843, %v3939
      %v3941 = vpop.f32.mrb[0].mxu0
      %v3942 = vpop.f32.mrb[0].mxu0
      %v3943 = vadd.f32 %v3846, %v3942
      %v3944 = vpop.f32.mrb[0].mxu0
      %3945 = vmatprep.mubr.bf16.mxu0 0
      %3946 = vmatmul.mubr.bf16.gmra.mrb[0].mxu0 %v3221
      %v3947 = vpop.f32.mrb[0].mxu0
      %v3948 = vadd.f32 %v3851, %v3947
      %v3949 = vpop.f32.mrb[0].mxu0
      %v3950 = vpop.f32.mrb[0].mxu0
      %v3951 = vadd.f32 %v3854, %v3950
      %v3952 = vpop.f32.mrb[0].mxu0
      %3953 = vmatprep.mubr.bf16.mxu0 0
      %3954 = vmatmul.mubr.bf16.gmra.mrb[0].mxu0 %v3222
      %v3955 = vpop.f32.mrb[0].mxu0
      %v3956 = vadd.f32 %v3859, %v3955
      %v3957 = vpop.f32.mrb[0].mxu0
      %v3958 = vpop.f32.mrb[0].mxu0
      %v3959 = vadd.f32 %v3862, %v3958
      %v3960 = vpop.f32.mrb[0].mxu0
      %3961 = vmatprep.mubr.bf16.mxu0 0
      %3962 = vmatmul.mubr.bf16.gmra.mrb[0].mxu0 %v3223
      %v3963 = vpop.f32.mrb[0].mxu0
      %v3964 = vadd.f32 %v3867, %v3963
      %v3965 = vpop.f32.mrb[0].mxu0
      %v3966 = vpop.f32.mrb[0].mxu0
      %v3967 = vadd.f32 %v3870, %v3966
      %v3968 = vpop.f32.mrb[0].mxu0
      %3969 = vmatprep.mubr.bf16.mxu0 0
      %3970 = vmatmul.mubr.bf16.gmra.mrb[0].mxu0 %v3224
      %v3971 = vpop.f32.mrb[0].mxu0
      %v3972 = vadd.f32 %v3875, %v3971
      %v3973 = vpop.f32.mrb[0].mxu0
      %v3974 = vpop.f32.mrb[0].mxu0
      %v3975 = vadd.f32 %v3878, %v3974
      %v3976 = vpop.f32.mrb[0].mxu0
      %3977 = vmatprep.mubr.bf16.mxu0 0
      %3978 = vmatmul.mubr.bf16.gmra.mrb[0].mxu0 %v3225
      %v3979 = vpop.f32.mrb[0].mxu0
      %v3980 = vadd.f32 %v3883, %v3979
      %v3981 = vpop.f32.mrb[0].mxu0
      %v3982 = vpop.f32.mrb[0].mxu0
      %v3983 = vadd.f32 %v3886, %v3982
      %v3984 = vpop.f32.mrb[0].mxu0
      %3985 = vmatprep.mubr.bf16.mxu0 0
      %3986 = vmatmul.mubr.bf16.gmra.mrb[0].mxu0 %v3226
      %v3987 = vpop.f32.mrb[0].mxu0
      %v3988 = vadd.f32 %v3891, %v3987
      %v3989 = vpop.f32.mrb[0].mxu0
      %v3990 = vpop.f32.mrb[0].mxu0
      %v3991 = vadd.f32 %v3894, %v3990
      %v3992 = vpop.f32.mrb[0].mxu0
      %3993 = vmatprep.mubr.bf16.mxu0 0
      %3994 = vmatmul.mubr.bf16.gmra.mrb[0].mxu0 %v3227
      %v3995 = vpop.f32.mrb[0].mxu0
      %v3996 = vadd.f32 %v3899, %v3995
      %v3997 = vpop.f32.mrb[0].mxu0
      %v3998 = vpop.f32.mrb[0].mxu0
      %v3999 = vadd.f32 %v3902, %v3998
      %v4000 = vpop.f32.mrb[0].mxu0
      %4001 = vdwg.mxu0
      %v4002 = vadd.f32 %v2254, %v3940
      %v4003 = vadd.f32 %v2257, %v3943
      %v4004 = vadd.f32 %v2262, %v3948
      %v4005 = vadd.f32 %v2265, %v3951
      %v4006 = vadd.f32 %v2270, %v3956
      %v4007 = vadd.f32 %v2273, %v3959
      %v4008 = vadd.f32 %v2278, %v3964
      %v4009 = vadd.f32 %v2281, %v3967
      %v4010 = vadd.f32 %v2286, %v3972
      %v4011 = vadd.f32 %v2289, %v3975
      %v4012 = vadd.f32 %v2294, %v3980
      %v4013 = vadd.f32 %v2297, %v3983
      %v4014 = vadd.f32 %v2302, %v3988
      %v4015 = vadd.f32 %v2305, %v3991
      %v4016 = vadd.f32 %v2310, %v3996
      %v4017 = vadd.f32 %v2313, %v3999
      %s4018 = scalar_lea.vmem %s3, 1536
      %v4019 = vld [vmem:[%s4018] sm:$0xf]
      %v4020 = vld [vmem:[%s4018 + $0x4] sm:$0xf]
      %v4021 = vld [vmem:[%s4018 + $0x8] sm:$0xf]
      %v4022 = vld [vmem:[%s4018 + $0xc] sm:$0xf]
      %v4023 = vld [vmem:[%s4018 + $0x10] sm:$0xf]
      %v4024 = vld [vmem:[%s4018 + $0x14] sm:$0xf]
      %v4025 = vld [vmem:[%s4018 + $0x18] sm:$0xf]
      %v4026 = vld [vmem:[%s4018 + $0x1c] sm:$0xf]
      %v4027 = vld [vmem:[%s4018 + $0x20] sm:$0xf]
      %v4028 = vld [vmem:[%s4018 + $0x24] sm:$0xf]
      %v4029 = vld [vmem:[%s4018 + $0x28] sm:$0xf]
      %v4030 = vld [vmem:[%s4018 + $0x2c] sm:$0xf]
      %v4031 = vld [vmem:[%s4018 + $0x30] sm:$0xf]
      %v4032 = vld [vmem:[%s4018 + $0x34] sm:$0xf]
      %v4033 = vld [vmem:[%s4018 + $0x38] sm:$0xf]
      %v4034 = vld [vmem:[%s4018 + $0x3c] sm:$0xf]
      %v4035 = vld [vmem:[%s4018 + $0x40] sm:$0xf]
      %v4036 = vld [vmem:[%s4018 + $0x44] sm:$0xf]
      %v4037 = vld [vmem:[%s4018 + $0x48] sm:$0xf]
      %v4038 = vld [vmem:[%s4018 + $0x4c] sm:$0xf]
      %v4039 = vld [vmem:[%s4018 + $0x50] sm:$0xf]
      %v4040 = vld [vmem:[%s4018 + $0x54] sm:$0xf]
      %v4041 = vld [vmem:[%s4018 + $0x58] sm:$0xf]
      %v4042 = vld [vmem:[%s4018 + $0x5c] sm:$0xf]
      %v4043 = vld [vmem:[%s4018 + $0x60] sm:$0xf]
      %v4044 = vld [vmem:[%s4018 + $0x64] sm:$0xf]
      %v4045 = vld [vmem:[%s4018 + $0x68] sm:$0xf]
      %v4046 = vld [vmem:[%s4018 + $0x6c] sm:$0xf]
      %v4047 = vld [vmem:[%s4018 + $0x70] sm:$0xf]
      %v4048 = vld [vmem:[%s4018 + $0x74] sm:$0xf]
      %v4049 = vld [vmem:[%s4018 + $0x78] sm:$0xf]
      %v4050 = vld [vmem:[%s4018 + $0x7c] sm:$0xf]
      %v4051 = vld [vmem:[%s4018 + $0x80] sm:$0xf]
      %v4052 = vld [vmem:[%s4018 + $0x84] sm:$0xf]
      %v4053 = vld [vmem:[%s4018 + $0x88] sm:$0xf]
      %v4054 = vld [vmem:[%s4018 + $0x8c] sm:$0xf]
      %v4055 = vld [vmem:[%s4018 + $0x90] sm:$0xf]
      %v4056 = vld [vmem:[%s4018 + $0x94] sm:$0xf]
      %v4057 = vld [vmem:[%s4018 + $0x98] sm:$0xf]
      %v4058 = vld [vmem:[%s4018 + $0x9c] sm:$0xf]
      %v4059 = vld [vmem:[%s4018 + $0xa0] sm:$0xf]
      %v4060 = vld [vmem:[%s4018 + $0xa4] sm:$0xf]
      %v4061 = vld [vmem:[%s4018 + $0xa8] sm:$0xf]
      %v4062 = vld [vmem:[%s4018 + $0xac] sm:$0xf]
      %v4063 = vld [vmem:[%s4018 + $0xb0] sm:$0xf]
      %v4064 = vld [vmem:[%s4018 + $0xb4] sm:$0xf]
      %v4065 = vld [vmem:[%s4018 + $0xb8] sm:$0xf]
      %v4066 = vld [vmem:[%s4018 + $0xbc] sm:$0xf]
      %v4115 = vunpack.c.l.b16 %v4019
      %v4116 = vunpack.c.l.b16 %v4020
      %v4117 = vunpack.c.l.b16 %v4021
      %v4118 = vunpack.c.l.b16 %v4022
      %v4119 = vunpack.c.l.b16 %v4023
      %v4120 = vunpack.c.l.b16 %v4024
      %v4121 = vunpack.c.l.b16 %v4025
      %v4122 = vunpack.c.l.b16 %v4026
      %v4123 = vunpack.c.l.b16 %v4027
      %v4124 = vunpack.c.l.b16 %v4028
      %v4125 = vunpack.c.l.b16 %v4029
      %v4126 = vunpack.c.l.b16 %v4030
      %v4127 = vunpack.c.l.b16 %v4031
      %v4128 = vunpack.c.l.b16 %v4032
      %v4129 = vunpack.c.l.b16 %v4033
      %v4130 = vunpack.c.l.b16 %v4034
      %v4131 = vunpack.c.l.b16 %v4035
      %v4132 = vunpack.c.l.b16 %v4036
      %v4133 = vunpack.c.l.b16 %v4037
      %v4134 = vunpack.c.l.b16 %v4038
      %v4135 = vunpack.c.l.b16 %v4039
      %v4136 = vunpack.c.l.b16 %v4040
      %v4137 = vunpack.c.l.b16 %v4041
      %v4138 = vunpack.c.l.b16 %v4042
      %v4139 = vunpack.c.l.b16 %v4043
      %v4140 = vunpack.c.l.b16 %v4044
      %v4141 = vunpack.c.l.b16 %v4045
      %v4142 = vunpack.c.l.b16 %v4046
      %v4143 = vunpack.c.l.b16 %v4047
      %v4144 = vunpack.c.l.b16 %v4048
      %v4145 = vunpack.c.l.b16 %v4049
      %v4146 = vunpack.c.l.b16 %v4050
      %v4147 = vunpack.c.l.b16 %v4051
      %v4148 = vunpack.c.l.b16 %v4052
      %v4149 = vunpack.c.l.b16 %v4053
      %v4150 = vunpack.c.l.b16 %v4054
      %v4151 = vunpack.c.l.b16 %v4055
      %v4152 = vunpack.c.l.b16 %v4056
      %v4153 = vunpack.c.l.b16 %v4057
      %v4154 = vunpack.c.l.b16 %v4058
      %v4155 = vunpack.c.l.b16 %v4059
      %v4156 = vunpack.c.l.b16 %v4060
      %v4157 = vunpack.c.l.b16 %v4061
      %v4158 = vunpack.c.l.b16 %v4062
      %v4159 = vunpack.c.l.b16 %v4063
      %v4160 = vunpack.c.l.b16 %v4064
      %v4161 = vunpack.c.l.b16 %v4065
      %v4162 = vunpack.c.l.b16 %v4066
      %v4163 = vpack.c.b16 %v4116, %v4115
      %v4164 = vpack.c.b16 %v4118, %v4117
      %v4165 = vpack.c.b16 %v4120, %v4119
      %v4166 = vpack.c.b16 %v4122, %v4121
      %v4167 = vpack.c.b16 %v4124, %v4123
      %v4168 = vpack.c.b16 %v4126, %v4125
      %v4169 = vpack.c.b16 %v4128, %v4127
      %v4170 = vpack.c.b16 %v4130, %v4129
      %v4171 = vpack.c.b16 %v4132, %v4131
      %v4172 = vpack.c.b16 %v4134, %v4133
      %v4173 = vpack.c.b16 %v4136, %v4135
      %v4174 = vpack.c.b16 %v4138, %v4137
      %v4175 = vpack.c.b16 %v4140, %v4139
      %v4176 = vpack.c.b16 %v4142, %v4141
      %v4177 = vpack.c.b16 %v4144, %v4143
      %v4178 = vpack.c.b16 %v4146, %v4145
      %v4179 = vpack.c.b16 %v4148, %v4147
      %v4180 = vpack.c.b16 %v4150, %v4149
      %v4181 = vpack.c.b16 %v4152, %v4151
      %v4182 = vpack.c.b16 %v4154, %v4153
      %v4183 = vpack.c.b16 %v4156, %v4155
      %v4184 = vpack.c.b16 %v4158, %v4157
      %v4185 = vpack.c.b16 %v4160, %v4159
      %v4186 = vpack.c.b16 %v4162, %v4161
      %4211 = vmatprep.subr.bf16.mxu0 0
      %4212 = vmatpush1.bf16.msra.mxu0 %v4163
      %4213 = vmatprep.subr.bf16.mxu0 0
      %4214 = vmatpush1.bf16.msra.mxu0 %v4164
      %4215 = vmatprep.subr.bf16.mxu0 0
      %4216 = vmatpush1.bf16.msra.mxu0 %v4165
      %4217 = vmatprep.subr.bf16.mxu0 0
      %4218 = vmatpush1.bf16.msra.mxu0 %v4166
      %4219 = vmatprep.subr.bf16.mxu0 0
      %4220 = vmatpush1.bf16.msra.mxu0 %v4167
      %4221 = vmatprep.subr.bf16.mxu0 0
      %4222 = vmatpush1.bf16.msra.mxu0 %v4168
      %4223 = vmatprep.subr.bf16.mxu0 0
      %4224 = vmatpush1.bf16.msra.mxu0 %v4169
      %4225 = vmatprep.subr.bf16.mxu0 0
      %4226 = vmatpush1.bf16.msra.mxu0 %v4170
      %4227 = vmatprep.subr.bf16.mxu0 0
      %4228 = vmatpush1.bf16.msra.mxu0 %v4171
      %4229 = vmatprep.subr.bf16.mxu0 0
      %4230 = vmatpush1.bf16.msra.mxu0 %v4172
      %4231 = vmatprep.subr.bf16.mxu0 0
      %4232 = vmatpush1.bf16.msra.mxu0 %v4173
      %4233 = vmatprep.subr.bf16.mxu0 0
      %4234 = vmatpush1.bf16.msra.mxu0 %v4174
      %4235 = vmatprep.subr.bf16.mxu0 0
      %4236 = vmatpush1.bf16.msra.mxu0 %v4175
      %4237 = vmatprep.subr.bf16.mxu0 0
      %4238 = vmatpush1.bf16.msra.mxu0 %v4176
      %4239 = vmatprep.subr.bf16.mxu0 0
      %4240 = vmatpush1.bf16.msra.mxu0 %v4177
      %4241 = vmatprep.subr.bf16.mxu0 0
      %4242 = vmatpush1.bf16.msra.mxu0 %v4178
      %4243 = vmatprep.mubr.bf16.mxu0 %v3172
      %4244 = vmatmul.mubr.bf16.gmra.mrb[0].mxu0 %v3124
      %v4245 = vpop.f32.mrb[0].mxu0
      %v4246 = vadd.f32 0.0, %v4245
      %v4247 = vpop.f32.mrb[0].mxu0
      %v4248 = vpop.f32.mrb[0].mxu0
      %v4249 = vadd.f32 0.0, %v4248
      %v4250 = vpop.f32.mrb[0].mxu0
      %4251 = vmatprep.mubr.bf16.mxu0 %v3173
      %4252 = vmatmul.mubr.bf16.gmra.mrb[0].mxu0 %v3125
      %v4253 = vpop.f32.mrb[0].mxu0
      %v4254 = vadd.f32 0.0, %v4253
      %v4255 = vpop.f32.mrb[0].mxu0
      %v4256 = vpop.f32.mrb[0].mxu0
      %v4257 = vadd.f32 0.0, %v4256
      %v4258 = vpop.f32.mrb[0].mxu0
      %4259 = vmatprep.mubr.bf16.mxu0 %v3174
      %4260 = vmatmul.mubr.bf16.gmra.mrb[0].mxu0 %v3126
      %v4261 = vpop.f32.mrb[0].mxu0
      %v4262 = vadd.f32 0.0, %v4261
      %v4263 = vpop.f32.mrb[0].mxu0
      %v4264 = vpop.f32.mrb[0].mxu0
      %v4265 = vadd.f32 0.0, %v4264
      %v4266 = vpop.f32.mrb[0].mxu0
      %4267 = vmatprep.mubr.bf16.mxu0 %v3175
      %4268 = vmatmul.mubr.bf16.gmra.mrb[0].mxu0 %v3127
      %v4269 = vpop.f32.mrb[0].mxu0
      %v4270 = vadd.f32 0.0, %v4269
      %v4271 = vpop.f32.mrb[0].mxu0
      %v4272 = vpop.f32.mrb[0].mxu0
      %v4273 = vadd.f32 0.0, %v4272
      %v4274 = vpop.f32.mrb[0].mxu0
      %4275 = vmatprep.mubr.bf16.mxu0 %v3176
      %4276 = vmatmul.mubr.bf16.gmra.mrb[0].mxu0 %v3128
      %v4277 = vpop.f32.mrb[0].mxu0
      %v4278 = vadd.f32 0.0, %v4277
      %v4279 = vpop.f32.mrb[0].mxu0
      %v4280 = vpop.f32.mrb[0].mxu0
      %v4281 = vadd.f32 0.0, %v4280
      %v4282 = vpop.f32.mrb[0].mxu0
      %4283 = vmatprep.mubr.bf16.mxu0 %v3177
      %4284 = vmatmul.mubr.bf16.gmra.mrb[0].mxu0 %v3129
      %v4285 = vpop.f32.mrb[0].mxu0
      %v4286 = vadd.f32 0.0, %v4285
      %v4287 = vpop.f32.mrb[0].mxu0
      %v4288 = vpop.f32.mrb[0].mxu0
      %v4289 = vadd.f32 0.0, %v4288
      %v4290 = vpop.f32.mrb[0].mxu0
      %4291 = vmatprep.mubr.bf16.mxu0 %v3178
      %4292 = vmatmul.mubr.bf16.gmra.mrb[0].mxu0 %v3130
      %v4293 = vpop.f32.mrb[0].mxu0
      %v4294 = vadd.f32 0.0, %v4293
      %v4295 = vpop.f32.mrb[0].mxu0
      %v4296 = vpop.f32.mrb[0].mxu0
      %v4297 = vadd.f32 0.0, %v4296
      %v4298 = vpop.f32.mrb[0].mxu0
      %4299 = vmatprep.mubr.bf16.mxu0 %v3179
      %4300 = vmatmul.mubr.bf16.gmra.mrb[0].mxu0 %v3131
      %v4301 = vpop.f32.mrb[0].mxu0
      %v4302 = vadd.f32 0.0, %v4301
      %v4303 = vpop.f32.mrb[0].mxu0
      %v4304 = vpop.f32.mrb[0].mxu0
      %v4305 = vadd.f32 0.0, %v4304
      %v4306 = vpop.f32.mrb[0].mxu0
      %4307 = vdwg.mxu0
      %4308 = vmatprep.subr.bf16.mxu0 0
      %4309 = vmatpush1.bf16.msra.mxu0 %v4179
      %4310 = vmatprep.subr.bf16.mxu0 0
      %4311 = vmatpush1.bf16.msra.mxu0 %v4180
      %4312 = vmatprep.subr.bf16.mxu0 0
      %4313 = vmatpush1.bf16.msra.mxu0 %v4181
      %4314 = vmatprep.subr.bf16.mxu0 0
      %4315 = vmatpush1.bf16.msra.mxu0 %v4182
      %4316 = vmatprep.subr.bf16.mxu0 0
      %4317 = vmatpush1.bf16.msra.mxu0 %v4183
      %4318 = vmatprep.subr.bf16.mxu0 0
      %4319 = vmatpush1.bf16.msra.mxu0 %v4184
      %4320 = vmatprep.subr.bf16.mxu0 0
      %4321 = vmatpush1.bf16.msra.mxu0 %v4185
      %4322 = vmatprep.subr.bf16.mxu0 0
      %4323 = vmatpush1.bf16.msra.mxu0 %v4186
      %4324 = vmatprep.subr.bf16.mxu0 0
      %4325 = vmatpush1.bf16.msra.mxu0 0
      %4326 = vmatprep.subr.bf16.mxu0 0
      %4327 = vmatpush1.bf16.msra.mxu0 0
      %4328 = vmatprep.subr.bf16.mxu0 0
      %4329 = vmatpush1.bf16.msra.mxu0 0
      %4330 = vmatprep.subr.bf16.mxu0 0
      %4331 = vmatpush1.bf16.msra.mxu0 0
      %4332 = vmatprep.subr.bf16.mxu0 0
      %4333 = vmatpush1.bf16.msra.mxu0 0
      %4334 = vmatprep.subr.bf16.mxu0 0
      %4335 = vmatpush1.bf16.msra.mxu0 0
      %4336 = vmatprep.subr.bf16.mxu0 0
      %4337 = vmatpush1.bf16.msra.mxu0 0
      %4338 = vmatprep.subr.bf16.mxu0 0
      %4339 = vmatpush1.bf16.msra.mxu0 0
      %4340 = vmatprep.mubr.bf16.mxu0 0
      %4341 = vmatmul.mubr.bf16.gmra.mrb[0].mxu0 %v3220
      %v4342 = vpop.f32.mrb[0].mxu0
      %v4343 = vadd.f32 %v4246, %v4342
      %v4344 = vpop.f32.mrb[0].mxu0
      %v4345 = vpop.f32.mrb[0].mxu0
      %v4346 = vadd.f32 %v4249, %v4345
      %v4347 = vpop.f32.mrb[0].mxu0
      %4348 = vmatprep.mubr.bf16.mxu0 0
      %4349 = vmatmul.mubr.bf16.gmra.mrb[0].mxu0 %v3221
      %v4350 = vpop.f32.mrb[0].mxu0
      %v4351 = vadd.f32 %v4254, %v4350
      %v4352 = vpop.f32.mrb[0].mxu0
      %v4353 = vpop.f32.mrb[0].mxu0
      %v4354 = vadd.f32 %v4257, %v4353
      %v4355 = vpop.f32.mrb[0].mxu0
      %4356 = vmatprep.mubr.bf16.mxu0 0
      %4357 = vmatmul.mubr.bf16.gmra.mrb[0].mxu0 %v3222
      %v4358 = vpop.f32.mrb[0].mxu0
      %v4359 = vadd.f32 %v4262, %v4358
      %v4360 = vpop.f32.mrb[0].mxu0
      %v4361 = vpop.f32.mrb[0].mxu0
      %v4362 = vadd.f32 %v4265, %v4361
      %v4363 = vpop.f32.mrb[0].mxu0
      %4364 = vmatprep.mubr.bf16.mxu0 0
      %4365 = vmatmul.mubr.bf16.gmra.mrb[0].mxu0 %v3223
      %v4366 = vpop.f32.mrb[0].mxu0
      %v4367 = vadd.f32 %v4270, %v4366
      %v4368 = vpop.f32.mrb[0].mxu0
      %v4369 = vpop.f32.mrb[0].mxu0
      %v4370 = vadd.f32 %v4273, %v4369
      %v4371 = vpop.f32.mrb[0].mxu0
      %4372 = vmatprep.mubr.bf16.mxu0 0
      %4373 = vmatmul.mubr.bf16.gmra.mrb[0].mxu0 %v3224
      %v4374 = vpop.f32.mrb[0].mxu0
      %v4375 = vadd.f32 %v4278, %v4374
      %v4376 = vpop.f32.mrb[0].mxu0
      %v4377 = vpop.f32.mrb[0].mxu0
      %v4378 = vadd.f32 %v4281, %v4377
      %v4379 = vpop.f32.mrb[0].mxu0
      %4380 = vmatprep.mubr.bf16.mxu0 0
      %4381 = vmatmul.mubr.bf16.gmra.mrb[0].mxu0 %v3225
      %v4382 = vpop.f32.mrb[0].mxu0
      %v4383 = vadd.f32 %v4286, %v4382
      %v4384 = vpop.f32.mrb[0].mxu0
      %v4385 = vpop.f32.mrb[0].mxu0
      %v4386 = vadd.f32 %v4289, %v4385
      %v4387 = vpop.f32.mrb[0].mxu0
      %4388 = vmatprep.mubr.bf16.mxu0 0
      %4389 = vmatmul.mubr.bf16.gmra.mrb[0].mxu0 %v3226
      %v4390 = vpop.f32.mrb[0].mxu0
      %v4391 = vadd.f32 %v4294, %v4390
      %v4392 = vpop.f32.mrb[0].mxu0
      %v4393 = vpop.f32.mrb[0].mxu0
      %v4394 = vadd.f32 %v4297, %v4393
      %v4395 = vpop.f32.mrb[0].mxu0
      %4396 = vmatprep.mubr.bf16.mxu0 0
      %4397 = vmatmul.mubr.bf16.gmra.mrb[0].mxu0 %v3227
      %v4398 = vpop.f32.mrb[0].mxu0
      %v4399 = vadd.f32 %v4302, %v4398
      %v4400 = vpop.f32.mrb[0].mxu0
      %v4401 = vpop.f32.mrb[0].mxu0
      %v4402 = vadd.f32 %v4305, %v4401
      %v4403 = vpop.f32.mrb[0].mxu0
      %4404 = vdwg.mxu0
      %v4405 = vadd.f32 %v2979, %v4343
      %v4406 = vadd.f32 %v2982, %v4346
      %v4407 = vadd.f32 %v2987, %v4351
      %v4408 = vadd.f32 %v2990, %v4354
      %v4409 = vadd.f32 %v2995, %v4359
      %v4410 = vadd.f32 %v2998, %v4362
      %v4411 = vadd.f32 %v3003, %v4367
      %v4412 = vadd.f32 %v3006, %v4370
      %v4413 = vadd.f32 %v3011, %v4375
      %v4414 = vadd.f32 %v3014, %v4378
      %v4415 = vadd.f32 %v3019, %v4383
      %v4416 = vadd.f32 %v3022, %v4386
      %v4417 = vadd.f32 %v3027, %v4391
      %v4418 = vadd.f32 %v3030, %v4394
      %v4419 = vadd.f32 %v3035, %v4399
      %v4420 = vadd.f32 %v3038, %v4402
      %vm4437 = vcmask 1046528
      %v4438 = vrot.slane %v4002, 1
      %v4439 = vrot.slane %v4003, 1
      %v4440 = vsel %vm4437, %v4438, %v4439
      %v4441 = vrot.slane %v4004, 1
      %v4442 = vrot.slane %v4005, 1
      %v4443 = vsel %vm4437, %v4441, %v4442
      %v4444 = vrot.slane %v4006, 1
      %v4445 = vrot.slane %v4007, 1
      %v4446 = vsel %vm4437, %v4444, %v4445
      %v4447 = vrot.slane %v4008, 1
      %v4448 = vrot.slane %v4009, 1
      %v4449 = vsel %vm4437, %v4447, %v4448
      %v4450 = vrot.slane %v4010, 1
      %v4451 = vrot.slane %v4011, 1
      %v4452 = vsel %vm4437, %v4450, %v4451
      %v4453 = vrot.slane %v4012, 1
      %v4454 = vrot.slane %v4013, 1
      %v4455 = vsel %vm4437, %v4453, %v4454
      %v4456 = vrot.slane %v4014, 1
      %v4457 = vrot.slane %v4015, 1
      %v4458 = vsel %vm4437, %v4456, %v4457
      %v4459 = vrot.slane %v4016, 1
      %v4460 = vrot.slane %v4017, 1
      %v4461 = vsel %vm4437, %v4459, %v4460
      %v4470 = vadd.f32 %v3607, %v4440
      %v4471 = vadd.f32 %v3608, %v4443
      %v4472 = vadd.f32 %v3609, %v4446
      %v4473 = vadd.f32 %v3610, %v4449
      %v4474 = vadd.f32 %v3611, %v4452
      %v4475 = vadd.f32 %v3612, %v4455
      %v4476 = vadd.f32 %v3613, %v4458
      %v4477 = vadd.f32 %v3614, %v4461
      %vm4494 = vcmask 1045504
      %v4495 = vrot.slane %v4405, 2
      %v4496 = vrot.slane %v4406, 2
      %v4497 = vsel %vm4494, %v4495, %v4496
      %v4498 = vrot.slane %v4407, 2
      %v4499 = vrot.slane %v4408, 2
      %v4500 = vsel %vm4494, %v4498, %v4499
      %v4501 = vrot.slane %v4409, 2
      %v4502 = vrot.slane %v4410, 2
      %v4503 = vsel %vm4494, %v4501, %v4502
      %v4504 = vrot.slane %v4411, 2
      %v4505 = vrot.slane %v4412, 2
      %v4506 = vsel %vm4494, %v4504, %v4505
      %v4507 = vrot.slane %v4413, 2
      %v4508 = vrot.slane %v4414, 2
      %v4509 = vsel %vm4494, %v4507, %v4508
      %v4510 = vrot.slane %v4415, 2
      %v4511 = vrot.slane %v4416, 2
      %v4512 = vsel %vm4494, %v4510, %v4511
      %v4513 = vrot.slane %v4417, 2
      %v4514 = vrot.slane %v4418, 2
      %v4515 = vsel %vm4494, %v4513, %v4514
      %v4516 = vrot.slane %v4419, 2
      %v4517 = vrot.slane %v4420, 2
      %v4518 = vsel %vm4494, %v4516, %v4517
      %v4527 = vadd.f32 %v4470, %v4497
      %v4528 = vadd.f32 %v4471, %v4500
      %v4529 = vadd.f32 %v4472, %v4503
      %v4530 = vadd.f32 %v4473, %v4506
      %v4531 = vadd.f32 %v4474, %v4509
      %v4532 = vadd.f32 %v4475, %v4512
      %v4533 = vadd.f32 %v4476, %v4515
      %v4534 = vadd.f32 %v4477, %v4518
      %v4535 = vpack.c.bf16 %v4527, %v4527
      %v4536 = vpack.c.bf16 %v4528, %v4528
      %v4537 = vpack.c.bf16 %v4529, %v4529
      %v4538 = vpack.c.bf16 %v4530, %v4530
      %v4539 = vpack.c.bf16 %v4531, %v4531
      %v4540 = vpack.c.bf16 %v4532, %v4532
      %v4541 = vpack.c.bf16 %v4533, %v4533
      %v4542 = vpack.c.bf16 %v4534, %v4534
      %4543 = vst [vmem:[%s355] sm:$0xf] %v4535
      %4544 = vst [vmem:[%s355 + $0x4] sm:$0xf] %v4536
      %4545 = vst [vmem:[%s355 + $0x8] sm:$0xf] %v4537
      %4546 = vst [vmem:[%s355 + $0xc] sm:$0xf] %v4538
      %4547 = vst [vmem:[%s355 + $0x10] sm:$0xf] %v4539
      %4548 = vst [vmem:[%s355 + $0x14] sm:$0xf] %v4540
      %4549 = vst [vmem:[%s355 + $0x18] sm:$0xf] %v4541
      %4550 = vst [vmem:[%s355 + $0x1c] sm:$0xf] %v4542
      %v4551 = vadd.f32 %v4527, %v4528
      %v4552 = vadd.f32 %v4551, %v4529
      %v4553 = vadd.f32 %v4552, %v4530
      %v4554 = vadd.f32 %v4553, %v4531
      %v4555 = vadd.f32 %v4554, %v4532
      %v4556 = vadd.f32 %v4555, %v4533
      %v4557 = vadd.f32 %v4556, %v4534
      %v4558 = vrot.slane %v4557, 4
      %v4559 = vadd.f32 %v4557, %v4558
      %v4560 = vrot.slane %v4559, 2
      %v4561 = vadd.f32 %v4559, %v4560
      %v4562 = vrot.slane %v4561, 1
      %v4563 = vadd.f32 %v4561, %v4562
      %v4564 = vmul.f32 %v4527, %v4527
      %v4565 = vmul.f32 %v4528, %v4528
      %v4566 = vmul.f32 %v4529, %v4529
      %v4567 = vmul.f32 %v4530, %v4530
      %v4568 = vmul.f32 %v4531, %v4531
      %v4569 = vmul.f32 %v4532, %v4532
      %v4570 = vmul.f32 %v4533, %v4533
      %v4571 = vmul.f32 %v4534, %v4534
      %v4572 = vadd.f32 %v4564, %v4565
      %v4573 = vadd.f32 %v4572, %v4566
      %v4574 = vadd.f32 %v4573, %v4567
      %v4575 = vadd.f32 %v4574, %v4568
      %v4576 = vadd.f32 %v4575, %v4569
      %v4577 = vadd.f32 %v4576, %v4570
      %v4578 = vadd.f32 %v4577, %v4571
      %v4579 = vrot.slane %v4578, 4
      %v4580 = vadd.f32 %v4578, %v4579
      %v4581 = vrot.slane %v4580, 2
      %v4582 = vadd.f32 %v4580, %v4581
      %v4583 = vrot.slane %v4582, 1
      %v4584 = vadd.f32 %v4582, %v4583
      %vm4585 = vcmask 1040384
      %v4586 = vsel %vm4585, %v4563, %v4584
      %4587 = vst [vmem:[%s363] sm:$0x3] %v4586
      %p4588 = scmp.lt.s32.totalorder %s21, 1
      %s4589 = scalar_select %p4588, %s21, 1
      %p4590 = scmp.lt.s32.totalorder %s22, 7
      %s4591 = scalar_select %p4590, %s22, 7
      %s4592 = smul.addr %s4591, 8
      %s4593 = smul.addr %s4589, 64
      %s4594 = sadd.s32 %s4592, %s4593
      %s4595 = smul.addr %s4594, 4
      %s4596 = scalar_lea.vmem %s4, %s4595
      %p4597 = scmp.lt.s32.totalorder %s21, 1
      %s4598 = scalar_select %p4597, %s21, 1
      %p4599 = scmp.lt.s32.totalorder %s22, 7
      %s4600 = scalar_select %p4599, %s22, 7
      %s4601 = smul.addr %s4598, 8
      %s4602 = sadd.s32 %s4600, %s4601
      %s4603 = smul.addr %s4602, 2
      %s4604 = scalar_lea.vmem %s5, %s4603
      // Predicated region
      $region37: #{basic_block_forward.4} parent=35 // pred_check
        %p4605 = pneg %p158
      $region38: #{basic_block_forward.4} parent=35 // pred_check_branch
        %4607 = sbr.rel (%p4605) target = $region40
      $region39: #{basic_block_forward.4} parent=35 // pred_region
        _
      $region40: #{basic_block_forward.4} parent=35 // pred_fallthru
        _
      // Predicated region
      $region41: #{basic_block_forward.4} parent=35 // pred_check
        %p4608 = pneg %p186
      $region42: #{basic_block_forward.4} parent=35 // pred_check_branch
        %4610 = sbr.rel (%p4608) target = $region44
      $region43: #{basic_block_forward.4} parent=35 // pred_region
        _
      $region44: #{basic_block_forward.4} parent=35 // pred_fallthru
        _
    $region36: #{basic_block_forward.4} parent=5 // pred_fallthru
      _
    %p4611 = scmp.le.s32.totalorder 2, %s12
    // Predicated region
    $region45: #{basic_block_forward.4} parent=5 // pred_check
      %p4612 = pneg %p4611
    $region46: #{basic_block_forward.4} parent=5 // pred_check_branch
      %4614 = sbr.rel (%p4612) target = $region48
    $region47: #{basic_block_forward.4} parent=5 // pred_region
      %s4615 = ssub.s32 %s12, 2
      // Predicated region
      $region49: #{basic_block_forward.4} parent=47 // pred_check
        %p4616 = pneg %p164
      $region50: #{basic_block_forward.4} parent=47 // pred_check_branch
        %4618 = sbr.rel (%p4616) target = $region52
      $region51: #{basic_block_forward.4} parent=47 // pred_region
        %p4619 = scmp.lt.s32.totalorder %s23, 1
        %s4620 = scalar_select %p4619, %s23, 1
        %p4621 = scmp.lt.s32.totalorder %s24, 7
        %s4622 = scalar_select %p4621, %s24, 7
        %s4623 = smul.addr %s4622, 8
        %s4624 = smul.addr %s4620, 64
        %s4625 = sadd.s32 %s4623, %s4624
        %s4626 = smul.addr %s4625, 4
        %s4627 = scalar_lea.vmem %s4, %s4626
      $region52: #{basic_block_forward.4} parent=47 // pred_fallthru
        _
      // Predicated region
      $region53: #{basic_block_forward.4} parent=47 // pred_check
        %p4628 = pneg %p192
      $region54: #{basic_block_forward.4} parent=47 // pred_check_branch
        %4630 = sbr.rel (%p4628) target = $region56
      $region55: #{basic_block_forward.4} parent=47 // pred_region
        %p4631 = scmp.lt.s32.totalorder %s23, 1
        %s4632 = scalar_select %p4631, %s23, 1
        %p4633 = scmp.lt.s32.totalorder %s24, 7
        %s4634 = scalar_select %p4633, %s24, 7
        %s4635 = smul.addr %s4632, 8
        %s4636 = sadd.s32 %s4634, %s4635
        %s4637 = smul.addr %s4636, 2
        %s4638 = scalar_lea.vmem %s5, %s4637
      $region56: #{basic_block_forward.4} parent=47 // pred_fallthru
        _
    $region48: #{basic_block_forward.4} parent=5 // pred_fallthru
      _
  $region6: #{basic_block_forward.4} parent=0 // loop_footer
    %s16 = sadd.s32 1, %s12
  $region7: #{basic_block_forward.4} parent=0 // loop_footer_branch
    %11 = sbr.rel target = $region3
  $region8: #{basic_block_forward.4} parent=0 // loop_exit
    _

</llo_original>
